<compile_context>
chip_gen: v6e
topology: v6e:2x2x1
jax: 0.10.0
libtpu: 0.0.40
codegen_flags: <defaults>
</compile_context>

<pallas_src>
import jax
import jax.numpy as jnp
from jax.experimental import pallas as pl
from jax.experimental.pallas import tpu as pltpu


def _round_up(x, m):
    return ((x + m - 1) // m) * m


def _pick_tile_rows(h, pref=8):
    """Largest divisor of h that is <= pref (keeps the row-tile scratch small)."""
    for th in range(min(pref, h), 0, -1):
        if h % th == 0:
            return th
    return h


# ----------------------------------------------------------------------------
# Pallas kernel: fused [concat -> 3x3 same-conv -> bias -> ReLU] on one row tile
# ----------------------------------------------------------------------------
def _cat_conv_relu_kernel(x1_ref, t1_ref, b1_ref, x2_ref, t2_ref, b2_ref,
                          w_ref, bias_ref, o_ref, xp_ref):
    # x1_ref : (1, TH, W, C1p) bf16   row tile of input 1 (channels 128-padded)
    # t1/b1  : (1, 1,  W, C1p) bf16   row above / below the tile (zeros at edges)
    # x2_ref : (1, TH, W, C2p) bf16   row tile of input 2
    # t2/b2  : (1, 1,  W, C2p) bf16
    # w_ref  : (3*(C1p+C2p), 3*Cop) bf16   packed weights, K=(dy,c), N=(dx,co)
    # bias   : (1, Cop) f32
    # o_ref  : (1, TH, W, Cop) bf16
    # xp_ref : (TH+2, Wp, C1p+C2p) bf16 VMEM scratch, Wp = round_up(W+2, 8)
    th = x1_ref.shape[1]
    w = x1_ref.shape[2]
    c1p = x1_ref.shape[3]
    c2p = x2_ref.shape[3]
    ccat = c1p + c2p
    wp = xp_ref.shape[1]
    cop = o_ref.shape[3]

    # ---- assemble the zero-haloed, channel-concatenated tile in VMEM --------
    # (conv zero padding handled here; no jnp.pad of the full image in HBM)
    xp_ref[:, 0:1, :] = jnp.zeros((th + 2, 1, ccat), jnp.bfloat16)
    xp_ref[:, w + 1:wp, :] = jnp.zeros((th + 2, wp - (w + 1), ccat), jnp.bfloat16)

    xp_ref[0:1, 1:w + 1, 0:c1p] = t1_ref[0]
    xp_ref[1:th + 1, 1:w + 1, 0:c1p] = x1_ref[0]
    xp_ref[th + 1:th + 2, 1:w + 1, 0:c1p] = b1_ref[0]
    xp_ref[0:1, 1:w + 1, c1p:ccat] = t2_ref[0]
    xp_ref[1:th + 1, 1:w + 1, c1p:ccat] = x2_ref[0]
    xp_ref[th + 1:th + 2, 1:w + 1, c1p:ccat] = b2_ref[0]

    xp = xp_ref[...]                                      # (TH+2, Wp, Ccat)

    # ---- fold the 3 vertical taps into K (row-im2col); lane-aligned concat --
    rs = jnp.concatenate([xp[0:th], xp[1:th + 1], xp[2:th + 2]], axis=-1)
    rs2 = rs.reshape(th * wp, 3 * ccat)                   # free: Wp % 8 == 0

    # ---- ONE MXU matmul: K = 3*Ccat, N = 3*Cop (dx folded into N) -----------
    y = jnp.dot(rs2, w_ref[...], preferred_element_type=jnp.float32)
    y3 = y.reshape(th, wp, 3 * cop)

    # ---- horizontal-tap shifted add + bias + ReLU (f32 epilogue) ------------
    acc = (y3[:, 0:w, 0:cop]
           + y3[:, 1:w + 1, cop:2 * cop]
           + y3[:, 2:w + 2, 2 * cop:3 * cop]
           + bias_ref[...])
    o_ref[...] = jnp.maximum(acc, 0.0).reshape(1, th, w, cop).astype(o_ref.dtype)


# ----------------------------------------------------------------------------
# Wrapper glue
# ----------------------------------------------------------------------------
def _row_halos(x, th):
    """Rows t*th-1 and (t+1)*th for every row tile t (zeros at image borders)."""
    n, h, w, c = x.shape
    zero = jnp.zeros((n, 1, w, c), x.dtype)
    top = jnp.concatenate([zero, x[:, th - 1:h - 1:th]], axis=1)   # (n, nt, w, c)
    bot = jnp.concatenate([x[:, th:h:th], zero], axis=1)           # (n, nt, w, c)
    return top, bot


def fused_cat_conv_relu(x1, x2, w_all, bias, block_rows=8):
    """ReLU(conv3x3(concat([x1, x2], C)) + b), NHWC, channel-padded, bf16 in/out."""
    n, h, w, c1p = x1.shape
    c2p = x2.shape[-1]
    ccat = c1p + c2p
    cop = bias.shape[-1]
    assert x2.shape[:3] == (n, h, w)
    assert w_all.shape == (3 * ccat, 3 * cop)

    th = _pick_tile_rows(h, block_rows)
    nt = h // th
    wp = _round_up(w + 2, 8)

    x1 = x1.astype(jnp.bfloat16)
    x2 = x2.astype(jnp.bfloat16)
    t1, b1 = _row_halos(x1, th)
    t2, b2 = _row_halos(x2, th)

    return pl.pallas_call(
        _cat_conv_relu_kernel,
        out_shape=jax.ShapeDtypeStruct((n, h, w, cop), jnp.bfloat16),
        grid=(n, nt),
        in_specs=[
            pl.BlockSpec((1, th, w, c1p), lambda i, t: (i, t, 0, 0)),
            pl.BlockSpec((1, 1, w, c1p), lambda i, t: (i, t, 0, 0)),
            pl.BlockSpec((1, 1, w, c1p), lambda i, t: (i, t, 0, 0)),
            pl.BlockSpec((1, th, w, c2p), lambda i, t: (i, t, 0, 0)),
            pl.BlockSpec((1, 1, w, c2p), lambda i, t: (i, t, 0, 0)),
            pl.BlockSpec((1, 1, w, c2p), lambda i, t: (i, t, 0, 0)),
            pl.BlockSpec((3 * ccat, 3 * cop), lambda i, t: (0, 0)),
            pl.BlockSpec((1, cop), lambda i, t: (0, 0)),
        ],
        out_specs=pl.BlockSpec((1, th, w, cop), lambda i, t: (i, t, 0, 0)),
        scratch_shapes=[pltpu.VMEM((th + 2, wp, ccat), jnp.bfloat16)],
        compiler_params=pltpu.CompilerParams(
            dimension_semantics=("parallel", "parallel"),
            vmem_limit_bytes=32 * 1024 * 1024),
    )(x1, t1, b1, x2, t2, b2, w_all, bias)


# ----------------------------------------------------------------------------
# CAT module (parameters pre-packed for the fused kernel)
# ----------------------------------------------------------------------------
def init_cat(key, c_in1, c_in2, c_out, upsample):
    k1, k2, k3 = jax.random.split(key, 3)
    fan_in = 9 * (c_in1 + c_in2)
    scale = 1.0 / jnp.sqrt(jnp.asarray(fan_in, jnp.float32))
    # Split weights: concat([x1, x2], C) @ W == x1 @ W[:c1] + x2 @ W[c1:].
    # TODO(synk): verify concat order (x1 first) against the original CAT source.
    w1 = jax.random.normal(k1, (3, 3, c_in1, c_out), jnp.float32) * scale
    w2 = jax.random.normal(k2, (3, 3, c_in2, c_out), jnp.float32) * scale
    b = jax.random.normal(k3, (c_out,), jnp.float32) * scale

    c1p = _round_up(c_in1, 128)
    c2p = _round_up(c_in2, 128)
    cop = _round_up(c_out, 128)
    ccat = c1p + c2p
    wcat = jnp.zeros((3, 3, ccat, cop), jnp.float32)          # (dy, dx, c, co)
    wcat = wcat.at[:, :, :c_in1, :c_out].set(w1)
    wcat = wcat.at[:, :, c1p:c1p + c_in2, :c_out].set(w2)
    # Pack for the kernel: K index = (dy, c_padded), N index = (dx, co_padded).
    w_all = jnp.transpose(wcat, (0, 2, 1, 3)).reshape(3 * ccat, 3 * cop)
    bias = jnp.zeros((1, cop), jnp.float32).at[0, :c_out].set(b)
    return {"w_all": w_all.astype(jnp.bfloat16), "bias": bias,
            "upsample": upsample, "c1p": c1p, "c2p": c2p,
            "co": c_out, "cop": cop}


def upsample_nearest2x(x):
    # TODO(synk): original CAT may use bilinear / transposed-conv upsampling.
    return jnp.repeat(jnp.repeat(x, 2, axis=1), 2, axis=2)


def cat_apply(params, x1, x2):
    if params["upsample"]:
        x1 = upsample_nearest2x(x1)
    return fused_cat_conv_relu(x1, x2, params["w_all"], params["bias"])


# ----------------------------------------------------------------------------
# BASEBuildC
# ----------------------------------------------------------------------------
def init_base_build_c(key, pool_list, channel_list, num_branches):
    keys = iter(jax.random.split(key, 3 * num_branches + 2))
    params = {}
    params["cdblock0"] = init_cat(next(keys), channel_list[-1], channel_list[-1],
                                  channel_list[-1], upsample=False)
    params["cddecoder0"] = init_cat(next(keys), channel_list[-2], channel_list[-1],
                                    channel_list[-1], upsample=pool_list[-2])
    for i in range(1, num_branches):
        params[f"cdblock{i}"] = init_cat(
            next(keys), channel_list[i - 1], channel_list[i - 1],
            channel_list[i - 1], upsample=False)
        params[f"cddecoder{i}"] = init_cat(
            next(keys), channel_list[max(i - 2, 0)], channel_list[i - 1],
            channel_list[i - 1], upsample=pool_list[i])
        params[f"decoder{i}"] = init_cat(
            next(keys), channel_list[i - 1], channel_list[i],
            channel_list[i], upsample=pool_list[i])
    return params


def base_build_c_forward(params, y1, y2, num_branches):
    """Mirror of BASEBuildC.forward (all tensors NHWC, channels 128-padded)."""
    y1 = list(y1)
    y2 = list(y2)
    cs = []
    c_pre = None
    for i in range(1, num_branches):
        c = cat_apply(params[f"cdblock{i}"], y1[-i], y2[-i])
        if c_pre is not None:
            c = cat_apply(params[f"cddecoder{i}"], c_pre, c)
        cs.insert(0, c)
        y1[-i - 1] = cat_apply(params[f"decoder{i}"], y1[-i], y1[-i - 1])
        y2[-i - 1] = cat_apply(params[f"decoder{i}"], y2[-i], y2[-i - 1])
        c_pre = c
    c = cat_apply(params["cdblock0"], y1[0], y2[0])
    c = cat_apply(params["cddecoder0"], c_pre, c)
    cs.insert(0, c)
    return y1, y2, cs


def pad_channels_to_128(x):
    c = x.shape[-1]
    cp = _round_up(c, 128)
    if cp != c:
        x = jnp.pad(x, ((0, 0), (0, 0), (0, 0), (0, cp - c)))
    return x.astype(jnp.bfloat16)


def _ref_cat_conv_relu(x1, x2, p):
    """XLA reference for one fused CAT block (padded-channel domain)."""
    ccat, cop = p["c1p"] + p["c2p"], p["cop"]
    wref = p["w_all"].astype(jnp.float32).reshape(3, ccat, 3, cop).transpose(0, 2, 1, 3)
    xref = jnp.concatenate([x1, x2], axis=-1).astype(jnp.float32)
    out = jax.lax.conv_general_dilated(
        xref, wref, (1, 1), "SAME", dimension_numbers=("NHWC", "HWIO", "NHWC"))
    return jnp.maximum(out + p["bias"].reshape(1, 1, 1, cop), 0.0)


# ----------------------------------------------------------------------------
# Demo
# ----------------------------------------------------------------------------
if __name__ == "__main__":
    num_branches = 4
    pool_list = [True, True, True, True]
    channel_list = [32, 24, 16, 8]   # deepest -> shallowest (scaled-down demo)
    batch = 2
    base_hw = 16                     # spatial size of the shallowest feature y[0]

    key = jax.random.PRNGKey(0)
    key, pkey = jax.random.split(key)
    params = init_base_build_c(pkey, pool_list, channel_list, num_branches)

    # PyTorch-style NCHW pyramids, then NHWC + one-time channel padding (bf16).
    y1_nchw, y2_nchw = [], []
    for j in range(num_branches):
        c = channel_list[num_branches - 1 - j]
        hw = base_hw // (2 ** j)
        key, k1, k2 = jax.random.split(key, 3)
        y1_nchw.append(jax.random.normal(k1, (batch, c, hw, hw), jnp.float32))
        y2_nchw.append(jax.random.normal(k2, (batch, c, hw, hw), jnp.float32))

    to_nhwc = lambda t: jnp.transpose(t, (0, 2, 3, 1))
    y1 = [pad_channels_to_128(to_nhwc(t)) for t in y1_nchw]
    y2 = [pad_channels_to_128(to_nhwc(t)) for t in y2_nchw]

    # Sanity check 1: fused CAT block (no upsample) vs. XLA conv reference.
    p = params["cdblock0"]
    got = fused_cat_conv_relu(y1[0], y2[0], p["w_all"], p["bias"]).astype(jnp.float32)
    ref = _ref_cat_conv_relu(y1[0], y2[0], p)
    assert float(jnp.max(jnp.abs(got - ref))) < 5e-2, "fused CAT kernel mismatch"

    # Sanity check 2: decoder path (nearest-2x upsample on x1) vs. reference.
    pdec = params["decoder1"]
    x1u = upsample_nearest2x(y1[3])                         # hw 2 -> 4
    got2 = fused_cat_conv_relu(x1u, y1[2], pdec["w_all"], pdec["bias"]).astype(jnp.float32)
    ref2 = _ref_cat_conv_relu(x1u, y1[2], pdec)
    assert float(jnp.max(jnp.abs(got2 - ref2))) < 5e-2, "fused CAT (upsample) mismatch"

    # Full BASEBuildC forward.
    y1_out, y2_out, cs = base_build_c_forward(params, y1, y2, num_branches)

    # Strip the lane padding back to the true channel counts.
    true_c = lambda idx: channel_list[num_branches - 1 - idx]
    y1_out = [t[..., :true_c(j)] for j, t in enumerate(y1_out)]
    y2_out = [t[..., :true_c(j)] for j, t in enumerate(y2_out)]
    cs = [t[..., :true_c(j)] for j, t in enumerate(cs)]

    jax.block_until_ready(tuple(y1_out) + tuple(y2_out) + tuple(cs))
    print("KERNEL_OK")
</pallas_src>

<mosaic_0001>
module attributes {stable_mosaic.version = 11 : i64} {
  func.func @_cat_conv_relu_kernel(%arg0: i32, %arg1: i32, %arg2: memref<1x8x16x128xbf16, #tpu.memory_space<vmem>>, %arg3: memref<1x1x16x128xbf16, #tpu.memory_space<vmem>>, %arg4: memref<1x1x16x128xbf16, #tpu.memory_space<vmem>>, %arg5: memref<1x8x16x128xbf16, #tpu.memory_space<vmem>>, %arg6: memref<1x1x16x128xbf16, #tpu.memory_space<vmem>>, %arg7: memref<1x1x16x128xbf16, #tpu.memory_space<vmem>>, %arg8: memref<768x384xbf16, #tpu.memory_space<vmem>>, %arg9: memref<1x128xf32, #tpu.memory_space<vmem>>, %arg10: memref<1x8x16x128xbf16, #tpu.memory_space<vmem>>, %arg11: memref<10x24x256xbf16, #tpu.memory_space<vmem>>) attributes {dimension_semantics = [#tpu.dimension_semantics<parallel>, #tpu.dimension_semantics<parallel>], iteration_bounds = array<i64: 2, 2>, scalar_prefetch = 0 : i64, scratch_operands = 1 : i64, tpu.core_type = #tpu.core_type<tc>, window_params = [{transform_indices = @transform_0, window_bounds = array<i64: 1, 8, 16, 128>}, {transform_indices = @transform_1, window_bounds = array<i64: 1, 1, 16, 128>}, {transform_indices = @transform_2, window_bounds = array<i64: 1, 1, 16, 128>}, {transform_indices = @transform_3, window_bounds = array<i64: 1, 8, 16, 128>}, {transform_indices = @transform_4, window_bounds = array<i64: 1, 1, 16, 128>}, {transform_indices = @transform_5, window_bounds = array<i64: 1, 1, 16, 128>}, {pipeline_mode = #tpu.pipeline_mode<synchronous>, transform_indices = @transform_6, window_bounds = array<i64: 768, 384>}, {pipeline_mode = #tpu.pipeline_mode<synchronous>, transform_indices = @transform_7, window_bounds = array<i64: 1, 128>}, {transform_indices = @transform_8, window_bounds = array<i64: 1, 8, 16, 128>}]} {
    %cst = arith.constant 0.000000e+00 : bf16
    %0 = vector.broadcast %cst : bf16 to vector<10x1x256xbf16>
    %c0 = arith.constant 0 : index
    %c0_0 = arith.constant 0 : index
    %c0_1 = arith.constant 0 : index
    %1 = vector.load %arg11[%c0, %c0_0, %c0_1] : memref<10x24x256xbf16, #tpu.memory_space<vmem>>, vector<10x1x256xbf16>
    tpu.vector_store %arg11[%c0, %c0_0, %c0_1], %0 {strides = array<i32>} : memref<10x24x256xbf16, #tpu.memory_space<vmem>>, vector<10x1x256xbf16>,
    %cst_2 = arith.constant 0.000000e+00 : bf16
    %2 = vector.broadcast %cst_2 : bf16 to vector<10x7x256xbf16>
    %c0_3 = arith.constant 0 : index
    %c17 = arith.constant 17 : index
    %c0_4 = arith.constant 0 : index
    %3 = vector.load %arg11[%c0_3, %c17, %c0_4] : memref<10x24x256xbf16, #tpu.memory_space<vmem>>, vector<10x7x256xbf16>
    tpu.vector_store %arg11[%c0_3, %c17, %c0_4], %2 {strides = array<i32>} : memref<10x24x256xbf16, #tpu.memory_space<vmem>>, vector<10x7x256xbf16>,
    %c0_5 = arith.constant 0 : index
    %c0_6 = arith.constant 0 : index
    %c0_7 = arith.constant 0 : index
    %c0_8 = arith.constant 0 : index
    %4 = vector.load %arg3[%c0_5, %c0_6, %c0_7, %c0_8] : memref<1x1x16x128xbf16, #tpu.memory_space<vmem>>, vector<1x1x16x128xbf16>
    %5 = vector.shape_cast %4 : vector<1x1x16x128xbf16> to vector<1x16x128xbf16>
    %c0_9 = arith.constant 0 : index
    %c1 = arith.constant 1 : index
    %c0_10 = arith.constant 0 : index
    %6 = vector.load %arg11[%c0_9, %c1, %c0_10] : memref<10x24x256xbf16, #tpu.memory_space<vmem>>, vector<1x16x128xbf16>
    tpu.vector_store %arg11[%c0_9, %c1, %c0_10], %5 {strides = array<i32>} : memref<10x24x256xbf16, #tpu.memory_space<vmem>>, vector<1x16x128xbf16>,
    %c0_11 = arith.constant 0 : index
    %c0_12 = arith.constant 0 : index
    %c0_13 = arith.constant 0 : index
    %c0_14 = arith.constant 0 : index
    %7 = vector.load %arg2[%c0_11, %c0_12, %c0_13, %c0_14] : memref<1x8x16x128xbf16, #tpu.memory_space<vmem>>, vector<1x8x16x128xbf16>
    %8 = vector.shape_cast %7 : vector<1x8x16x128xbf16> to vector<8x16x128xbf16>
    %c1_15 = arith.constant 1 : index
    %c1_16 = arith.constant 1 : index
    %c0_17 = arith.constant 0 : index
    %9 = vector.load %arg11[%c1_15, %c1_16, %c0_17] : memref<10x24x256xbf16, #tpu.memory_space<vmem>>, vector<8x16x128xbf16>
    tpu.vector_store %arg11[%c1_15, %c1_16, %c0_17], %8 {strides = array<i32>} : memref<10x24x256xbf16, #tpu.memory_space<vmem>>, vector<8x16x128xbf16>,
    %c0_18 = arith.constant 0 : index
    %c0_19 = arith.constant 0 : index
    %c0_20 = arith.constant 0 : index
    %c0_21 = arith.constant 0 : index
    %10 = vector.load %arg4[%c0_18, %c0_19, %c0_20, %c0_21] : memref<1x1x16x128xbf16, #tpu.memory_space<vmem>>, vector<1x1x16x128xbf16>
    %11 = vector.shape_cast %10 : vector<1x1x16x128xbf16> to vector<1x16x128xbf16>
    %c9 = arith.constant 9 : index
    %c1_22 = arith.constant 1 : index
    %c0_23 = arith.constant 0 : index
    %12 = vector.load %arg11[%c9, %c1_22, %c0_23] : memref<10x24x256xbf16, #tpu.memory_space<vmem>>, vector<1x16x128xbf16>
    tpu.vector_store %arg11[%c9, %c1_22, %c0_23], %11 {strides = array<i32>} : memref<10x24x256xbf16, #tpu.memory_space<vmem>>, vector<1x16x128xbf16>,
    %c0_24 = arith.constant 0 : index
    %c0_25 = arith.constant 0 : index
    %c0_26 = arith.constant 0 : index
    %c0_27 = arith.constant 0 : index
    %13 = vector.load %arg6[%c0_24, %c0_25, %c0_26, %c0_27] : memref<1x1x16x128xbf16, #tpu.memory_space<vmem>>, vector<1x1x16x128xbf16>
    %14 = vector.shape_cast %13 : vector<1x1x16x128xbf16> to vector<1x16x128xbf16>
    %c0_28 = arith.constant 0 : index
    %c1_29 = arith.constant 1 : index
    %c128 = arith.constant 128 : index
    %15 = vector.load %arg11[%c0_28, %c1_29, %c128] : memref<10x24x256xbf16, #tpu.memory_space<vmem>>, vector<1x16x128xbf16>
    tpu.vector_store %arg11[%c0_28, %c1_29, %c128], %14 {strides = array<i32>} : memref<10x24x256xbf16, #tpu.memory_space<vmem>>, vector<1x16x128xbf16>,
    %c0_30 = arith.constant 0 : index
    %c0_31 = arith.constant 0 : index
    %c0_32 = arith.constant 0 : index
    %c0_33 = arith.constant 0 : index
    %16 = vector.load %arg5[%c0_30, %c0_31, %c0_32, %c0_33] : memref<1x8x16x128xbf16, #tpu.memory_space<vmem>>, vector<1x8x16x128xbf16>
    %17 = vector.shape_cast %16 : vector<1x8x16x128xbf16> to vector<8x16x128xbf16>
    %c1_34 = arith.constant 1 : index
    %c1_35 = arith.constant 1 : index
    %c128_36 = arith.constant 128 : index
    %18 = vector.load %arg11[%c1_34, %c1_35, %c128_36] : memref<10x24x256xbf16, #tpu.memory_space<vmem>>, vector<8x16x128xbf16>
    tpu.vector_store %arg11[%c1_34, %c1_35, %c128_36], %17 {strides = array<i32>} : memref<10x24x256xbf16, #tpu.memory_space<vmem>>, vector<8x16x128xbf16>,
    %c0_37 = arith.constant 0 : index
    %c0_38 = arith.constant 0 : index
    %c0_39 = arith.constant 0 : index
    %c0_40 = arith.constant 0 : index
    %19 = vector.load %arg7[%c0_37, %c0_38, %c0_39, %c0_40] : memref<1x1x16x128xbf16, #tpu.memory_space<vmem>>, vector<1x1x16x128xbf16>
    %20 = vector.shape_cast %19 : vector<1x1x16x128xbf16> to vector<1x16x128xbf16>
    %c9_41 = arith.constant 9 : index
    %c1_42 = arith.constant 1 : index
    %c128_43 = arith.constant 128 : index
    %21 = vector.load %arg11[%c9_41, %c1_42, %c128_43] : memref<10x24x256xbf16, #tpu.memory_space<vmem>>, vector<1x16x128xbf16>
    tpu.vector_store %arg11[%c9_41, %c1_42, %c128_43], %20 {strides = array<i32>} : memref<10x24x256xbf16, #tpu.memory_space<vmem>>, vector<1x16x128xbf16>,
    %c0_44 = arith.constant 0 : index
    %c0_45 = arith.constant 0 : index
    %c0_46 = arith.constant 0 : index
    %22 = vector.load %arg11[%c0_44, %c0_45, %c0_46] : memref<10x24x256xbf16, #tpu.memory_space<vmem>>, vector<10x24x256xbf16>
    %23 = vector.extract_strided_slice %22 {offsets = [0, 0, 0], sizes = [8, 24, 256], strides = [1, 1, 1]} : vector<10x24x256xbf16> to vector<8x24x256xbf16>
    %24 = vector.extract_strided_slice %22 {offsets = [1, 0, 0], sizes = [8, 24, 256], strides = [1, 1, 1]} : vector<10x24x256xbf16> to vector<8x24x256xbf16>
    %25 = vector.extract_strided_slice %22 {offsets = [2, 0, 0], sizes = [8, 24, 256], strides = [1, 1, 1]} : vector<10x24x256xbf16> to vector<8x24x256xbf16>
    %26 = tpu.concatenate %23, %24, %25 in 2 : vector<8x24x256xbf16>, vector<8x24x256xbf16>, vector<8x24x256xbf16> -> vector<8x24x768xbf16>
    %27 = vector.shape_cast %26 : vector<8x24x768xbf16> to vector<192x768xbf16>
    %c0_47 = arith.constant 0 : index
    %c0_48 = arith.constant 0 : index
    %28 = vector.load %arg8[%c0_47, %c0_48] : memref<768x384xbf16, #tpu.memory_space<vmem>>, vector<768x384xbf16>
    %cst_49 = arith.constant dense<0.000000e+00> : vector<192x384xf32>
    %29 = tpu.matmul %27, %28, %cst_49 {dimension_numbers = #tpu.dot_dimension_numbers<[1], [0], [0], [1], [0, 0, 1, 1], [], []>} : vector<192x768xbf16>, vector<768x384xbf16>, vector<192x384xf32> -> vector<192x384xf32>
    %30 = vector.shape_cast %29 : vector<192x384xf32> to vector<8x24x384xf32>
    %31 = vector.extract_strided_slice %30 {offsets = [0, 0, 0], sizes = [8, 16, 128], strides = [1, 1, 1]} : vector<8x24x384xf32> to vector<8x16x128xf32>
    %32 = vector.extract_strided_slice %30 {offsets = [0, 1, 128], sizes = [8, 16, 128], strides = [1, 1, 1]} : vector<8x24x384xf32> to vector<8x16x128xf32>
    %33 = arith.addf %31, %32 : vector<8x16x128xf32>
    %34 = vector.extract_strided_slice %30 {offsets = [0, 2, 256], sizes = [8, 16, 128], strides = [1, 1, 1]} : vector<8x24x384xf32> to vector<8x16x128xf32>
    %35 = arith.addf %33, %34 : vector<8x16x128xf32>
    %c0_50 = arith.constant 0 : index
    %c0_51 = arith.constant 0 : index
    %36 = vector.load %arg9[%c0_50, %c0_51] : memref<1x128xf32, #tpu.memory_space<vmem>>, vector<1x128xf32>
    %37 = vector.shape_cast %36 : vector<1x128xf32> to vector<1x1x128xf32>
    %38 = vector.broadcast %37 : vector<1x1x128xf32> to vector<8x16x128xf32>
    %39 = arith.addf %35, %38 : vector<8x16x128xf32>
    %cst_52 = arith.constant 0.000000e+00 : f32
    %40 = vector.broadcast %cst_52 : f32 to vector<8x16x128xf32>
    %41 = arith.maximumf %39, %40 : vector<8x16x128xf32>
    %42 = vector.shape_cast %41 : vector<8x16x128xf32> to vector<1x8x16x128xf32>
    %43 = arith.truncf %42 : vector<1x8x16x128xf32> to vector<1x8x16x128xbf16>
    %c0_53 = arith.constant 0 : index
    %c0_54 = arith.constant 0 : index
    %c0_55 = arith.constant 0 : index
    %c0_56 = arith.constant 0 : index
    %44 = vector.load %arg10[%c0_53, %c0_54, %c0_55, %c0_56] : memref<1x8x16x128xbf16, #tpu.memory_space<vmem>>, vector<1x8x16x128xbf16>
    tpu.vector_store %arg10[%c0_53, %c0_54, %c0_55, %c0_56], %43 {strides = array<i32>} : memref<1x8x16x128xbf16, #tpu.memory_space<vmem>>, vector<1x8x16x128xbf16>,
    return
  }
  func.func @transform_0(%arg0: i32, %arg1: i32) -> (i32, i32, i32, i32) {
    %c0_i32 = arith.constant 0 : i32
    %c0_i32_0 = arith.constant 0 : i32
    %c0_i32_1 = arith.constant 0 : i32
    return %arg0, %arg1, %c0_i32, %c0_i32_0 : i32, i32, i32, i32
  }
  func.func @transform_1(%arg0: i32, %arg1: i32) -> (i32, i32, i32, i32) {
    %c0_i32 = arith.constant 0 : i32
    %c0_i32_0 = arith.constant 0 : i32
    %c0_i32_1 = arith.constant 0 : i32
    return %arg0, %arg1, %c0_i32, %c0_i32_0 : i32, i32, i32, i32
  }
  func.func @transform_2(%arg0: i32, %arg1: i32) -> (i32, i32, i32, i32) {
    %c0_i32 = arith.constant 0 : i32
    %c0_i32_0 = arith.constant 0 : i32
    %c0_i32_1 = arith.constant 0 : i32
    return %arg0, %arg1, %c0_i32, %c0_i32_0 : i32, i32, i32, i32
  }
  func.func @transform_3(%arg0: i32, %arg1: i32) -> (i32, i32, i32, i32) {
    %c0_i32 = arith.constant 0 : i32
    %c0_i32_0 = arith.constant 0 : i32
    %c0_i32_1 = arith.constant 0 : i32
    return %arg0, %arg1, %c0_i32, %c0_i32_0 : i32, i32, i32, i32
  }
  func.func @transform_4(%arg0: i32, %arg1: i32) -> (i32, i32, i32, i32) {
    %c0_i32 = arith.constant 0 : i32
    %c0_i32_0 = arith.constant 0 : i32
    %c0_i32_1 = arith.constant 0 : i32
    return %arg0, %arg1, %c0_i32, %c0_i32_0 : i32, i32, i32, i32
  }
  func.func @transform_5(%arg0: i32, %arg1: i32) -> (i32, i32, i32, i32) {
    %c0_i32 = arith.constant 0 : i32
    %c0_i32_0 = arith.constant 0 : i32
    %c0_i32_1 = arith.constant 0 : i32
    return %arg0, %arg1, %c0_i32, %c0_i32_0 : i32, i32, i32, i32
  }
  func.func @transform_6(%arg0: i32, %arg1: i32) -> (i32, i32) {
    %c0_i32 = arith.constant 0 : i32
    %c0_i32_0 = arith.constant 0 : i32
    %c0_i32_1 = arith.constant 0 : i32
    return %c0_i32, %c0_i32_0 : i32, i32
  }
  func.func @transform_7(%arg0: i32, %arg1: i32) -> (i32, i32) {
    %c0_i32 = arith.constant 0 : i32
    %c0_i32_0 = arith.constant 0 : i32
    %c0_i32_1 = arith.constant 0 : i32
    return %c0_i32, %c0_i32_0 : i32, i32
  }
  func.func @transform_8(%arg0: i32, %arg1: i32) -> (i32, i32, i32, i32) {
    %c0_i32 = arith.constant 0 : i32
    %c0_i32_0 = arith.constant 0 : i32
    %c0_i32_1 = arith.constant 0 : i32
    return %arg0, %arg1, %c0_i32, %c0_i32_0 : i32, i32, i32, i32
  }
}

</mosaic_0001>

<llo_original>
// kernel: tpu_custom_call.1
$region0: #{tpu_custom_call.1}
  #allocation0 [shape = 'u32[]', space=smem, size = 0x4, offset = 0x4, fixed_abs, tag = 'smem constant byte address 0x4 - core index']
  #allocation1 [shape = 'u32[144,128]{1,0:T(1,128)}', space=vmem, size = 0x12000, scoped, tag = 'internal scratch']
  #allocation2 [shape = 'bf16[10,24,256]{2,1,0:T(8,128)(2,1)}', space=vmem, size = 0x1e000, scoped, tag = 'scratch operand']
  %s0 = inlined_call_operand.hbm [shape: bf16[2,16,16,128], index: 0, kind: input, shape index: {}]
  %s1 = inlined_call_operand.hbm [shape: bf16[2,2,16,128], index: 1, kind: input, shape index: {}]
  %s2 = inlined_call_operand.hbm [shape: bf16[2,2,16,128], index: 2, kind: input, shape index: {}]
  %s3 = inlined_call_operand.hbm [shape: bf16[2,16,16,128], index: 3, kind: input, shape index: {}]
  %s4 = inlined_call_operand.hbm [shape: bf16[2,2,16,128], index: 4, kind: input, shape index: {}]
  %s5 = inlined_call_operand.hbm [shape: bf16[2,2,16,128], index: 5, kind: input, shape index: {}]
  %s6 = inlined_call_operand.hbm [shape: bf16[768,384], index: 6, kind: input, shape index: {}]
  %s7 = inlined_call_operand.vmem [shape: f32[1,128], index: 7, kind: input, shape index: {}]
  %s8 = inlined_call_operand.hbm [shape: bf16[2,16,16,128], index: 8, kind: output, shape index: {}]
  %s9 = sld [smem:[#allocation0]]
  $region93: #{tpu_custom_call.1} parent=0
    _
  %s11 = ssub.s32 1, %s9
  %s12 = scalar_select 0, %s11, %s9
  $region1: #{tpu_custom_call.1} parent=0
    #allocation3 [shape = 'u8[65536]{0}', space=vmem, size = 0x10000, scoped, tag = 'input window, operand 0']
    #allocation4 [shape = 's32[2]{0}', space=sflag, size = 0x8, scoped, tag = 'scoped memory for tpu_custom_call.1']
    #allocation5 [shape = 's32[2]{0}', space=sflag, size = 0x8, scoped, tag = 'scoped memory for tpu_custom_call.1']
    #allocation6 [shape = 'u8[8192]{0}', space=vmem, size = 0x2000, scoped, tag = 'input window, operand 1']
    #allocation7 [shape = 's32[2]{0}', space=sflag, size = 0x8, scoped, tag = 'scoped memory for tpu_custom_call.1']
    #allocation8 [shape = 'u8[8192]{0}', space=vmem, size = 0x2000, scoped, tag = 'input window, operand 2']
    #allocation9 [shape = 'u8[65536]{0}', space=vmem, size = 0x10000, scoped, tag = 'input window, operand 3']
    #allocation10 [shape = 's32[2]{0}', space=sflag, size = 0x8, scoped, tag = 'scoped memory for tpu_custom_call.1']
    #allocation11 [shape = 'u8[8192]{0}', space=vmem, size = 0x2000, scoped, tag = 'input window, operand 4']
    #allocation12 [shape = 'u8[8192]{0}', space=vmem, size = 0x2000, scoped, tag = 'input window, operand 5']
    #allocation13 [shape = 's32[2]{0}', space=sflag, size = 0x8, scoped, tag = 'scoped memory for tpu_custom_call.1']
    #allocation14 [shape = 'u8[589824]{0}', space=vmem, size = 0x90000, scoped, tag = 'input window, operand 6, single buffered']
    #allocation15 [shape = 'u8[65536]{0}', space=vmem, size = 0x10000, scoped, tag = 'output window, operand 0']
    %13 = vsyncpa [#allocation4], 0
    %s14 = scalar_lea.sflag [#allocation4], 1
    %15 = vsyncpa %s14, 0
    %16 = vsyncpa [#allocation7], 0
    %s17 = scalar_lea.sflag [#allocation7], 1
    %18 = vsyncpa %s17, 0
    %19 = vsyncpa [#allocation10], 0
    %s20 = scalar_lea.sflag [#allocation10], 1
    %21 = vsyncpa %s20, 0
    %22 = vsyncpa [#allocation13], 0
    %s23 = scalar_lea.sflag [#allocation13], 1
    %24 = vsyncpa %s23, 0
    %25 = vsyncpa [#allocation5], 0
    %s26 = scalar_lea.sflag [#allocation5], 1
    %27 = vsyncpa %s26, 0
    loop: start=0, step=1, limit=6
    $region2: #{tpu_custom_call.1} parent=1 // loop_pre_header
      _
    $region3: #{tpu_custom_call.1} parent=1 // loop_header
      %s29 = sphi 0, %s33
      %p30 = scmp.ge.s32.totalorder %s29, 6
      %s36 = sphi 0, %s48
      %s37 = sphi 0, %s44
      %s38 = sphi 0, %s36
      %s39 = sphi 0, %s37
      %s40 = sphi 0, %s38
      %s41 = sphi 0, %s39
      %s53 = sphi 0, %s55
      %s56 = sphi 0, %s53
      %s57 = sphi 0, %s56
      %s73 = sphi 0, %s57
      %s81 = sphi 0, %s83
      %s84 = sphi 0, %s81
      %s85 = sphi 0, %s84
      %s101 = sphi 0, %s85
      %s109 = sphi 0, %s111
      %s112 = sphi 0, %s109
      %s113 = sphi 0, %s112
      %s129 = sphi 0, %s113
      %s137 = sphi 0, %s139
      %s140 = sphi 0, %s137
      %s141 = sphi 0, %s140
      %s157 = sphi 0, %s141
      %s165 = sphi 0, %s167
      %s168 = sphi 0, %s165
      %s169 = sphi 0, %s168
      %s185 = sphi 0, %s169
      %s193 = sphi 0, %s195
      %s196 = sphi 0, %s193
      %s197 = sphi 0, %s196
      %s213 = sphi 0, %s197
      %s217 = sphi 0, %s217
      %s219 = sphi 0, %s217
      %s220 = sphi 0, %s219
      %s234 = sphi 0, %s220
      %s238 = sphi 0, %s238
      %s240 = sphi 0, %s238
      %s241 = sphi 0, %s240
      %s255 = sphi 0, %s241
      %s263 = sphi 0, %s265
      %s266 = sphi 0, %s263
      %s267 = sphi 0, %s266
      %s283 = sphi 0, %s267
    $region4: #{tpu_custom_call.1} parent=1 // loop_header_branch
      %32 = sbr.rel (%p30) target = $region8
    $region5: #{tpu_custom_call.1} parent=1 // loop_body
      %s34 = ssub.s32 %s29, 1
      %s35 = ssub.s32 %s29, 2
      %s42 = sadd.s32 1, %s37
      %p43 = scmp.ge.s32.totalorder %s42, 2
      %s44 = scalar_select %p43, 0, %s42
      %s45 = sadd.s32 1, %s36
      %s46 = scalar_select %p43, %s45, %s36
      %p47 = scmp.ge.s32.totalorder %s46, 2
      %s48 = scalar_select %p47, 0, %s46
      %s49 = ssub.s32 %s36, %s48
      %s50 = ssub.s32 %s37, %s44
      %s51 = sor.u32 %s49, %s50
      %p52 = scmp.eq.s32.totalorder %s51, 0
      %s54 = sadd.s32 %s53, 1
      %s55 = scalar_select %p52, %s53, %s54
      %p58 = pneg %p52
      %p59 = scmp.eq.s32.totalorder %s29, 3
      %p60 = por %p58, %p59
      %p61 = scmp.ne.s32.totalorder %s53, %s56
      %p62 = scmp.eq.s32.totalorder %s29, 0
      %p63 = por %p61, %p62
      %p64 = scmp.ne.s32.totalorder %s53, %s56
      %p65 = scmp.eq.s32.totalorder %s34, 3
      %p66 = por %p64, %p65
      %p67 = scmp.ne.s32.totalorder %s56, %s57
      %p68 = scmp.eq.s32.totalorder %s34, 0
      %p69 = por %p67, %p68
      %p70 = scmp.ne.s32.totalorder %s56, %s57
      %p71 = scmp.eq.s32.totalorder %s35, 3
      %p72 = por %p70, %p71
      %p74 = scmp.ne.s32.totalorder %s57, %s73
      %p75 = scmp.eq.s32.totalorder %s35, 0
      %p76 = por %p74, %p75
      %s77 = ssub.s32 %s36, %s48
      %s78 = ssub.s32 %s37, %s44
      %s79 = sor.u32 %s77, %s78
      %p80 = scmp.eq.s32.totalorder %s79, 0
      %s82 = sadd.s32 %s81, 1
      %s83 = scalar_select %p80, %s81, %s82
      %p86 = pneg %p80
      %p87 = scmp.eq.s32.totalorder %s29, 3
      %p88 = por %p86, %p87
      %p89 = scmp.ne.s32.totalorder %s81, %s84
      %p90 = scmp.eq.s32.totalorder %s29, 0
      %p91 = por %p89, %p90
      %p92 = scmp.ne.s32.totalorder %s81, %s84
      %p93 = scmp.eq.s32.totalorder %s34, 3
      %p94 = por %p92, %p93
      %p95 = scmp.ne.s32.totalorder %s84, %s85
      %p96 = scmp.eq.s32.totalorder %s34, 0
      %p97 = por %p95, %p96
      %p98 = scmp.ne.s32.totalorder %s84, %s85
      %p99 = scmp.eq.s32.totalorder %s35, 3
      %p100 = por %p98, %p99
      %p102 = scmp.ne.s32.totalorder %s85, %s101
      %p103 = scmp.eq.s32.totalorder %s35, 0
      %p104 = por %p102, %p103
      %s105 = ssub.s32 %s36, %s48
      %s106 = ssub.s32 %s37, %s44
      %s107 = sor.u32 %s105, %s106
      %p108 = scmp.eq.s32.totalorder %s107, 0
      %s110 = sadd.s32 %s109, 1
      %s111 = scalar_select %p108, %s109, %s110
      %p114 = pneg %p108
      %p115 = scmp.eq.s32.totalorder %s29, 3
      %p116 = por %p114, %p115
      %p117 = scmp.ne.s32.totalorder %s109, %s112
      %p118 = scmp.eq.s32.totalorder %s29, 0
      %p119 = por %p117, %p118
      %p120 = scmp.ne.s32.totalorder %s109, %s112
      %p121 = scmp.eq.s32.totalorder %s34, 3
      %p122 = por %p120, %p121
      %p123 = scmp.ne.s32.totalorder %s112, %s113
      %p124 = scmp.eq.s32.totalorder %s34, 0
      %p125 = por %p123, %p124
      %p126 = scmp.ne.s32.totalorder %s112, %s113
      %p127 = scmp.eq.s32.totalorder %s35, 3
      %p128 = por %p126, %p127
      %p130 = scmp.ne.s32.totalorder %s113, %s129
      %p131 = scmp.eq.s32.totalorder %s35, 0
      %p132 = por %p130, %p131
      %s133 = ssub.s32 %s36, %s48
      %s134 = ssub.s32 %s37, %s44
      %s135 = sor.u32 %s133, %s134
      %p136 = scmp.eq.s32.totalorder %s135, 0
      %s138 = sadd.s32 %s137, 1
      %s139 = scalar_select %p136, %s137, %s138
      %p142 = pneg %p136
      %p143 = scmp.eq.s32.totalorder %s29, 3
      %p144 = por %p142, %p143
      %p145 = scmp.ne.s32.totalorder %s137, %s140
      %p146 = scmp.eq.s32.totalorder %s29, 0
      %p147 = por %p145, %p146
      %p148 = scmp.ne.s32.totalorder %s137, %s140
      %p149 = scmp.eq.s32.totalorder %s34, 3
      %p150 = por %p148, %p149
      %p151 = scmp.ne.s32.totalorder %s140, %s141
      %p152 = scmp.eq.s32.totalorder %s34, 0
      %p153 = por %p151, %p152
      %p154 = scmp.ne.s32.totalorder %s140, %s141
      %p155 = scmp.eq.s32.totalorder %s35, 3
      %p156 = por %p154, %p155
      %p158 = scmp.ne.s32.totalorder %s141, %s157
      %p159 = scmp.eq.s32.totalorder %s35, 0
      %p160 = por %p158, %p159
      %s161 = ssub.s32 %s36, %s48
      %s162 = ssub.s32 %s37, %s44
      %s163 = sor.u32 %s161, %s162
      %p164 = scmp.eq.s32.totalorder %s163, 0
      %s166 = sadd.s32 %s165, 1
      %s167 = scalar_select %p164, %s165, %s166
      %p170 = pneg %p164
      %p171 = scmp.eq.s32.totalorder %s29, 3
      %p172 = por %p170, %p171
      %p173 = scmp.ne.s32.totalorder %s165, %s168
      %p174 = scmp.eq.s32.totalorder %s29, 0
      %p175 = por %p173, %p174
      %p176 = scmp.ne.s32.totalorder %s165, %s168
      %p177 = scmp.eq.s32.totalorder %s34, 3
      %p178 = por %p176, %p177
      %p179 = scmp.ne.s32.totalorder %s168, %s169
      %p180 = scmp.eq.s32.totalorder %s34, 0
      %p181 = por %p179, %p180
      %p182 = scmp.ne.s32.totalorder %s168, %s169
      %p183 = scmp.eq.s32.totalorder %s35, 3
      %p184 = por %p182, %p183
      %p186 = scmp.ne.s32.totalorder %s169, %s185
      %p187 = scmp.eq.s32.totalorder %s35, 0
      %p188 = por %p186, %p187
      %s189 = ssub.s32 %s36, %s48
      %s190 = ssub.s32 %s37, %s44
      %s191 = sor.u32 %s189, %s190
      %p192 = scmp.eq.s32.totalorder %s191, 0
      %s194 = sadd.s32 %s193, 1
      %s195 = scalar_select %p192, %s193, %s194
      %p198 = pneg %p192
      %p199 = scmp.eq.s32.totalorder %s29, 3
      %p200 = por %p198, %p199
      %p201 = scmp.ne.s32.totalorder %s193, %s196
      %p202 = scmp.eq.s32.totalorder %s29, 0
      %p203 = por %p201, %p202
      %p204 = scmp.ne.s32.totalorder %s193, %s196
      %p205 = scmp.eq.s32.totalorder %s34, 3
      %p206 = por %p204, %p205
      %p207 = scmp.ne.s32.totalorder %s196, %s197
      %p208 = scmp.eq.s32.totalorder %s34, 0
      %p209 = por %p207, %p208
      %p210 = scmp.ne.s32.totalorder %s196, %s197
      %p211 = scmp.eq.s32.totalorder %s35, 3
      %p212 = por %p210, %p211
      %p214 = scmp.ne.s32.totalorder %s197, %s213
      %p215 = scmp.eq.s32.totalorder %s35, 0
      %p216 = por %p214, %p215
      %s218 = sadd.s32 %s217, 1
      %p221 = scmp.eq.s32.totalorder %s29, 3
      %p222 = scmp.ne.s32.totalorder %s217, %s219
      %p223 = scmp.eq.s32.totalorder %s29, 0
      %p224 = por %p222, %p223
      %p225 = scmp.ne.s32.totalorder %s217, %s219
      %p226 = scmp.eq.s32.totalorder %s34, 3
      %p227 = por %p225, %p226
      %p228 = scmp.ne.s32.totalorder %s219, %s220
      %p229 = scmp.eq.s32.totalorder %s34, 0
      %p230 = por %p228, %p229
      %p231 = scmp.ne.s32.totalorder %s219, %s220
      %p232 = scmp.eq.s32.totalorder %s35, 3
      %p233 = por %p231, %p232
      %p235 = scmp.ne.s32.totalorder %s220, %s234
      %p236 = scmp.eq.s32.totalorder %s35, 0
      %p237 = por %p235, %p236
      %s239 = sadd.s32 %s238, 1
      %p242 = scmp.eq.s32.totalorder %s29, 3
      %p243 = scmp.ne.s32.totalorder %s238, %s240
      %p244 = scmp.eq.s32.totalorder %s29, 0
      %p245 = por %p243, %p244
      %p246 = scmp.ne.s32.totalorder %s238, %s240
      %p247 = scmp.eq.s32.totalorder %s34, 3
      %p248 = por %p246, %p247
      %p249 = scmp.ne.s32.totalorder %s240, %s241
      %p250 = scmp.eq.s32.totalorder %s34, 0
      %p251 = por %p249, %p250
      %p252 = scmp.ne.s32.totalorder %s240, %s241
      %p253 = scmp.eq.s32.totalorder %s35, 3
      %p254 = por %p252, %p253
      %p256 = scmp.ne.s32.totalorder %s241, %s255
      %p257 = scmp.eq.s32.totalorder %s35, 0
      %p258 = por %p256, %p257
      %s259 = ssub.s32 %s36, %s48
      %s260 = ssub.s32 %s37, %s44
      %s261 = sor.u32 %s259, %s260
      %p262 = scmp.eq.s32.totalorder %s261, 0
      %s264 = sadd.s32 %s263, 1
      %s265 = scalar_select %p262, %s263, %s264
      %p268 = pneg %p262
      %p269 = scmp.eq.s32.totalorder %s29, 3
      %p270 = por %p268, %p269
      %p271 = scmp.ne.s32.totalorder %s263, %s266
      %p272 = scmp.eq.s32.totalorder %s29, 0
      %p273 = por %p271, %p272
      %p274 = scmp.ne.s32.totalorder %s263, %s266
      %p275 = scmp.eq.s32.totalorder %s34, 3
      %p276 = por %p274, %p275
      %p277 = scmp.ne.s32.totalorder %s266, %s267
      %p278 = scmp.eq.s32.totalorder %s34, 0
      %p279 = por %p277, %p278
      %p280 = scmp.ne.s32.totalorder %s266, %s267
      %p281 = scmp.eq.s32.totalorder %s35, 3
      %p282 = por %p280, %p281
      %p284 = scmp.ne.s32.totalorder %s267, %s283
      %p285 = scmp.eq.s32.totalorder %s35, 0
      %p286 = por %p284, %p285
      %p287 = scmp.le.s32.totalorder 1, %s29
      %p288 = scmp.lt.s32.totalorder %s29, 5
      %p289 = pnand %p287, %p288
      %p290 = pneg %p289
      // Predicated region
      $region9: #{tpu_custom_call.1} parent=5 // pred_check
        _
      $region10: #{tpu_custom_call.1} parent=5 // pred_check_branch
        %292 = sbr.rel (%p289) target = $region12
      $region11: #{tpu_custom_call.1} parent=5 // pred_region
        %s293 = ssub.s32 %s29, 1
        // Predicated region
        $region13: #{tpu_custom_call.1} parent=11 // pred_check
          %p294 = pneg %p230
        $region14: #{tpu_custom_call.1} parent=11 // pred_check_branch
          %296 = sbr.rel (%p294) target = $region16
        $region15: #{tpu_custom_call.1} parent=11 // pred_region
          %s298 = ssub.s32 18432, 18432
          %299 = vsyncadd [#allocation13], %s298
          %s300 = sshll.u32 [#allocation14], 4
          %s301 = int_to_ptr.vmem [resolvable:$true] %s300
          %306 = dma.hbm_to_vmem [thread:$0]  %s6, 18432, %s301, [#allocation13], 192, 192, 12
        $region16: #{tpu_custom_call.1} parent=11 // pred_fallthru
          _
        // Predicated region
        $region17: #{tpu_custom_call.1} parent=11 // pred_check
          %p307 = pneg %p251
        $region18: #{tpu_custom_call.1} parent=11 // pred_check_branch
          %309 = sbr.rel (%p307) target = $region20
        $region19: #{tpu_custom_call.1} parent=11 // pred_region
          _
        $region20: #{tpu_custom_call.1} parent=11 // pred_fallthru
          _
      $region12: #{tpu_custom_call.1} parent=5 // pred_fallthru
        _
      %p310 = scmp.lt.s32.totalorder %s29, 4
      // Predicated region
      $region21: #{tpu_custom_call.1} parent=5 // pred_check
        %p311 = pneg %p310
      $region22: #{tpu_custom_call.1} parent=5 // pred_check_branch
        %313 = sbr.rel (%p311) target = $region24
      $region23: #{tpu_custom_call.1} parent=5 // pred_region
        // Predicated region
        $region25: #{tpu_custom_call.1} parent=23 // pred_check
          %p314 = pneg %p63
        $region26: #{tpu_custom_call.1} parent=23 // pred_check_branch
          %316 = sbr.rel (%p314) target = $region28
        $region27: #{tpu_custom_call.1} parent=23 // pred_region
          %s317 = sand.u32 %s53, 1
          %s318 = scalar_lea.sflag [#allocation4], %s317
          %s319 = sand.u32 %s53, 1
          %s320 = smul.addr %s319, 64
          %s321 = scalar_lea.vmem [#allocation3], %s320
          %s322 = smul.u32 8, %s37
          %s324 = ssub.s32 1024, 1024
          %325 = vsyncadd %s318, %s324
          %s326 = smul.addr %s322, 2
          %s327 = smul.addr %s36, 32
          %s328 = sadd.s32 %s326, %s327
          %s329 = smul.addr %s328, 64
          %s330 = scalar_lea.hbm %s0, %s329
          %s331 = sshll.u32 %s321, 4
          %s332 = int_to_ptr.vmem [resolvable:$true] %s331
          %337 = dma.hbm_to_vmem [thread:$0]  %s330, 1024, %s332, %s318, 64, 64, 4
        $region28: #{tpu_custom_call.1} parent=23 // pred_fallthru
          _
        // Predicated region
        $region29: #{tpu_custom_call.1} parent=23 // pred_check
          %p338 = pneg %p91
        $region30: #{tpu_custom_call.1} parent=23 // pred_check_branch
          %340 = sbr.rel (%p338) target = $region32
        $region31: #{tpu_custom_call.1} parent=23 // pred_region
          %s341 = sand.u32 %s29, 1
          %s342 = scalar_lea.sflag [#allocation7], %s341
          %s343 = sand.u32 %s81, 1
          %s344 = smul.addr %s343, 8
          %s345 = scalar_lea.vmem [#allocation6], %s344
          %s347 = ssub.s32 128, 128
          %348 = vsyncadd %s342, %s347
          %s349 = smul.addr %s37, 2
          %s350 = smul.addr %s36, 4
          %s351 = sadd.s32 %s349, %s350
          %s352 = smul.addr %s351, 64
          %s353 = scalar_lea.hbm %s1, %s352
          %s354 = sshll.u32 %s345, 4
          %s355 = int_to_ptr.vmem [resolvable:$true] %s354
          %360 = dma.hbm_to_vmem [thread:$0]  %s353, 128, %s355, %s342, 64, 64, 4
        $region32: #{tpu_custom_call.1} parent=23 // pred_fallthru
          _
        // Predicated region
        $region33: #{tpu_custom_call.1} parent=23 // pred_check
          %p361 = pneg %p119
        $region34: #{tpu_custom_call.1} parent=23 // pred_check_branch
          %363 = sbr.rel (%p361) target = $region36
        $region35: #{tpu_custom_call.1} parent=23 // pred_region
          %s364 = sand.u32 %s29, 1
          %s365 = scalar_lea.sflag [#allocation7], %s364
          %s366 = sand.u32 %s109, 1
          %s367 = smul.addr %s366, 8
          %s368 = scalar_lea.vmem [#allocation8], %s367
          %s370 = ssub.s32 128, 128
          %371 = vsyncadd %s365, %s370
          %s372 = smul.addr %s37, 2
          %s373 = smul.addr %s36, 4
          %s374 = sadd.s32 %s372, %s373
          %s375 = smul.addr %s374, 64
          %s376 = scalar_lea.hbm %s2, %s375
          %s377 = sshll.u32 %s368, 4
          %s378 = int_to_ptr.vmem [resolvable:$true] %s377
          %383 = dma.hbm_to_vmem [thread:$0]  %s376, 128, %s378, %s365, 64, 64, 4
        $region36: #{tpu_custom_call.1} parent=23 // pred_fallthru
          _
        // Predicated region
        $region37: #{tpu_custom_call.1} parent=23 // pred_check
          %p384 = pneg %p147
        $region38: #{tpu_custom_call.1} parent=23 // pred_check_branch
          %386 = sbr.rel (%p384) target = $region40
        $region39: #{tpu_custom_call.1} parent=23 // pred_region
          %s387 = sand.u32 %s29, 1
          %s388 = scalar_lea.sflag [#allocation10], %s387
          %s389 = sand.u32 %s137, 1
          %s390 = smul.addr %s389, 64
          %s391 = scalar_lea.vmem [#allocation9], %s390
          %s392 = smul.u32 8, %s37
          %s394 = ssub.s32 1024, 1024
          %395 = vsyncadd %s388, %s394
          %s396 = smul.addr %s392, 2
          %s397 = smul.addr %s36, 32
          %s398 = sadd.s32 %s396, %s397
          %s399 = smul.addr %s398, 64
          %s400 = scalar_lea.hbm %s3, %s399
          %s401 = sshll.u32 %s391, 4
          %s402 = int_to_ptr.vmem [resolvable:$true] %s401
          %407 = dma.hbm_to_vmem [thread:$0]  %s400, 1024, %s402, %s388, 64, 64, 4
        $region40: #{tpu_custom_call.1} parent=23 // pred_fallthru
          _
        // Predicated region
        $region41: #{tpu_custom_call.1} parent=23 // pred_check
          %p408 = pneg %p175
        $region42: #{tpu_custom_call.1} parent=23 // pred_check_branch
          %410 = sbr.rel (%p408) target = $region44
        $region43: #{tpu_custom_call.1} parent=23 // pred_region
          %s411 = sand.u32 %s29, 1
          %s412 = scalar_lea.sflag [#allocation10], %s411
          %s413 = sand.u32 %s165, 1
          %s414 = smul.addr %s413, 8
          %s415 = scalar_lea.vmem [#allocation11], %s414
          %s417 = ssub.s32 128, 128
          %418 = vsyncadd %s412, %s417
          %s419 = smul.addr %s37, 2
          %s420 = smul.addr %s36, 4
          %s421 = sadd.s32 %s419, %s420
          %s422 = smul.addr %s421, 64
          %s423 = scalar_lea.hbm %s4, %s422
          %s424 = sshll.u32 %s415, 4
          %s425 = int_to_ptr.vmem [resolvable:$true] %s424
          %430 = dma.hbm_to_vmem [thread:$0]  %s423, 128, %s425, %s412, 64, 64, 4
        $region44: #{tpu_custom_call.1} parent=23 // pred_fallthru
          _
        // Predicated region
        $region45: #{tpu_custom_call.1} parent=23 // pred_check
          %p431 = pneg %p203
        $region46: #{tpu_custom_call.1} parent=23 // pred_check_branch
          %433 = sbr.rel (%p431) target = $region48
        $region47: #{tpu_custom_call.1} parent=23 // pred_region
          %s434 = sand.u32 %s29, 1
          %s435 = scalar_lea.sflag [#allocation13], %s434
          %s436 = sand.u32 %s193, 1
          %s437 = smul.addr %s436, 8
          %s438 = scalar_lea.vmem [#allocation12], %s437
          %s440 = ssub.s32 128, 128
          %441 = vsyncadd %s435, %s440
          %s442 = smul.addr %s37, 2
          %s443 = smul.addr %s36, 4
          %s444 = sadd.s32 %s442, %s443
          %s445 = smul.addr %s444, 64
          %s446 = scalar_lea.hbm %s5, %s445
          %s447 = sshll.u32 %s438, 4
          %s448 = int_to_ptr.vmem [resolvable:$true] %s447
          %453 = dma.hbm_to_vmem [thread:$0]  %s446, 128, %s448, %s435, 64, 64, 4
        $region48: #{tpu_custom_call.1} parent=23 // pred_fallthru
          _
      $region24: #{tpu_custom_call.1} parent=5 // pred_fallthru
        _
      %p454 = scmp.le.s32.totalorder 1, %s29
      %p455 = scmp.lt.s32.totalorder %s29, 5
      %p456 = pnand %p454, %p455
      %p457 = pneg %p456
      // Predicated region
      $region49: #{tpu_custom_call.1} parent=5 // pred_check
        _
      $region50: #{tpu_custom_call.1} parent=5 // pred_check_branch
        %459 = sbr.rel (%p456) target = $region52
      $region51: #{tpu_custom_call.1} parent=5 // pred_region
        %s460 = ssub.s32 %s29, 1
        %s461 = sand.u32 %s56, 1
        %s462 = scalar_lea.sflag [#allocation4], %s461
        %s463 = sand.u32 %s56, 1
        %s464 = smul.addr %s463, 64
        %s465 = scalar_lea.vmem [#allocation3], %s464
        // Predicated region
        $region53: #{tpu_custom_call.1} parent=51 // pred_check
          %p466 = pneg %p69
        $region54: #{tpu_custom_call.1} parent=51 // pred_check_branch
          %468 = sbr.rel (%p466) target = $region56
        $region55: #{tpu_custom_call.1} parent=51 // pred_region
          %469 = dma.done %s462, 1024
        $region56: #{tpu_custom_call.1} parent=51 // pred_fallthru
          _
        %s470 = sand.u32 %s34, 1
        %s471 = scalar_lea.sflag [#allocation7], %s470
        %s472 = sand.u32 %s84, 1
        %s473 = smul.addr %s472, 8
        %s474 = scalar_lea.vmem [#allocation6], %s473
        // Predicated region
        $region57: #{tpu_custom_call.1} parent=51 // pred_check
          %p475 = pneg %p97
        $region58: #{tpu_custom_call.1} parent=51 // pred_check_branch
          %477 = sbr.rel (%p475) target = $region60
        $region59: #{tpu_custom_call.1} parent=51 // pred_region
          %478 = dma.done %s471, 128
        $region60: #{tpu_custom_call.1} parent=51 // pred_fallthru
          _
        %s479 = sand.u32 %s34, 1
        %s480 = scalar_lea.sflag [#allocation7], %s479
        %s481 = sand.u32 %s112, 1
        %s482 = smul.addr %s481, 8
        %s483 = scalar_lea.vmem [#allocation8], %s482
        // Predicated region
        $region61: #{tpu_custom_call.1} parent=51 // pred_check
          %p484 = pneg %p125
        $region62: #{tpu_custom_call.1} parent=51 // pred_check_branch
          %486 = sbr.rel (%p484) target = $region64
        $region63: #{tpu_custom_call.1} parent=51 // pred_region
          %487 = dma.done %s480, 128
        $region64: #{tpu_custom_call.1} parent=51 // pred_fallthru
          _
        %s488 = sand.u32 %s34, 1
        %s489 = scalar_lea.sflag [#allocation10], %s488
        %s490 = sand.u32 %s140, 1
        %s491 = smul.addr %s490, 64
        %s492 = scalar_lea.vmem [#allocation9], %s491
        // Predicated region
        $region65: #{tpu_custom_call.1} parent=51 // pred_check
          %p493 = pneg %p153
        $region66: #{tpu_custom_call.1} parent=51 // pred_check_branch
          %495 = sbr.rel (%p493) target = $region68
        $region67: #{tpu_custom_call.1} parent=51 // pred_region
          %496 = dma.done %s489, 1024
        $region68: #{tpu_custom_call.1} parent=51 // pred_fallthru
          _
        %s497 = sand.u32 %s34, 1
        %s498 = scalar_lea.sflag [#allocation10], %s497
        %s499 = sand.u32 %s168, 1
        %s500 = smul.addr %s499, 8
        %s501 = scalar_lea.vmem [#allocation11], %s500
        // Predicated region
        $region69: #{tpu_custom_call.1} parent=51 // pred_check
          %p502 = pneg %p181
        $region70: #{tpu_custom_call.1} parent=51 // pred_check_branch
          %504 = sbr.rel (%p502) target = $region72
        $region71: #{tpu_custom_call.1} parent=51 // pred_region
          %505 = dma.done %s498, 128
        $region72: #{tpu_custom_call.1} parent=51 // pred_fallthru
          _
        %s506 = sand.u32 %s34, 1
        %s507 = scalar_lea.sflag [#allocation13], %s506
        %s508 = sand.u32 %s196, 1
        %s509 = smul.addr %s508, 8
        %s510 = scalar_lea.vmem [#allocation12], %s509
        // Predicated region
        $region73: #{tpu_custom_call.1} parent=51 // pred_check
          %p511 = pneg %p209
        $region74: #{tpu_custom_call.1} parent=51 // pred_check_branch
          %513 = sbr.rel (%p511) target = $region76
        $region75: #{tpu_custom_call.1} parent=51 // pred_region
          %514 = dma.done %s507, 128
        $region76: #{tpu_custom_call.1} parent=51 // pred_fallthru
          _
        // Predicated region
        $region77: #{tpu_custom_call.1} parent=51 // pred_check
          %p515 = pneg %p230
        $region78: #{tpu_custom_call.1} parent=51 // pred_check_branch
          %517 = sbr.rel (%p515) target = $region80
        $region79: #{tpu_custom_call.1} parent=51 // pred_region
          %518 = dma.done [#allocation13], 18432
        $region80: #{tpu_custom_call.1} parent=51 // pred_fallthru
          _
        %s519 = sand.u32 %s56, 1
        %s520 = scalar_lea.sflag [#allocation4], %s519
        %s521 = sand.u32 %s56, 1
        %s522 = smul.addr %s521, 64
        %s523 = scalar_lea.vmem [#allocation3], %s522
        %p524 = pneg %p69
        %p525 = pneg %p66
        %s526 = sand.u32 %s34, 1
        %s527 = scalar_lea.sflag [#allocation7], %s526
        %s528 = sand.u32 %s84, 1
        %s529 = smul.addr %s528, 8
        %s530 = scalar_lea.vmem [#allocation6], %s529
        %p531 = pneg %p97
        %p532 = pneg %p94
        %s533 = sand.u32 %s34, 1
        %s534 = scalar_lea.sflag [#allocation7], %s533
        %s535 = sand.u32 %s112, 1
        %s536 = smul.addr %s535, 8
        %s537 = scalar_lea.vmem [#allocation8], %s536
        %p538 = pneg %p125
        %p539 = pneg %p122
        %s540 = sand.u32 %s34, 1
        %s541 = scalar_lea.sflag [#allocation10], %s540
        %s542 = sand.u32 %s140, 1
        %s543 = smul.addr %s542, 64
        %s544 = scalar_lea.vmem [#allocation9], %s543
        %p545 = pneg %p153
        %p546 = pneg %p150
        %s547 = sand.u32 %s34, 1
        %s548 = scalar_lea.sflag [#allocation10], %s547
        %s549 = sand.u32 %s168, 1
        %s550 = smul.addr %s549, 8
        %s551 = scalar_lea.vmem [#allocation11], %s550
        %p552 = pneg %p181
        %p553 = pneg %p178
        %s554 = sand.u32 %s34, 1
        %s555 = scalar_lea.sflag [#allocation13], %s554
        %s556 = sand.u32 %s196, 1
        %s557 = smul.addr %s556, 8
        %s558 = scalar_lea.vmem [#allocation12], %s557
        %p559 = pneg %p209
        %p560 = pneg %p206
        %p561 = pneg %p230
        %p562 = pneg %p227
        %p563 = pneg %p251
        %p564 = pneg %p248
        %p565 = pneg %p279
        %p566 = pneg %p276
        %s567 = sand.u32 %s266, 1
        %s568 = scalar_lea.sflag [#allocation5], %s567
        %s569 = sand.u32 %s266, 1
        %s570 = smul.addr %s569, 64
        %s571 = scalar_lea.vmem [#allocation15], %s570
        %s572 = smul.u32 8, %s39
        %s573 = smul.u32 8, %s39
        %s574 = smul.u32 8, %s39
        %vm576 = vcmask 1040384
        %vm577 = vsmask.f32 256
        %vm578 = vmand %vm576, %vm577
        %vm579 = vcmask 1044484
        %vm580 = vsmask.f32 4352
        %vm581 = vmand %vm579, %vm580
        %vm582 = vmor %vm581, %vm578
        %v583 = vld [vmem:[#allocation2] sm:$0x11]
        %v584 = vsel %vm582, 0, %v583
        %585 = vst [vmem:[#allocation2] sm:$0x11] %v584
        %v586 = vld [vmem:[#allocation2 + $0x18] sm:$0x11]
        %v587 = vsel %vm582, 0, %v586
        %588 = vst [vmem:[#allocation2 + $0x18] sm:$0x11] %v587
        %v589 = vld [vmem:[#allocation2 + $0x30] sm:$0x11]
        %v590 = vsel %vm582, 0, %v589
        %591 = vst [vmem:[#allocation2 + $0x30] sm:$0x11] %v590
        %v592 = vld [vmem:[#allocation2 + $0x48] sm:$0x11]
        %v593 = vsel %vm582, 0, %v592
        %594 = vst [vmem:[#allocation2 + $0x48] sm:$0x11] %v593
        %v595 = vld [vmem:[#allocation2 + $0x60] sm:$0x11]
        %v596 = vsel %vm582, 0, %v595
        %597 = vst [vmem:[#allocation2 + $0x60] sm:$0x11] %v596
        %v598 = vld [vmem:[#allocation2 + $0x78] sm:$0x11]
        %v599 = vsel %vm582, 0, %v598
        %600 = vst [vmem:[#allocation2 + $0x78] sm:$0x11] %v599
        %v601 = vld [vmem:[#allocation2 + $0x90] sm:$0x11]
        %v602 = vsel %vm582, 0, %v601
        %603 = vst [vmem:[#allocation2 + $0x90] sm:$0x11] %v602
        %v604 = vld [vmem:[#allocation2 + $0xa8] sm:$0x11]
        %v605 = vsel %vm582, 0, %v604
        %606 = vst [vmem:[#allocation2 + $0xa8] sm:$0x11] %v605
        %v607 = vld [vmem:[#allocation2 + $0xc0] sm:$0x11]
        %v608 = vsel %vm582, 0, %v607
        %609 = vst [vmem:[#allocation2 + $0xc0] sm:$0x11] %v608
        %v610 = vld [vmem:[#allocation2 + $0xd8] sm:$0x11]
        %v611 = vsel %vm582, 0, %v610
        %612 = vst [vmem:[#allocation2 + $0xd8] sm:$0x11] %v611
        %vm613 = vcmask 1043456
        %vm614 = vsmask.f32 7938
        %vm615 = vmand %vm613, %vm614
        %vm616 = vcmask 1047556
        %vm617 = vsmask.f32 7954
        %vm618 = vmand %vm616, %vm617
        %vm619 = vmor %vm618, %vm615
        %v620 = vld [vmem:[#allocation2 + $0x10] sm:$0xff]
        %v621 = vsel %vm619, 0, %v620
        %622 = vst [vmem:[#allocation2 + $0x10] sm:$0xff] %v621
        %v623 = vld [vmem:[#allocation2 + $0x28] sm:$0xff]
        %v624 = vsel %vm619, 0, %v623
        %625 = vst [vmem:[#allocation2 + $0x28] sm:$0xff] %v624
        %v626 = vld [vmem:[#allocation2 + $0x40] sm:$0xff]
        %v627 = vsel %vm619, 0, %v626
        %628 = vst [vmem:[#allocation2 + $0x40] sm:$0xff] %v627
        %v629 = vld [vmem:[#allocation2 + $0x58] sm:$0xff]
        %v630 = vsel %vm619, 0, %v629
        %631 = vst [vmem:[#allocation2 + $0x58] sm:$0xff] %v630
        %v632 = vld [vmem:[#allocation2 + $0x70] sm:$0xff]
        %v633 = vsel %vm619, 0, %v632
        %634 = vst [vmem:[#allocation2 + $0x70] sm:$0xff] %v633
        %v635 = vld [vmem:[#allocation2 + $0x88] sm:$0xff]
        %v636 = vsel %vm619, 0, %v635
        %637 = vst [vmem:[#allocation2 + $0x88] sm:$0xff] %v636
        %v638 = vld [vmem:[#allocation2 + $0xa0] sm:$0xff]
        %v639 = vsel %vm619, 0, %v638
        %640 = vst [vmem:[#allocation2 + $0xa0] sm:$0xff] %v639
        %v641 = vld [vmem:[#allocation2 + $0xb8] sm:$0xff]
        %v642 = vsel %vm619, 0, %v641
        %643 = vst [vmem:[#allocation2 + $0xb8] sm:$0xff] %v642
        %v644 = vld [vmem:[#allocation2 + $0xd0] sm:$0xff]
        %v645 = vsel %vm619, 0, %v644
        %646 = vst [vmem:[#allocation2 + $0xd0] sm:$0xff] %v645
        %v647 = vld [vmem:[#allocation2 + $0xe8] sm:$0xff]
        %v648 = vsel %vm619, 0, %v647
        %649 = vst [vmem:[#allocation2 + $0xe8] sm:$0xff] %v648
        %v650 = vld [vmem:[%s474] sm:$0xf]
        %v651 = vld [vmem:[%s474 + $0x4] sm:$0xf]
        %vm652 = vsmask.f32 4368
        %vm653 = vmor %vm577, %vm652
        %v655 = vshrl.u32 %v650, 16
        %v657 = vrot.slane %v655, 7
        %v658 = vshll.u32 %v650, 16
        %v660 = vor.u32 %v657, %v658
        %v661 = vrot.slane %v657, 4
        %v663 = vshrl.u32 %v651, 16
        %v665 = vrot.slane %v663, 7
        %v666 = vshll.u32 %v651, 16
        %v668 = vor.u32 %v665, %v666
        %v669 = vsel %vm653, %v661, %v668
        %v670 = vrot.slane %v665, 4
        %v674 = vld [vmem:[#allocation2] sm:$0xf]
        %v675 = vsel %vm615, %v660, %v674
        %676 = vst [vmem:[#allocation2] sm:$0xf] %v675
        %677 = vst [vmem:[#allocation2 + $0x8] sm:$0xf] %v669
        %v678 = vld [vmem:[#allocation2 + $0x10] sm:$0x1]
        %v679 = vsel %vm578, %v670, %v678
        %680 = vst [vmem:[#allocation2 + $0x10] sm:$0x1] %v679
        %v681 = vld [vmem:[%s465] sm:$0xf]
        %v682 = vld [vmem:[%s465 + $0x4] sm:$0xf]
        %v683 = vld [vmem:[%s465 + $0x8] sm:$0xf]
        %v684 = vld [vmem:[%s465 + $0xc] sm:$0xf]
        %v685 = vld [vmem:[%s465 + $0x10] sm:$0xf]
        %v686 = vld [vmem:[%s465 + $0x14] sm:$0xf]
        %v687 = vld [vmem:[%s465 + $0x18] sm:$0xf]
        %v688 = vld [vmem:[%s465 + $0x1c] sm:$0xf]
        %v689 = vld [vmem:[%s465 + $0x20] sm:$0xf]
        %v690 = vld [vmem:[%s465 + $0x24] sm:$0xf]
        %v691 = vld [vmem:[%s465 + $0x28] sm:$0xf]
        %v692 = vld [vmem:[%s465 + $0x2c] sm:$0xf]
        %v693 = vld [vmem:[%s465 + $0x30] sm:$0xf]
        %v694 = vld [vmem:[%s465 + $0x34] sm:$0xf]
        %v695 = vld [vmem:[%s465 + $0x38] sm:$0xf]
        %v696 = vld [vmem:[%s465 + $0x3c] sm:$0xf]
        %v698 = vshrl.u32 %v681, 16
        %v700 = vrot.slane %v698, 7
        %v701 = vshll.u32 %v681, 16
        %v703 = vor.u32 %v700, %v701
        %v704 = vrot.slane %v700, 4
        %v706 = vshrl.u32 %v682, 16
        %v708 = vrot.slane %v706, 7
        %v709 = vshll.u32 %v682, 16
        %v711 = vor.u32 %v708, %v709
        %v712 = vsel %vm653, %v704, %v711
        %v713 = vrot.slane %v708, 4
        %v715 = vshrl.u32 %v683, 16
        %v717 = vrot.slane %v715, 7
        %v718 = vshll.u32 %v683, 16
        %v720 = vor.u32 %v717, %v718
        %v721 = vrot.slane %v717, 4
        %v723 = vshrl.u32 %v684, 16
        %v725 = vrot.slane %v723, 7
        %v726 = vshll.u32 %v684, 16
        %v728 = vor.u32 %v725, %v726
        %v729 = vsel %vm653, %v721, %v728
        %v730 = vrot.slane %v725, 4
        %v732 = vshrl.u32 %v685, 16
        %v734 = vrot.slane %v732, 7
        %v735 = vshll.u32 %v685, 16
        %v737 = vor.u32 %v734, %v735
        %v738 = vrot.slane %v734, 4
        %v740 = vshrl.u32 %v686, 16
        %v742 = vrot.slane %v740, 7
        %v743 = vshll.u32 %v686, 16
        %v745 = vor.u32 %v742, %v743
        %v746 = vsel %vm653, %v738, %v745
        %v747 = vrot.slane %v742, 4
        %v749 = vshrl.u32 %v687, 16
        %v751 = vrot.slane %v749, 7
        %v752 = vshll.u32 %v687, 16
        %v754 = vor.u32 %v751, %v752
        %v755 = vrot.slane %v751, 4
        %v757 = vshrl.u32 %v688, 16
        %v759 = vrot.slane %v757, 7
        %v760 = vshll.u32 %v688, 16
        %v762 = vor.u32 %v759, %v760
        %v763 = vsel %vm653, %v755, %v762
        %v764 = vrot.slane %v759, 4
        %v766 = vshrl.u32 %v689, 16
        %v768 = vrot.slane %v766, 7
        %v769 = vshll.u32 %v689, 16
        %v771 = vor.u32 %v768, %v769
        %v772 = vrot.slane %v768, 4
        %v774 = vshrl.u32 %v690, 16
        %v776 = vrot.slane %v774, 7
        %v777 = vshll.u32 %v690, 16
        %v779 = vor.u32 %v776, %v777
        %v780 = vsel %vm653, %v772, %v779
        %v781 = vrot.slane %v776, 4
        %v783 = vshrl.u32 %v691, 16
        %v785 = vrot.slane %v783, 7
        %v786 = vshll.u32 %v691, 16
        %v788 = vor.u32 %v785, %v786
        %v789 = vrot.slane %v785, 4
        %v791 = vshrl.u32 %v692, 16
        %v793 = vrot.slane %v791, 7
        %v794 = vshll.u32 %v692, 16
        %v796 = vor.u32 %v793, %v794
        %v797 = vsel %vm653, %v789, %v796
        %v798 = vrot.slane %v793, 4
        %v800 = vshrl.u32 %v693, 16
        %v802 = vrot.slane %v800, 7
        %v803 = vshll.u32 %v693, 16
        %v805 = vor.u32 %v802, %v803
        %v806 = vrot.slane %v802, 4
        %v808 = vshrl.u32 %v694, 16
        %v810 = vrot.slane %v808, 7
        %v811 = vshll.u32 %v694, 16
        %v813 = vor.u32 %v810, %v811
        %v814 = vsel %vm653, %v806, %v813
        %v815 = vrot.slane %v810, 4
        %v817 = vshrl.u32 %v695, 16
        %v819 = vrot.slane %v817, 7
        %v820 = vshll.u32 %v695, 16
        %v822 = vor.u32 %v819, %v820
        %v823 = vrot.slane %v819, 4
        %v825 = vshrl.u32 %v696, 16
        %v827 = vrot.slane %v825, 7
        %v828 = vshll.u32 %v696, 16
        %v830 = vor.u32 %v827, %v828
        %v831 = vsel %vm653, %v823, %v830
        %v832 = vrot.slane %v827, 4
        %s857 = scalar_lea.vmem [#allocation2], 24
        %v858 = vld [vmem:[%s857] sm:$0xf]
        %v859 = vsel %vm615, %v703, %v858
        %860 = vst [vmem:[%s857] sm:$0xf] %v859
        %861 = vst [vmem:[%s857 + $0x8] sm:$0xf] %v712
        %v862 = vld [vmem:[%s857 + $0x10] sm:$0x1]
        %v863 = vsel %vm578, %v713, %v862
        %864 = vst [vmem:[%s857 + $0x10] sm:$0x1] %v863
        %v865 = vld [vmem:[%s857 + $0x18] sm:$0xf]
        %v866 = vsel %vm615, %v720, %v865
        %867 = vst [vmem:[%s857 + $0x18] sm:$0xf] %v866
        %868 = vst [vmem:[%s857 + $0x20] sm:$0xf] %v729
        %v869 = vld [vmem:[%s857 + $0x28] sm:$0x1]
        %v870 = vsel %vm578, %v730, %v869
        %871 = vst [vmem:[%s857 + $0x28] sm:$0x1] %v870
        %v872 = vld [vmem:[%s857 + $0x30] sm:$0xf]
        %v873 = vsel %vm615, %v737, %v872
        %874 = vst [vmem:[%s857 + $0x30] sm:$0xf] %v873
        %875 = vst [vmem:[%s857 + $0x38] sm:$0xf] %v746
        %v876 = vld [vmem:[%s857 + $0x40] sm:$0x1]
        %v877 = vsel %vm578, %v747, %v876
        %878 = vst [vmem:[%s857 + $0x40] sm:$0x1] %v877
        %v879 = vld [vmem:[%s857 + $0x48] sm:$0xf]
        %v880 = vsel %vm615, %v754, %v879
        %881 = vst [vmem:[%s857 + $0x48] sm:$0xf] %v880
        %882 = vst [vmem:[%s857 + $0x50] sm:$0xf] %v763
        %v883 = vld [vmem:[%s857 + $0x58] sm:$0x1]
        %v884 = vsel %vm578, %v764, %v883
        %885 = vst [vmem:[%s857 + $0x58] sm:$0x1] %v884
        %v886 = vld [vmem:[%s857 + $0x60] sm:$0xf]
        %v887 = vsel %vm615, %v771, %v886
        %888 = vst [vmem:[%s857 + $0x60] sm:$0xf] %v887
        %889 = vst [vmem:[%s857 + $0x68] sm:$0xf] %v780
        %v890 = vld [vmem:[%s857 + $0x70] sm:$0x1]
        %v891 = vsel %vm578, %v781, %v890
        %892 = vst [vmem:[%s857 + $0x70] sm:$0x1] %v891
        %v893 = vld [vmem:[%s857 + $0x78] sm:$0xf]
        %v894 = vsel %vm615, %v788, %v893
        %895 = vst [vmem:[%s857 + $0x78] sm:$0xf] %v894
        %896 = vst [vmem:[%s857 + $0x80] sm:$0xf] %v797
        %v897 = vld [vmem:[%s857 + $0x88] sm:$0x1]
        %v898 = vsel %vm578, %v798, %v897
        %899 = vst [vmem:[%s857 + $0x88] sm:$0x1] %v898
        %v900 = vld [vmem:[%s857 + $0x90] sm:$0xf]
        %v901 = vsel %vm615, %v805, %v900
        %902 = vst [vmem:[%s857 + $0x90] sm:$0xf] %v901
        %903 = vst [vmem:[%s857 + $0x98] sm:$0xf] %v814
        %v904 = vld [vmem:[%s857 + $0xa0] sm:$0x1]
        %v905 = vsel %vm578, %v815, %v904
        %906 = vst [vmem:[%s857 + $0xa0] sm:$0x1] %v905
        %v907 = vld [vmem:[%s857 + $0xa8] sm:$0xf]
        %v908 = vsel %vm615, %v822, %v907
        %909 = vst [vmem:[%s857 + $0xa8] sm:$0xf] %v908
        %910 = vst [vmem:[%s857 + $0xb0] sm:$0xf] %v831
        %v911 = vld [vmem:[%s857 + $0xb8] sm:$0x1]
        %v912 = vsel %vm578, %v832, %v911
        %913 = vst [vmem:[%s857 + $0xb8] sm:$0x1] %v912
        %v914 = vld [vmem:[%s483] sm:$0xf]
        %v915 = vld [vmem:[%s483 + $0x4] sm:$0xf]
        %v917 = vshrl.u32 %v914, 16
        %v919 = vrot.slane %v917, 7
        %v920 = vshll.u32 %v914, 16
        %v922 = vor.u32 %v919, %v920
        %v923 = vrot.slane %v919, 4
        %v925 = vshrl.u32 %v915, 16
        %v927 = vrot.slane %v925, 7
        %v928 = vshll.u32 %v915, 16
        %v930 = vor.u32 %v927, %v928
        %v931 = vsel %vm653, %v923, %v930
        %v932 = vrot.slane %v927, 4
        %s936 = scalar_lea.vmem [#allocation2], 216
        %v937 = vld [vmem:[%s936] sm:$0xf]
        %v938 = vsel %vm615, %v922, %v937
        %939 = vst [vmem:[%s936] sm:$0xf] %v938
        %940 = vst [vmem:[%s936 + $0x8] sm:$0xf] %v931
        %v941 = vld [vmem:[%s936 + $0x10] sm:$0x1]
        %v942 = vsel %vm578, %v932, %v941
        %943 = vst [vmem:[%s936 + $0x10] sm:$0x1] %v942
        %v944 = vld [vmem:[%s501] sm:$0xf]
        %v945 = vld [vmem:[%s501 + $0x4] sm:$0xf]
        %v947 = vshrl.u32 %v944, 16
        %v949 = vrot.slane %v947, 7
        %v950 = vshll.u32 %v944, 16
        %v952 = vor.u32 %v949, %v950
        %v953 = vrot.slane %v949, 4
        %v955 = vshrl.u32 %v945, 16
        %v957 = vrot.slane %v955, 7
        %v958 = vshll.u32 %v945, 16
        %v960 = vor.u32 %v957, %v958
        %v961 = vsel %vm653, %v953, %v960
        %v962 = vrot.slane %v957, 4
        %v966 = vld [vmem:[#allocation2 + $0x4] sm:$0xf]
        %v967 = vsel %vm615, %v952, %v966
        %968 = vst [vmem:[#allocation2 + $0x4] sm:$0xf] %v967
        %969 = vst [vmem:[#allocation2 + $0xc] sm:$0xf] %v961
        %v970 = vld [vmem:[#allocation2 + $0x14] sm:$0x1]
        %v971 = vsel %vm578, %v962, %v970
        %972 = vst [vmem:[#allocation2 + $0x14] sm:$0x1] %v971
        %v973 = vld [vmem:[%s492] sm:$0xf]
        %v974 = vld [vmem:[%s492 + $0x4] sm:$0xf]
        %v975 = vld [vmem:[%s492 + $0x8] sm:$0xf]
        %v976 = vld [vmem:[%s492 + $0xc] sm:$0xf]
        %v977 = vld [vmem:[%s492 + $0x10] sm:$0xf]
        %v978 = vld [vmem:[%s492 + $0x14] sm:$0xf]
        %v979 = vld [vmem:[%s492 + $0x18] sm:$0xf]
        %v980 = vld [vmem:[%s492 + $0x1c] sm:$0xf]
        %v981 = vld [vmem:[%s492 + $0x20] sm:$0xf]
        %v982 = vld [vmem:[%s492 + $0x24] sm:$0xf]
        %v983 = vld [vmem:[%s492 + $0x28] sm:$0xf]
        %v984 = vld [vmem:[%s492 + $0x2c] sm:$0xf]
        %v985 = vld [vmem:[%s492 + $0x30] sm:$0xf]
        %v986 = vld [vmem:[%s492 + $0x34] sm:$0xf]
        %v987 = vld [vmem:[%s492 + $0x38] sm:$0xf]
        %v988 = vld [vmem:[%s492 + $0x3c] sm:$0xf]
        %v990 = vshrl.u32 %v973, 16
        %v992 = vrot.slane %v990, 7
        %v993 = vshll.u32 %v973, 16
        %v995 = vor.u32 %v992, %v993
        %v996 = vrot.slane %v992, 4
        %v998 = vshrl.u32 %v974, 16
        %v1000 = vrot.slane %v998, 7
        %v1001 = vshll.u32 %v974, 16
        %v1003 = vor.u32 %v1000, %v1001
        %v1004 = vsel %vm653, %v996, %v1003
        %v1005 = vrot.slane %v1000, 4
        %v1007 = vshrl.u32 %v975, 16
        %v1009 = vrot.slane %v1007, 7
        %v1010 = vshll.u32 %v975, 16
        %v1012 = vor.u32 %v1009, %v1010
        %v1013 = vrot.slane %v1009, 4
        %v1015 = vshrl.u32 %v976, 16
        %v1017 = vrot.slane %v1015, 7
        %v1018 = vshll.u32 %v976, 16
        %v1020 = vor.u32 %v1017, %v1018
        %v1021 = vsel %vm653, %v1013, %v1020
        %v1022 = vrot.slane %v1017, 4
        %v1024 = vshrl.u32 %v977, 16
        %v1026 = vrot.slane %v1024, 7
        %v1027 = vshll.u32 %v977, 16
        %v1029 = vor.u32 %v1026, %v1027
        %v1030 = vrot.slane %v1026, 4
        %v1032 = vshrl.u32 %v978, 16
        %v1034 = vrot.slane %v1032, 7
        %v1035 = vshll.u32 %v978, 16
        %v1037 = vor.u32 %v1034, %v1035
        %v1038 = vsel %vm653, %v1030, %v1037
        %v1039 = vrot.slane %v1034, 4
        %v1041 = vshrl.u32 %v979, 16
        %v1043 = vrot.slane %v1041, 7
        %v1044 = vshll.u32 %v979, 16
        %v1046 = vor.u32 %v1043, %v1044
        %v1047 = vrot.slane %v1043, 4
        %v1049 = vshrl.u32 %v980, 16
        %v1051 = vrot.slane %v1049, 7
        %v1052 = vshll.u32 %v980, 16
        %v1054 = vor.u32 %v1051, %v1052
        %v1055 = vsel %vm653, %v1047, %v1054
        %v1056 = vrot.slane %v1051, 4
        %v1058 = vshrl.u32 %v981, 16
        %v1060 = vrot.slane %v1058, 7
        %v1061 = vshll.u32 %v981, 16
        %v1063 = vor.u32 %v1060, %v1061
        %v1064 = vrot.slane %v1060, 4
        %v1066 = vshrl.u32 %v982, 16
        %v1068 = vrot.slane %v1066, 7
        %v1069 = vshll.u32 %v982, 16
        %v1071 = vor.u32 %v1068, %v1069
        %v1072 = vsel %vm653, %v1064, %v1071
        %v1073 = vrot.slane %v1068, 4
        %v1075 = vshrl.u32 %v983, 16
        %v1077 = vrot.slane %v1075, 7
        %v1078 = vshll.u32 %v983, 16
        %v1080 = vor.u32 %v1077, %v1078
        %v1081 = vrot.slane %v1077, 4
        %v1083 = vshrl.u32 %v984, 16
        %v1085 = vrot.slane %v1083, 7
        %v1086 = vshll.u32 %v984, 16
        %v1088 = vor.u32 %v1085, %v1086
        %v1089 = vsel %vm653, %v1081, %v1088
        %v1090 = vrot.slane %v1085, 4
        %v1092 = vshrl.u32 %v985, 16
        %v1094 = vrot.slane %v1092, 7
        %v1095 = vshll.u32 %v985, 16
        %v1097 = vor.u32 %v1094, %v1095
        %v1098 = vrot.slane %v1094, 4
        %v1100 = vshrl.u32 %v986, 16
        %v1102 = vrot.slane %v1100, 7
        %v1103 = vshll.u32 %v986, 16
        %v1105 = vor.u32 %v1102, %v1103
        %v1106 = vsel %vm653, %v1098, %v1105
        %v1107 = vrot.slane %v1102, 4
        %v1109 = vshrl.u32 %v987, 16
        %v1111 = vrot.slane %v1109, 7
        %v1112 = vshll.u32 %v987, 16
        %v1114 = vor.u32 %v1111, %v1112
        %v1115 = vrot.slane %v1111, 4
        %v1117 = vshrl.u32 %v988, 16
        %v1119 = vrot.slane %v1117, 7
        %v1120 = vshll.u32 %v988, 16
        %v1122 = vor.u32 %v1119, %v1120
        %v1123 = vsel %vm653, %v1115, %v1122
        %v1124 = vrot.slane %v1119, 4
        %v1149 = vld [vmem:[%s857 + $0x4] sm:$0xf]
        %v1150 = vsel %vm615, %v995, %v1149
        %1151 = vst [vmem:[%s857 + $0x4] sm:$0xf] %v1150
        %1152 = vst [vmem:[%s857 + $0xc] sm:$0xf] %v1004
        %v1153 = vld [vmem:[%s857 + $0x14] sm:$0x1]
        %v1154 = vsel %vm578, %v1005, %v1153
        %1155 = vst [vmem:[%s857 + $0x14] sm:$0x1] %v1154
        %v1156 = vld [vmem:[%s857 + $0x1c] sm:$0xf]
        %v1157 = vsel %vm615, %v1012, %v1156
        %1158 = vst [vmem:[%s857 + $0x1c] sm:$0xf] %v1157
        %1159 = vst [vmem:[%s857 + $0x24] sm:$0xf] %v1021
        %v1160 = vld [vmem:[%s857 + $0x2c] sm:$0x1]
        %v1161 = vsel %vm578, %v1022, %v1160
        %1162 = vst [vmem:[%s857 + $0x2c] sm:$0x1] %v1161
        %v1163 = vld [vmem:[%s857 + $0x34] sm:$0xf]
        %v1164 = vsel %vm615, %v1029, %v1163
        %1165 = vst [vmem:[%s857 + $0x34] sm:$0xf] %v1164
        %1166 = vst [vmem:[%s857 + $0x3c] sm:$0xf] %v1038
        %v1167 = vld [vmem:[%s857 + $0x44] sm:$0x1]
        %v1168 = vsel %vm578, %v1039, %v1167
        %1169 = vst [vmem:[%s857 + $0x44] sm:$0x1] %v1168
        %v1170 = vld [vmem:[%s857 + $0x4c] sm:$0xf]
        %v1171 = vsel %vm615, %v1046, %v1170
        %1172 = vst [vmem:[%s857 + $0x4c] sm:$0xf] %v1171
        %1173 = vst [vmem:[%s857 + $0x54] sm:$0xf] %v1055
        %v1174 = vld [vmem:[%s857 + $0x5c] sm:$0x1]
        %v1175 = vsel %vm578, %v1056, %v1174
        %1176 = vst [vmem:[%s857 + $0x5c] sm:$0x1] %v1175
        %v1177 = vld [vmem:[%s857 + $0x64] sm:$0xf]
        %v1178 = vsel %vm615, %v1063, %v1177
        %1179 = vst [vmem:[%s857 + $0x64] sm:$0xf] %v1178
        %1180 = vst [vmem:[%s857 + $0x6c] sm:$0xf] %v1072
        %v1181 = vld [vmem:[%s857 + $0x74] sm:$0x1]
        %v1182 = vsel %vm578, %v1073, %v1181
        %1183 = vst [vmem:[%s857 + $0x74] sm:$0x1] %v1182
        %v1184 = vld [vmem:[%s857 + $0x7c] sm:$0xf]
        %v1185 = vsel %vm615, %v1080, %v1184
        %1186 = vst [vmem:[%s857 + $0x7c] sm:$0xf] %v1185
        %1187 = vst [vmem:[%s857 + $0x84] sm:$0xf] %v1089
        %v1188 = vld [vmem:[%s857 + $0x8c] sm:$0x1]
        %v1189 = vsel %vm578, %v1090, %v1188
        %1190 = vst [vmem:[%s857 + $0x8c] sm:$0x1] %v1189
        %v1191 = vld [vmem:[%s857 + $0x94] sm:$0xf]
        %v1192 = vsel %vm615, %v1097, %v1191
        %1193 = vst [vmem:[%s857 + $0x94] sm:$0xf] %v1192
        %1194 = vst [vmem:[%s857 + $0x9c] sm:$0xf] %v1106
        %v1195 = vld [vmem:[%s857 + $0xa4] sm:$0x1]
        %v1196 = vsel %vm578, %v1107, %v1195
        %1197 = vst [vmem:[%s857 + $0xa4] sm:$0x1] %v1196
        %v1198 = vld [vmem:[%s857 + $0xac] sm:$0xf]
        %v1199 = vsel %vm615, %v1114, %v1198
        %1200 = vst [vmem:[%s857 + $0xac] sm:$0xf] %v1199
        %1201 = vst [vmem:[%s857 + $0xb4] sm:$0xf] %v1123
        %v1202 = vld [vmem:[%s857 + $0xbc] sm:$0x1]
        %v1203 = vsel %vm578, %v1124, %v1202
        %1204 = vst [vmem:[%s857 + $0xbc] sm:$0x1] %v1203
        %v1205 = vld [vmem:[%s510] sm:$0xf]
        %v1206 = vld [vmem:[%s510 + $0x4] sm:$0xf]
        %v1208 = vshrl.u32 %v1205, 16
        %v1210 = vrot.slane %v1208, 7
        %v1211 = vshll.u32 %v1205, 16
        %v1213 = vor.u32 %v1210, %v1211
        %v1214 = vrot.slane %v1210, 4
        %v1216 = vshrl.u32 %v1206, 16
        %v1218 = vrot.slane %v1216, 7
        %v1219 = vshll.u32 %v1206, 16
        %v1221 = vor.u32 %v1218, %v1219
        %v1222 = vsel %vm653, %v1214, %v1221
        %v1223 = vrot.slane %v1218, 4
        %v1227 = vld [vmem:[%s936 + $0x4] sm:$0xf]
        %v1228 = vsel %vm615, %v1213, %v1227
        %1229 = vst [vmem:[%s936 + $0x4] sm:$0xf] %v1228
        %1230 = vst [vmem:[%s936 + $0xc] sm:$0xf] %v1222
        %v1231 = vld [vmem:[%s936 + $0x14] sm:$0x1]
        %v1232 = vsel %vm578, %v1223, %v1231
        %1233 = vst [vmem:[%s936 + $0x14] sm:$0x1] %v1232
        %v1234 = vld [vmem:[#allocation2] sm:$0xff]
        %v1235 = vld [vmem:[#allocation2 + $0x8] sm:$0xff]
        %v1236 = vld [vmem:[#allocation2 + $0x10] sm:$0xff]
        %v1237 = vld [vmem:[#allocation2 + $0x18] sm:$0xff]
        %v1238 = vld [vmem:[#allocation2 + $0x20] sm:$0xff]
        %v1239 = vld [vmem:[#allocation2 + $0x28] sm:$0xff]
        %v1240 = vld [vmem:[#allocation2 + $0x30] sm:$0xff]
        %v1241 = vld [vmem:[#allocation2 + $0x38] sm:$0xff]
        %v1242 = vld [vmem:[#allocation2 + $0x40] sm:$0xff]
        %v1243 = vld [vmem:[#allocation2 + $0x48] sm:$0xff]
        %v1244 = vld [vmem:[#allocation2 + $0x50] sm:$0xff]
        %v1245 = vld [vmem:[#allocation2 + $0x58] sm:$0xff]
        %v1246 = vld [vmem:[#allocation2 + $0x60] sm:$0xff]
        %v1247 = vld [vmem:[#allocation2 + $0x68] sm:$0xff]
        %v1248 = vld [vmem:[#allocation2 + $0x70] sm:$0xff]
        %v1249 = vld [vmem:[#allocation2 + $0x78] sm:$0xff]
        %v1250 = vld [vmem:[#allocation2 + $0x80] sm:$0xff]
        %v1251 = vld [vmem:[#allocation2 + $0x88] sm:$0xff]
        %v1252 = vld [vmem:[#allocation2 + $0x90] sm:$0xff]
        %v1253 = vld [vmem:[#allocation2 + $0x98] sm:$0xff]
        %v1254 = vld [vmem:[#allocation2 + $0xa0] sm:$0xff]
        %v1255 = vld [vmem:[#allocation2 + $0xa8] sm:$0xff]
        %v1256 = vld [vmem:[#allocation2 + $0xb0] sm:$0xff]
        %v1257 = vld [vmem:[#allocation2 + $0xb8] sm:$0xff]
        %v1258 = vld [vmem:[#allocation2 + $0xc0] sm:$0xff]
        %v1259 = vld [vmem:[#allocation2 + $0xc8] sm:$0xff]
        %v1260 = vld [vmem:[#allocation2 + $0xd0] sm:$0xff]
        %v1261 = vld [vmem:[#allocation2 + $0xd8] sm:$0xff]
        %v1262 = vld [vmem:[#allocation2 + $0xe0] sm:$0xff]
        %v1263 = vld [vmem:[#allocation2 + $0xe8] sm:$0xff]
        %v1288 = vunpack.c.l.b16 %v1234
        %v1289 = vunpack.c.h.b16 %v1234
        %v1290 = vunpack.c.l.b16 %v1235
        %v1291 = vunpack.c.h.b16 %v1235
        %v1292 = vunpack.c.l.b16 %v1236
        %v1293 = vunpack.c.h.b16 %v1236
        %v1294 = vunpack.c.l.b16 %v1237
        %v1295 = vunpack.c.h.b16 %v1237
        %v1296 = vunpack.c.l.b16 %v1238
        %v1297 = vunpack.c.h.b16 %v1238
        %v1298 = vunpack.c.l.b16 %v1239
        %v1299 = vunpack.c.h.b16 %v1239
        %v1300 = vunpack.c.l.b16 %v1240
        %v1301 = vunpack.c.h.b16 %v1240
        %v1302 = vunpack.c.l.b16 %v1241
        %v1303 = vunpack.c.h.b16 %v1241
        %v1304 = vunpack.c.l.b16 %v1242
        %v1305 = vunpack.c.h.b16 %v1242
        %v1306 = vunpack.c.l.b16 %v1243
        %v1307 = vunpack.c.h.b16 %v1243
        %v1308 = vunpack.c.l.b16 %v1244
        %v1309 = vunpack.c.h.b16 %v1244
        %v1310 = vunpack.c.l.b16 %v1245
        %v1311 = vunpack.c.h.b16 %v1245
        %v1312 = vunpack.c.l.b16 %v1246
        %v1313 = vunpack.c.h.b16 %v1246
        %v1314 = vunpack.c.l.b16 %v1247
        %v1315 = vunpack.c.h.b16 %v1247
        %v1316 = vunpack.c.l.b16 %v1248
        %v1317 = vunpack.c.h.b16 %v1248
        %v1318 = vunpack.c.l.b16 %v1249
        %v1319 = vunpack.c.h.b16 %v1249
        %v1320 = vunpack.c.l.b16 %v1250
        %v1321 = vunpack.c.h.b16 %v1250
        %v1322 = vunpack.c.l.b16 %v1251
        %v1323 = vunpack.c.h.b16 %v1251
        %v1324 = vunpack.c.l.b16 %v1252
        %v1325 = vunpack.c.h.b16 %v1252
        %v1326 = vunpack.c.l.b16 %v1253
        %v1327 = vunpack.c.h.b16 %v1253
        %v1328 = vunpack.c.l.b16 %v1254
        %v1329 = vunpack.c.h.b16 %v1254
        %v1330 = vunpack.c.l.b16 %v1255
        %v1331 = vunpack.c.h.b16 %v1255
        %v1332 = vunpack.c.l.b16 %v1256
        %v1333 = vunpack.c.h.b16 %v1256
        %v1334 = vunpack.c.l.b16 %v1257
        %v1335 = vunpack.c.h.b16 %v1257
        %v1339 = vunpack.c.l.b16 %v1258
        %v1340 = vunpack.c.h.b16 %v1258
        %v1341 = vunpack.c.l.b16 %v1259
        %v1342 = vunpack.c.h.b16 %v1259
        %v1343 = vunpack.c.l.b16 %v1260
        %v1344 = vunpack.c.h.b16 %v1260
        %v1348 = vunpack.c.l.b16 %v1261
        %v1349 = vunpack.c.h.b16 %v1261
        %v1350 = vunpack.c.l.b16 %v1262
        %v1351 = vunpack.c.h.b16 %v1262
        %v1352 = vunpack.c.l.b16 %v1263
        %v1353 = vunpack.c.h.b16 %v1263
        %v1354 = vld [vmem:[#allocation14] sm:$0xff]
        %v1355 = vld [vmem:[#allocation14 + $0x8] sm:$0xf]
        %v1356 = vld [vmem:[#allocation14 + $0xc] sm:$0xff]
        %v1357 = vld [vmem:[#allocation14 + $0x14] sm:$0xf]
        %v1358 = vld [vmem:[#allocation14 + $0x18] sm:$0xff]
        %v1359 = vld [vmem:[#allocation14 + $0x20] sm:$0xf]
        %v1360 = vld [vmem:[#allocation14 + $0x24] sm:$0xff]
        %v1361 = vld [vmem:[#allocation14 + $0x2c] sm:$0xf]
        %v1362 = vld [vmem:[#allocation14 + $0x30] sm:$0xff]
        %v1363 = vld [vmem:[#allocation14 + $0x38] sm:$0xf]
        %v1364 = vld [vmem:[#allocation14 + $0x3c] sm:$0xff]
        %v1365 = vld [vmem:[#allocation14 + $0x44] sm:$0xf]
        %v1366 = vld [vmem:[#allocation14 + $0x48] sm:$0xff]
        %v1367 = vld [vmem:[#allocation14 + $0x50] sm:$0xf]
        %v1368 = vld [vmem:[#allocation14 + $0x54] sm:$0xff]
        %v1369 = vld [vmem:[#allocation14 + $0x5c] sm:$0xf]
        %v1370 = vld [vmem:[#allocation14 + $0x60] sm:$0xff]
        %v1371 = vld [vmem:[#allocation14 + $0x68] sm:$0xf]
        %v1372 = vld [vmem:[#allocation14 + $0x6c] sm:$0xff]
        %v1373 = vld [vmem:[#allocation14 + $0x74] sm:$0xf]
        %v1374 = vld [vmem:[#allocation14 + $0x78] sm:$0xff]
        %v1375 = vld [vmem:[#allocation14 + $0x80] sm:$0xf]
        %v1376 = vld [vmem:[#allocation14 + $0x84] sm:$0xff]
        %v1377 = vld [vmem:[#allocation14 + $0x8c] sm:$0xf]
        %v1378 = vld [vmem:[#allocation14 + $0x90] sm:$0xff]
        %v1379 = vld [vmem:[#allocation14 + $0x98] sm:$0xf]
        %v1380 = vld [vmem:[#allocation14 + $0x9c] sm:$0xff]
        %v1381 = vld [vmem:[#allocation14 + $0xa4] sm:$0xf]
        %v1382 = vld [vmem:[#allocation14 + $0xa8] sm:$0xff]
        %v1383 = vld [vmem:[#allocation14 + $0xb0] sm:$0xf]
        %v1384 = vld [vmem:[#allocation14 + $0xb4] sm:$0xff]
        %v1385 = vld [vmem:[#allocation14 + $0xbc] sm:$0xf]
        %v1386 = vld [vmem:[#allocation14 + $0xc0] sm:$0xff]
        %v1387 = vld [vmem:[#allocation14 + $0xc8] sm:$0xf]
        %v1388 = vld [vmem:[#allocation14 + $0xcc] sm:$0xff]
        %v1389 = vld [vmem:[#allocation14 + $0xd4] sm:$0xf]
        %v1390 = vld [vmem:[#allocation14 + $0xd8] sm:$0xff]
        %v1391 = vld [vmem:[#allocation14 + $0xe0] sm:$0xf]
        %v1392 = vld [vmem:[#allocation14 + $0xe4] sm:$0xff]
        %v1393 = vld [vmem:[#allocation14 + $0xec] sm:$0xf]
        %v1394 = vld [vmem:[#allocation14 + $0xf0] sm:$0xff]
        %v1395 = vld [vmem:[#allocation14 + $0xf8] sm:$0xf]
        %v1396 = vld [vmem:[#allocation14 + $0xfc] sm:$0xff]
        %v1397 = vld [vmem:[#allocation14 + $0x104] sm:$0xf]
        %v1398 = vld [vmem:[#allocation14 + $0x108] sm:$0xff]
        %v1399 = vld [vmem:[#allocation14 + $0x110] sm:$0xf]
        %v1400 = vld [vmem:[#allocation14 + $0x114] sm:$0xff]
        %v1401 = vld [vmem:[#allocation14 + $0x11c] sm:$0xf]
        %v1402 = vld [vmem:[#allocation14 + $0x120] sm:$0xff]
        %v1403 = vld [vmem:[#allocation14 + $0x128] sm:$0xf]
        %v1404 = vld [vmem:[#allocation14 + $0x12c] sm:$0xff]
        %v1405 = vld [vmem:[#allocation14 + $0x134] sm:$0xf]
        %v1406 = vld [vmem:[#allocation14 + $0x138] sm:$0xff]
        %v1407 = vld [vmem:[#allocation14 + $0x140] sm:$0xf]
        %v1408 = vld [vmem:[#allocation14 + $0x144] sm:$0xff]
        %v1409 = vld [vmem:[#allocation14 + $0x14c] sm:$0xf]
        %v1410 = vld [vmem:[#allocation14 + $0x150] sm:$0xff]
        %v1411 = vld [vmem:[#allocation14 + $0x158] sm:$0xf]
        %v1412 = vld [vmem:[#allocation14 + $0x15c] sm:$0xff]
        %v1413 = vld [vmem:[#allocation14 + $0x164] sm:$0xf]
        %v1414 = vld [vmem:[#allocation14 + $0x168] sm:$0xff]
        %v1415 = vld [vmem:[#allocation14 + $0x170] sm:$0xf]
        %v1416 = vld [vmem:[#allocation14 + $0x174] sm:$0xff]
        %v1417 = vld [vmem:[#allocation14 + $0x17c] sm:$0xf]
        %v1418 = vld [vmem:[#allocation14 + $0x180] sm:$0xff]
        %v1419 = vld [vmem:[#allocation14 + $0x188] sm:$0xf]
        %v1420 = vld [vmem:[#allocation14 + $0x18c] sm:$0xff]
        %v1421 = vld [vmem:[#allocation14 + $0x194] sm:$0xf]
        %v1422 = vld [vmem:[#allocation14 + $0x198] sm:$0xff]
        %v1423 = vld [vmem:[#allocation14 + $0x1a0] sm:$0xf]
        %v1424 = vld [vmem:[#allocation14 + $0x1a4] sm:$0xff]
        %v1425 = vld [vmem:[#allocation14 + $0x1ac] sm:$0xf]
        %v1426 = vld [vmem:[#allocation14 + $0x1b0] sm:$0xff]
        %v1427 = vld [vmem:[#allocation14 + $0x1b8] sm:$0xf]
        %v1428 = vld [vmem:[#allocation14 + $0x1bc] sm:$0xff]
        %v1429 = vld [vmem:[#allocation14 + $0x1c4] sm:$0xf]
        %v1430 = vld [vmem:[#allocation14 + $0x1c8] sm:$0xff]
        %v1431 = vld [vmem:[#allocation14 + $0x1d0] sm:$0xf]
        %v1432 = vld [vmem:[#allocation14 + $0x1d4] sm:$0xff]
        %v1433 = vld [vmem:[#allocation14 + $0x1dc] sm:$0xf]
        %v1434 = vld [vmem:[#allocation14 + $0x1e0] sm:$0xff]
        %v1435 = vld [vmem:[#allocation14 + $0x1e8] sm:$0xf]
        %v1436 = vld [vmem:[#allocation14 + $0x1ec] sm:$0xff]
        %v1437 = vld [vmem:[#allocation14 + $0x1f4] sm:$0xf]
        %v1438 = vld [vmem:[#allocation14 + $0x1f8] sm:$0xff]
        %v1439 = vld [vmem:[#allocation14 + $0x200] sm:$0xf]
        %v1440 = vld [vmem:[#allocation14 + $0x204] sm:$0xff]
        %v1441 = vld [vmem:[#allocation14 + $0x20c] sm:$0xf]
        %v1442 = vld [vmem:[#allocation14 + $0x210] sm:$0xff]
        %v1443 = vld [vmem:[#allocation14 + $0x218] sm:$0xf]
        %v1444 = vld [vmem:[#allocation14 + $0x21c] sm:$0xff]
        %v1445 = vld [vmem:[#allocation14 + $0x224] sm:$0xf]
        %v1446 = vld [vmem:[#allocation14 + $0x228] sm:$0xff]
        %v1447 = vld [vmem:[#allocation14 + $0x230] sm:$0xf]
        %v1448 = vld [vmem:[#allocation14 + $0x234] sm:$0xff]
        %v1449 = vld [vmem:[#allocation14 + $0x23c] sm:$0xf]
        %v1450 = vld [vmem:[#allocation14 + $0x240] sm:$0xff]
        %v1451 = vld [vmem:[#allocation14 + $0x248] sm:$0xf]
        %v1452 = vld [vmem:[#allocation14 + $0x24c] sm:$0xff]
        %v1453 = vld [vmem:[#allocation14 + $0x254] sm:$0xf]
        %v1454 = vld [vmem:[#allocation14 + $0x258] sm:$0xff]
        %v1455 = vld [vmem:[#allocation14 + $0x260] sm:$0xf]
        %v1456 = vld [vmem:[#allocation14 + $0x264] sm:$0xff]
        %v1457 = vld [vmem:[#allocation14 + $0x26c] sm:$0xf]
        %v1458 = vld [vmem:[#allocation14 + $0x270] sm:$0xff]
        %v1459 = vld [vmem:[#allocation14 + $0x278] sm:$0xf]
        %v1460 = vld [vmem:[#allocation14 + $0x27c] sm:$0xff]
        %v1461 = vld [vmem:[#allocation14 + $0x284] sm:$0xf]
        %v1462 = vld [vmem:[#allocation14 + $0x288] sm:$0xff]
        %v1463 = vld [vmem:[#allocation14 + $0x290] sm:$0xf]
        %v1464 = vld [vmem:[#allocation14 + $0x294] sm:$0xff]
        %v1465 = vld [vmem:[#allocation14 + $0x29c] sm:$0xf]
        %v1466 = vld [vmem:[#allocation14 + $0x2a0] sm:$0xff]
        %v1467 = vld [vmem:[#allocation14 + $0x2a8] sm:$0xf]
        %v1468 = vld [vmem:[#allocation14 + $0x2ac] sm:$0xff]
        %v1469 = vld [vmem:[#allocation14 + $0x2b4] sm:$0xf]
        %v1470 = vld [vmem:[#allocation14 + $0x2b8] sm:$0xff]
        %v1471 = vld [vmem:[#allocation14 + $0x2c0] sm:$0xf]
        %v1472 = vld [vmem:[#allocation14 + $0x2c4] sm:$0xff]
        %v1473 = vld [vmem:[#allocation14 + $0x2cc] sm:$0xf]
        %v1474 = vld [vmem:[#allocation14 + $0x2d0] sm:$0xff]
        %v1475 = vld [vmem:[#allocation14 + $0x2d8] sm:$0xf]
        %v1476 = vld [vmem:[#allocation14 + $0x2dc] sm:$0xff]
        %v1477 = vld [vmem:[#allocation14 + $0x2e4] sm:$0xf]
        %v1478 = vld [vmem:[#allocation14 + $0x2e8] sm:$0xff]
        %v1479 = vld [vmem:[#allocation14 + $0x2f0] sm:$0xf]
        %v1480 = vld [vmem:[#allocation14 + $0x2f4] sm:$0xff]
        %v1481 = vld [vmem:[#allocation14 + $0x2fc] sm:$0xf]
        %v1482 = vld [vmem:[#allocation14 + $0x300] sm:$0xff]
        %v1483 = vld [vmem:[#allocation14 + $0x308] sm:$0xf]
        %v1484 = vld [vmem:[#allocation14 + $0x30c] sm:$0xff]
        %v1485 = vld [vmem:[#allocation14 + $0x314] sm:$0xf]
        %v1486 = vld [vmem:[#allocation14 + $0x318] sm:$0xff]
        %v1487 = vld [vmem:[#allocation14 + $0x320] sm:$0xf]
        %v1488 = vld [vmem:[#allocation14 + $0x324] sm:$0xff]
        %v1489 = vld [vmem:[#allocation14 + $0x32c] sm:$0xf]
        %v1490 = vld [vmem:[#allocation14 + $0x330] sm:$0xff]
        %v1491 = vld [vmem:[#allocation14 + $0x338] sm:$0xf]
        %v1492 = vld [vmem:[#allocation14 + $0x33c] sm:$0xff]
        %v1493 = vld [vmem:[#allocation14 + $0x344] sm:$0xf]
        %v1494 = vld [vmem:[#allocation14 + $0x348] sm:$0xff]
        %v1495 = vld [vmem:[#allocation14 + $0x350] sm:$0xf]
        %v1496 = vld [vmem:[#allocation14 + $0x354] sm:$0xff]
        %v1497 = vld [vmem:[#allocation14 + $0x35c] sm:$0xf]
        %v1498 = vld [vmem:[#allocation14 + $0x360] sm:$0xff]
        %v1499 = vld [vmem:[#allocation14 + $0x368] sm:$0xf]
        %v1500 = vld [vmem:[#allocation14 + $0x36c] sm:$0xff]
        %v1501 = vld [vmem:[#allocation14 + $0x374] sm:$0xf]
        %v1502 = vld [vmem:[#allocation14 + $0x378] sm:$0xff]
        %v1503 = vld [vmem:[#allocation14 + $0x380] sm:$0xf]
        %v1504 = vld [vmem:[#allocation14 + $0x384] sm:$0xff]
        %v1505 = vld [vmem:[#allocation14 + $0x38c] sm:$0xf]
        %v1506 = vld [vmem:[#allocation14 + $0x390] sm:$0xff]
        %v1507 = vld [vmem:[#allocation14 + $0x398] sm:$0xf]
        %v1508 = vld [vmem:[#allocation14 + $0x39c] sm:$0xff]
        %v1509 = vld [vmem:[#allocation14 + $0x3a4] sm:$0xf]
        %v1510 = vld [vmem:[#allocation14 + $0x3a8] sm:$0xff]
        %v1511 = vld [vmem:[#allocation14 + $0x3b0] sm:$0xf]
        %v1512 = vld [vmem:[#allocation14 + $0x3b4] sm:$0xff]
        %v1513 = vld [vmem:[#allocation14 + $0x3bc] sm:$0xf]
        %v1514 = vld [vmem:[#allocation14 + $0x3c0] sm:$0xff]
        %v1515 = vld [vmem:[#allocation14 + $0x3c8] sm:$0xf]
        %v1516 = vld [vmem:[#allocation14 + $0x3cc] sm:$0xff]
        %v1517 = vld [vmem:[#allocation14 + $0x3d4] sm:$0xf]
        %v1518 = vld [vmem:[#allocation14 + $0x3d8] sm:$0xff]
        %v1519 = vld [vmem:[#allocation14 + $0x3e0] sm:$0xf]
        %v1520 = vld [vmem:[#allocation14 + $0x3e4] sm:$0xff]
        %v1521 = vld [vmem:[#allocation14 + $0x3ec] sm:$0xf]
        %v1522 = vld [vmem:[#allocation14 + $0x3f0] sm:$0xff]
        %v1523 = vld [vmem:[#allocation14 + $0x3f8] sm:$0xf]
        %v1524 = vld [vmem:[#allocation14 + $0x3fc] sm:$0xff]
        %v1525 = vld [vmem:[#allocation14 + $0x404] sm:$0xf]
        %v1526 = vld [vmem:[#allocation14 + $0x408] sm:$0xff]
        %v1527 = vld [vmem:[#allocation14 + $0x410] sm:$0xf]
        %v1528 = vld [vmem:[#allocation14 + $0x414] sm:$0xff]
        %v1529 = vld [vmem:[#allocation14 + $0x41c] sm:$0xf]
        %v1530 = vld [vmem:[#allocation14 + $0x420] sm:$0xff]
        %v1531 = vld [vmem:[#allocation14 + $0x428] sm:$0xf]
        %v1532 = vld [vmem:[#allocation14 + $0x42c] sm:$0xff]
        %v1533 = vld [vmem:[#allocation14 + $0x434] sm:$0xf]
        %v1534 = vld [vmem:[#allocation14 + $0x438] sm:$0xff]
        %v1535 = vld [vmem:[#allocation14 + $0x440] sm:$0xf]
        %v1536 = vld [vmem:[#allocation14 + $0x444] sm:$0xff]
        %v1537 = vld [vmem:[#allocation14 + $0x44c] sm:$0xf]
        %v1538 = vld [vmem:[#allocation14 + $0x450] sm:$0xff]
        %v1539 = vld [vmem:[#allocation14 + $0x458] sm:$0xf]
        %v1540 = vld [vmem:[#allocation14 + $0x45c] sm:$0xff]
        %v1541 = vld [vmem:[#allocation14 + $0x464] sm:$0xf]
        %v1542 = vld [vmem:[#allocation14 + $0x468] sm:$0xff]
        %v1543 = vld [vmem:[#allocation14 + $0x470] sm:$0xf]
        %v1544 = vld [vmem:[#allocation14 + $0x474] sm:$0xff]
        %v1545 = vld [vmem:[#allocation14 + $0x47c] sm:$0xf]
        %v1546 = vpack.c.b16 %v1290, %v1288
        %v1547 = vpack.c.b16 %v1291, %v1289
        %v1548 = vpack.c.b16 %v1296, %v1294
        %v1549 = vpack.c.b16 %v1297, %v1295
        %v1550 = vpack.c.b16 %v1302, %v1300
        %v1551 = vpack.c.b16 %v1303, %v1301
        %v1552 = vpack.c.b16 %v1294, %v1292
        %v1553 = vpack.c.b16 %v1295, %v1293
        %v1554 = vpack.c.b16 %v1300, %v1298
        %v1555 = vpack.c.b16 %v1301, %v1299
        %v1556 = vpack.c.b16 %v1306, %v1304
        %v1557 = vpack.c.b16 %v1307, %v1305
        %v1558 = vpack.c.b16 %v1298, %v1296
        %v1559 = vpack.c.b16 %v1299, %v1297
        %v1560 = vpack.c.b16 %v1304, %v1302
        %v1561 = vpack.c.b16 %v1305, %v1303
        %v1562 = vpack.c.b16 %v1310, %v1308
        %v1563 = vpack.c.b16 %v1311, %v1309
        %v1564 = vpack.c.b16 %v1308, %v1306
        %v1565 = vpack.c.b16 %v1309, %v1307
        %v1566 = vpack.c.b16 %v1314, %v1312
        %v1567 = vpack.c.b16 %v1315, %v1313
        %v1568 = vpack.c.b16 %v1312, %v1310
        %v1569 = vpack.c.b16 %v1313, %v1311
        %v1570 = vpack.c.b16 %v1318, %v1316
        %v1571 = vpack.c.b16 %v1319, %v1317
        %v1572 = vpack.c.b16 %v1316, %v1314
        %v1573 = vpack.c.b16 %v1317, %v1315
        %v1574 = vpack.c.b16 %v1322, %v1320
        %v1575 = vpack.c.b16 %v1323, %v1321
        %v1576 = vpack.c.b16 %v1320, %v1318
        %v1577 = vpack.c.b16 %v1321, %v1319
        %v1578 = vpack.c.b16 %v1326, %v1324
        %v1579 = vpack.c.b16 %v1327, %v1325
        %v1580 = vpack.c.b16 %v1324, %v1322
        %v1581 = vpack.c.b16 %v1325, %v1323
        %v1582 = vpack.c.b16 %v1330, %v1328
        %v1583 = vpack.c.b16 %v1331, %v1329
        %v1584 = vpack.c.b16 %v1328, %v1326
        %v1585 = vpack.c.b16 %v1329, %v1327
        %v1586 = vpack.c.b16 %v1334, %v1332
        %v1587 = vpack.c.b16 %v1335, %v1333
        %v1588 = vpack.c.b16 %v1332, %v1330
        %v1589 = vpack.c.b16 %v1333, %v1331
        %v1590 = vpack.c.b16 %v1341, %v1339
        %v1591 = vpack.c.b16 %v1342, %v1340
        %v1592 = vpack.c.b16 %v1339, %v1334
        %v1593 = vpack.c.b16 %v1340, %v1335
        %v1594 = vpack.c.b16 %v1348, %v1343
        %v1595 = vpack.c.b16 %v1349, %v1344
        %v1596 = vpack.c.b16 %v1343, %v1341
        %v1597 = vpack.c.b16 %v1344, %v1342
        %v1598 = vpack.c.b16 %v1352, %v1350
        %v1599 = vpack.c.b16 %v1353, %v1351
        %v1846 = vunpack.c.l.b16 %v1354
        %v1847 = vunpack.c.h.b16 %v1354
        %v1848 = vunpack.c.l.b16 %v1355
        %v1849 = vunpack.c.l.b16 %v1356
        %v1850 = vunpack.c.h.b16 %v1356
        %v1851 = vunpack.c.l.b16 %v1357
        %v1852 = vunpack.c.l.b16 %v1358
        %v1853 = vunpack.c.h.b16 %v1358
        %v1854 = vunpack.c.l.b16 %v1359
        %v1855 = vunpack.c.l.b16 %v1360
        %v1856 = vunpack.c.h.b16 %v1360
        %v1857 = vunpack.c.l.b16 %v1361
        %v1858 = vunpack.c.l.b16 %v1362
        %v1859 = vunpack.c.h.b16 %v1362
        %v1860 = vunpack.c.l.b16 %v1363
        %v1861 = vunpack.c.l.b16 %v1364
        %v1862 = vunpack.c.h.b16 %v1364
        %v1863 = vunpack.c.l.b16 %v1365
        %v1864 = vunpack.c.l.b16 %v1366
        %v1865 = vunpack.c.h.b16 %v1366
        %v1866 = vunpack.c.l.b16 %v1367
        %v1867 = vunpack.c.l.b16 %v1368
        %v1868 = vunpack.c.h.b16 %v1368
        %v1869 = vunpack.c.l.b16 %v1369
        %v1870 = vunpack.c.l.b16 %v1370
        %v1871 = vunpack.c.h.b16 %v1370
        %v1872 = vunpack.c.l.b16 %v1371
        %v1873 = vunpack.c.l.b16 %v1372
        %v1874 = vunpack.c.h.b16 %v1372
        %v1875 = vunpack.c.l.b16 %v1373
        %v1876 = vunpack.c.l.b16 %v1374
        %v1877 = vunpack.c.h.b16 %v1374
        %v1878 = vunpack.c.l.b16 %v1375
        %v1879 = vunpack.c.l.b16 %v1376
        %v1880 = vunpack.c.h.b16 %v1376
        %v1881 = vunpack.c.l.b16 %v1377
        %v1882 = vunpack.c.l.b16 %v1378
        %v1883 = vunpack.c.h.b16 %v1378
        %v1884 = vunpack.c.l.b16 %v1379
        %v1885 = vunpack.c.l.b16 %v1380
        %v1886 = vunpack.c.h.b16 %v1380
        %v1887 = vunpack.c.l.b16 %v1381
        %v1888 = vunpack.c.l.b16 %v1382
        %v1889 = vunpack.c.h.b16 %v1382
        %v1890 = vunpack.c.l.b16 %v1383
        %v1891 = vunpack.c.l.b16 %v1384
        %v1892 = vunpack.c.h.b16 %v1384
        %v1893 = vunpack.c.l.b16 %v1385
        %v1894 = vunpack.c.l.b16 %v1386
        %v1895 = vunpack.c.h.b16 %v1386
        %v1896 = vunpack.c.l.b16 %v1387
        %v1897 = vunpack.c.l.b16 %v1388
        %v1898 = vunpack.c.h.b16 %v1388
        %v1899 = vunpack.c.l.b16 %v1389
        %v1900 = vunpack.c.l.b16 %v1390
        %v1901 = vunpack.c.h.b16 %v1390
        %v1902 = vunpack.c.l.b16 %v1391
        %v1903 = vunpack.c.l.b16 %v1392
        %v1904 = vunpack.c.h.b16 %v1392
        %v1905 = vunpack.c.l.b16 %v1393
        %v1906 = vunpack.c.l.b16 %v1394
        %v1907 = vunpack.c.h.b16 %v1394
        %v1908 = vunpack.c.l.b16 %v1395
        %v1909 = vunpack.c.l.b16 %v1396
        %v1910 = vunpack.c.h.b16 %v1396
        %v1911 = vunpack.c.l.b16 %v1397
        %v1912 = vunpack.c.l.b16 %v1398
        %v1913 = vunpack.c.h.b16 %v1398
        %v1914 = vunpack.c.l.b16 %v1399
        %v1915 = vunpack.c.l.b16 %v1400
        %v1916 = vunpack.c.h.b16 %v1400
        %v1917 = vunpack.c.l.b16 %v1401
        %v1918 = vunpack.c.l.b16 %v1402
        %v1919 = vunpack.c.h.b16 %v1402
        %v1920 = vunpack.c.l.b16 %v1403
        %v1921 = vunpack.c.l.b16 %v1404
        %v1922 = vunpack.c.h.b16 %v1404
        %v1923 = vunpack.c.l.b16 %v1405
        %v1924 = vunpack.c.l.b16 %v1406
        %v1925 = vunpack.c.h.b16 %v1406
        %v1926 = vunpack.c.l.b16 %v1407
        %v1927 = vunpack.c.l.b16 %v1408
        %v1928 = vunpack.c.h.b16 %v1408
        %v1929 = vunpack.c.l.b16 %v1409
        %v1930 = vunpack.c.l.b16 %v1410
        %v1931 = vunpack.c.h.b16 %v1410
        %v1932 = vunpack.c.l.b16 %v1411
        %v1933 = vunpack.c.l.b16 %v1412
        %v1934 = vunpack.c.h.b16 %v1412
        %v1935 = vunpack.c.l.b16 %v1413
        %v1936 = vunpack.c.l.b16 %v1414
        %v1937 = vunpack.c.h.b16 %v1414
        %v1938 = vunpack.c.l.b16 %v1415
        %v1939 = vunpack.c.l.b16 %v1416
        %v1940 = vunpack.c.h.b16 %v1416
        %v1941 = vunpack.c.l.b16 %v1417
        %v1942 = vunpack.c.l.b16 %v1418
        %v1943 = vunpack.c.h.b16 %v1418
        %v1944 = vunpack.c.l.b16 %v1419
        %v1945 = vunpack.c.l.b16 %v1420
        %v1946 = vunpack.c.h.b16 %v1420
        %v1947 = vunpack.c.l.b16 %v1421
        %v1948 = vunpack.c.l.b16 %v1422
        %v1949 = vunpack.c.h.b16 %v1422
        %v1950 = vunpack.c.l.b16 %v1423
        %v1951 = vunpack.c.l.b16 %v1424
        %v1952 = vunpack.c.h.b16 %v1424
        %v1953 = vunpack.c.l.b16 %v1425
        %v1954 = vunpack.c.l.b16 %v1426
        %v1955 = vunpack.c.h.b16 %v1426
        %v1956 = vunpack.c.l.b16 %v1427
        %v1957 = vunpack.c.l.b16 %v1428
        %v1958 = vunpack.c.h.b16 %v1428
        %v1959 = vunpack.c.l.b16 %v1429
        %v1960 = vunpack.c.l.b16 %v1430
        %v1961 = vunpack.c.h.b16 %v1430
        %v1962 = vunpack.c.l.b16 %v1431
        %v1963 = vunpack.c.l.b16 %v1432
        %v1964 = vunpack.c.h.b16 %v1432
        %v1965 = vunpack.c.l.b16 %v1433
        %v1966 = vunpack.c.l.b16 %v1434
        %v1967 = vunpack.c.h.b16 %v1434
        %v1968 = vunpack.c.l.b16 %v1435
        %v1969 = vunpack.c.l.b16 %v1436
        %v1970 = vunpack.c.h.b16 %v1436
        %v1971 = vunpack.c.l.b16 %v1437
        %v1972 = vunpack.c.l.b16 %v1438
        %v1973 = vunpack.c.h.b16 %v1438
        %v1974 = vunpack.c.l.b16 %v1439
        %v1975 = vunpack.c.l.b16 %v1440
        %v1976 = vunpack.c.h.b16 %v1440
        %v1977 = vunpack.c.l.b16 %v1441
        %v1978 = vunpack.c.l.b16 %v1442
        %v1979 = vunpack.c.h.b16 %v1442
        %v1980 = vunpack.c.l.b16 %v1443
        %v1981 = vunpack.c.l.b16 %v1444
        %v1982 = vunpack.c.h.b16 %v1444
        %v1983 = vunpack.c.l.b16 %v1445
        %v1984 = vunpack.c.l.b16 %v1446
        %v1985 = vunpack.c.h.b16 %v1446
        %v1986 = vunpack.c.l.b16 %v1447
        %v1987 = vunpack.c.l.b16 %v1448
        %v1988 = vunpack.c.h.b16 %v1448
        %v1989 = vunpack.c.l.b16 %v1449
        %v1990 = vunpack.c.l.b16 %v1450
        %v1991 = vunpack.c.h.b16 %v1450
        %v1992 = vunpack.c.l.b16 %v1451
        %v1993 = vunpack.c.l.b16 %v1452
        %v1994 = vunpack.c.h.b16 %v1452
        %v1995 = vunpack.c.l.b16 %v1453
        %v1996 = vunpack.c.l.b16 %v1454
        %v1997 = vunpack.c.h.b16 %v1454
        %v1998 = vunpack.c.l.b16 %v1455
        %v1999 = vunpack.c.l.b16 %v1456
        %v2000 = vunpack.c.h.b16 %v1456
        %v2001 = vunpack.c.l.b16 %v1457
        %v2002 = vunpack.c.l.b16 %v1458
        %v2003 = vunpack.c.h.b16 %v1458
        %v2004 = vunpack.c.l.b16 %v1459
        %v2005 = vunpack.c.l.b16 %v1460
        %v2006 = vunpack.c.h.b16 %v1460
        %v2007 = vunpack.c.l.b16 %v1461
        %v2008 = vunpack.c.l.b16 %v1462
        %v2009 = vunpack.c.h.b16 %v1462
        %v2010 = vunpack.c.l.b16 %v1463
        %v2011 = vunpack.c.l.b16 %v1464
        %v2012 = vunpack.c.h.b16 %v1464
        %v2013 = vunpack.c.l.b16 %v1465
        %v2014 = vunpack.c.l.b16 %v1466
        %v2015 = vunpack.c.h.b16 %v1466
        %v2016 = vunpack.c.l.b16 %v1467
        %v2017 = vunpack.c.l.b16 %v1468
        %v2018 = vunpack.c.h.b16 %v1468
        %v2019 = vunpack.c.l.b16 %v1469
        %v2020 = vunpack.c.l.b16 %v1470
        %v2021 = vunpack.c.h.b16 %v1470
        %v2022 = vunpack.c.l.b16 %v1471
        %v2023 = vunpack.c.l.b16 %v1472
        %v2024 = vunpack.c.h.b16 %v1472
        %v2025 = vunpack.c.l.b16 %v1473
        %v2026 = vunpack.c.l.b16 %v1474
        %v2027 = vunpack.c.h.b16 %v1474
        %v2028 = vunpack.c.l.b16 %v1475
        %v2029 = vunpack.c.l.b16 %v1476
        %v2030 = vunpack.c.h.b16 %v1476
        %v2031 = vunpack.c.l.b16 %v1477
        %v2032 = vunpack.c.l.b16 %v1478
        %v2033 = vunpack.c.h.b16 %v1478
        %v2034 = vunpack.c.l.b16 %v1479
        %v2035 = vunpack.c.l.b16 %v1480
        %v2036 = vunpack.c.h.b16 %v1480
        %v2037 = vunpack.c.l.b16 %v1481
        %v2038 = vunpack.c.l.b16 %v1482
        %v2039 = vunpack.c.h.b16 %v1482
        %v2040 = vunpack.c.l.b16 %v1483
        %v2041 = vunpack.c.l.b16 %v1484
        %v2042 = vunpack.c.h.b16 %v1484
        %v2043 = vunpack.c.l.b16 %v1485
        %v2044 = vunpack.c.l.b16 %v1486
        %v2045 = vunpack.c.h.b16 %v1486
        %v2046 = vunpack.c.l.b16 %v1487
        %v2047 = vunpack.c.l.b16 %v1488
        %v2048 = vunpack.c.h.b16 %v1488
        %v2049 = vunpack.c.l.b16 %v1489
        %v2050 = vunpack.c.l.b16 %v1490
        %v2051 = vunpack.c.h.b16 %v1490
        %v2052 = vunpack.c.l.b16 %v1491
        %v2053 = vunpack.c.l.b16 %v1492
        %v2054 = vunpack.c.h.b16 %v1492
        %v2055 = vunpack.c.l.b16 %v1493
        %v2056 = vunpack.c.l.b16 %v1494
        %v2057 = vunpack.c.h.b16 %v1494
        %v2058 = vunpack.c.l.b16 %v1495
        %v2059 = vunpack.c.l.b16 %v1496
        %v2060 = vunpack.c.h.b16 %v1496
        %v2061 = vunpack.c.l.b16 %v1497
        %v2062 = vunpack.c.l.b16 %v1498
        %v2063 = vunpack.c.h.b16 %v1498
        %v2064 = vunpack.c.l.b16 %v1499
        %v2065 = vunpack.c.l.b16 %v1500
        %v2066 = vunpack.c.h.b16 %v1500
        %v2067 = vunpack.c.l.b16 %v1501
        %v2068 = vunpack.c.l.b16 %v1502
        %v2069 = vunpack.c.h.b16 %v1502
        %v2070 = vunpack.c.l.b16 %v1503
        %v2071 = vunpack.c.l.b16 %v1504
        %v2072 = vunpack.c.h.b16 %v1504
        %v2073 = vunpack.c.l.b16 %v1505
        %v2074 = vunpack.c.l.b16 %v1506
        %v2075 = vunpack.c.h.b16 %v1506
        %v2076 = vunpack.c.l.b16 %v1507
        %v2077 = vunpack.c.l.b16 %v1508
        %v2078 = vunpack.c.h.b16 %v1508
        %v2079 = vunpack.c.l.b16 %v1509
        %v2080 = vunpack.c.l.b16 %v1510
        %v2081 = vunpack.c.h.b16 %v1510
        %v2082 = vunpack.c.l.b16 %v1511
        %v2083 = vunpack.c.l.b16 %v1512
        %v2084 = vunpack.c.h.b16 %v1512
        %v2085 = vunpack.c.l.b16 %v1513
        %v2086 = vunpack.c.l.b16 %v1514
        %v2087 = vunpack.c.h.b16 %v1514
        %v2088 = vunpack.c.l.b16 %v1515
        %v2089 = vunpack.c.l.b16 %v1516
        %v2090 = vunpack.c.h.b16 %v1516
        %v2091 = vunpack.c.l.b16 %v1517
        %v2092 = vunpack.c.l.b16 %v1518
        %v2093 = vunpack.c.h.b16 %v1518
        %v2094 = vunpack.c.l.b16 %v1519
        %v2095 = vunpack.c.l.b16 %v1520
        %v2096 = vunpack.c.h.b16 %v1520
        %v2097 = vunpack.c.l.b16 %v1521
        %v2098 = vunpack.c.l.b16 %v1522
        %v2099 = vunpack.c.h.b16 %v1522
        %v2100 = vunpack.c.l.b16 %v1523
        %v2101 = vunpack.c.l.b16 %v1524
        %v2102 = vunpack.c.h.b16 %v1524
        %v2103 = vunpack.c.l.b16 %v1525
        %v2104 = vunpack.c.l.b16 %v1526
        %v2105 = vunpack.c.h.b16 %v1526
        %v2106 = vunpack.c.l.b16 %v1527
        %v2107 = vunpack.c.l.b16 %v1528
        %v2108 = vunpack.c.h.b16 %v1528
        %v2109 = vunpack.c.l.b16 %v1529
        %v2110 = vunpack.c.l.b16 %v1530
        %v2111 = vunpack.c.h.b16 %v1530
        %v2112 = vunpack.c.l.b16 %v1531
        %v2113 = vunpack.c.l.b16 %v1532
        %v2114 = vunpack.c.h.b16 %v1532
        %v2115 = vunpack.c.l.b16 %v1533
        %v2116 = vunpack.c.l.b16 %v1534
        %v2117 = vunpack.c.h.b16 %v1534
        %v2118 = vunpack.c.l.b16 %v1535
        %v2119 = vunpack.c.l.b16 %v1536
        %v2120 = vunpack.c.h.b16 %v1536
        %v2121 = vunpack.c.l.b16 %v1537
        %v2122 = vunpack.c.l.b16 %v1538
        %v2123 = vunpack.c.h.b16 %v1538
        %v2124 = vunpack.c.l.b16 %v1539
        %v2125 = vunpack.c.l.b16 %v1540
        %v2126 = vunpack.c.h.b16 %v1540
        %v2127 = vunpack.c.l.b16 %v1541
        %v2128 = vunpack.c.l.b16 %v1542
        %v2129 = vunpack.c.h.b16 %v1542
        %v2130 = vunpack.c.l.b16 %v1543
        %v2131 = vunpack.c.l.b16 %v1544
        %v2132 = vunpack.c.h.b16 %v1544
        %v2133 = vunpack.c.l.b16 %v1545
        %v2134 = vpack.c.b16 %v1849, %v1846
        %v2135 = vpack.c.b16 %v1850, %v1847
        %v2136 = vpack.c.b16 %v1851, %v1848
        %v2137 = vpack.c.b16 %v1855, %v1852
        %v2138 = vpack.c.b16 %v1856, %v1853
        %v2139 = vpack.c.b16 %v1857, %v1854
        %v2140 = vpack.c.b16 %v1861, %v1858
        %v2141 = vpack.c.b16 %v1862, %v1859
        %v2142 = vpack.c.b16 %v1863, %v1860
        %v2143 = vpack.c.b16 %v1867, %v1864
        %v2144 = vpack.c.b16 %v1868, %v1865
        %v2145 = vpack.c.b16 %v1869, %v1866
        %v2146 = vpack.c.b16 %v1873, %v1870
        %v2147 = vpack.c.b16 %v1874, %v1871
        %v2148 = vpack.c.b16 %v1875, %v1872
        %v2149 = vpack.c.b16 %v1879, %v1876
        %v2150 = vpack.c.b16 %v1880, %v1877
        %v2151 = vpack.c.b16 %v1881, %v1878
        %v2152 = vpack.c.b16 %v1885, %v1882
        %v2153 = vpack.c.b16 %v1886, %v1883
        %v2154 = vpack.c.b16 %v1887, %v1884
        %v2155 = vpack.c.b16 %v1891, %v1888
        %v2156 = vpack.c.b16 %v1892, %v1889
        %v2157 = vpack.c.b16 %v1893, %v1890
        %v2158 = vpack.c.b16 %v1897, %v1894
        %v2159 = vpack.c.b16 %v1898, %v1895
        %v2160 = vpack.c.b16 %v1899, %v1896
        %v2161 = vpack.c.b16 %v1903, %v1900
        %v2162 = vpack.c.b16 %v1904, %v1901
        %v2163 = vpack.c.b16 %v1905, %v1902
        %v2164 = vpack.c.b16 %v1909, %v1906
        %v2165 = vpack.c.b16 %v1910, %v1907
        %v2166 = vpack.c.b16 %v1911, %v1908
        %v2167 = vpack.c.b16 %v1915, %v1912
        %v2168 = vpack.c.b16 %v1916, %v1913
        %v2169 = vpack.c.b16 %v1917, %v1914
        %v2170 = vpack.c.b16 %v1921, %v1918
        %v2171 = vpack.c.b16 %v1922, %v1919
        %v2172 = vpack.c.b16 %v1923, %v1920
        %v2173 = vpack.c.b16 %v1927, %v1924
        %v2174 = vpack.c.b16 %v1928, %v1925
        %v2175 = vpack.c.b16 %v1929, %v1926
        %v2176 = vpack.c.b16 %v1933, %v1930
        %v2177 = vpack.c.b16 %v1934, %v1931
        %v2178 = vpack.c.b16 %v1935, %v1932
        %v2179 = vpack.c.b16 %v1939, %v1936
        %v2180 = vpack.c.b16 %v1940, %v1937
        %v2181 = vpack.c.b16 %v1941, %v1938
        %v2182 = vpack.c.b16 %v1945, %v1942
        %v2183 = vpack.c.b16 %v1946, %v1943
        %v2184 = vpack.c.b16 %v1947, %v1944
        %v2185 = vpack.c.b16 %v1951, %v1948
        %v2186 = vpack.c.b16 %v1952, %v1949
        %v2187 = vpack.c.b16 %v1953, %v1950
        %v2188 = vpack.c.b16 %v1957, %v1954
        %v2189 = vpack.c.b16 %v1958, %v1955
        %v2190 = vpack.c.b16 %v1959, %v1956
        %v2191 = vpack.c.b16 %v1963, %v1960
        %v2192 = vpack.c.b16 %v1964, %v1961
        %v2193 = vpack.c.b16 %v1965, %v1962
        %v2194 = vpack.c.b16 %v1969, %v1966
        %v2195 = vpack.c.b16 %v1970, %v1967
        %v2196 = vpack.c.b16 %v1971, %v1968
        %v2197 = vpack.c.b16 %v1975, %v1972
        %v2198 = vpack.c.b16 %v1976, %v1973
        %v2199 = vpack.c.b16 %v1977, %v1974
        %v2200 = vpack.c.b16 %v1981, %v1978
        %v2201 = vpack.c.b16 %v1982, %v1979
        %v2202 = vpack.c.b16 %v1983, %v1980
        %v2203 = vpack.c.b16 %v1987, %v1984
        %v2204 = vpack.c.b16 %v1988, %v1985
        %v2205 = vpack.c.b16 %v1989, %v1986
        %v2206 = vpack.c.b16 %v1993, %v1990
        %v2207 = vpack.c.b16 %v1994, %v1991
        %v2208 = vpack.c.b16 %v1995, %v1992
        %v2209 = vpack.c.b16 %v1999, %v1996
        %v2210 = vpack.c.b16 %v2000, %v1997
        %v2211 = vpack.c.b16 %v2001, %v1998
        %v2212 = vpack.c.b16 %v2005, %v2002
        %v2213 = vpack.c.b16 %v2006, %v2003
        %v2214 = vpack.c.b16 %v2007, %v2004
        %v2215 = vpack.c.b16 %v2011, %v2008
        %v2216 = vpack.c.b16 %v2012, %v2009
        %v2217 = vpack.c.b16 %v2013, %v2010
        %v2218 = vpack.c.b16 %v2017, %v2014
        %v2219 = vpack.c.b16 %v2018, %v2015
        %v2220 = vpack.c.b16 %v2019, %v2016
        %v2221 = vpack.c.b16 %v2023, %v2020
        %v2222 = vpack.c.b16 %v2024, %v2021
        %v2223 = vpack.c.b16 %v2025, %v2022
        %v2224 = vpack.c.b16 %v2029, %v2026
        %v2225 = vpack.c.b16 %v2030, %v2027
        %v2226 = vpack.c.b16 %v2031, %v2028
        %v2227 = vpack.c.b16 %v2035, %v2032
        %v2228 = vpack.c.b16 %v2036, %v2033
        %v2229 = vpack.c.b16 %v2037, %v2034
        %v2230 = vpack.c.b16 %v2041, %v2038
        %v2231 = vpack.c.b16 %v2042, %v2039
        %v2232 = vpack.c.b16 %v2043, %v2040
        %v2233 = vpack.c.b16 %v2047, %v2044
        %v2234 = vpack.c.b16 %v2048, %v2045
        %v2235 = vpack.c.b16 %v2049, %v2046
        %v2236 = vpack.c.b16 %v2053, %v2050
        %v2237 = vpack.c.b16 %v2054, %v2051
        %v2238 = vpack.c.b16 %v2055, %v2052
        %v2239 = vpack.c.b16 %v2059, %v2056
        %v2240 = vpack.c.b16 %v2060, %v2057
        %v2241 = vpack.c.b16 %v2061, %v2058
        %v2242 = vpack.c.b16 %v2065, %v2062
        %v2243 = vpack.c.b16 %v2066, %v2063
        %v2244 = vpack.c.b16 %v2067, %v2064
        %v2245 = vpack.c.b16 %v2071, %v2068
        %v2246 = vpack.c.b16 %v2072, %v2069
        %v2247 = vpack.c.b16 %v2073, %v2070
        %v2248 = vpack.c.b16 %v2077, %v2074
        %v2249 = vpack.c.b16 %v2078, %v2075
        %v2250 = vpack.c.b16 %v2079, %v2076
        %v2251 = vpack.c.b16 %v2083, %v2080
        %v2252 = vpack.c.b16 %v2084, %v2081
        %v2253 = vpack.c.b16 %v2085, %v2082
        %v2254 = vpack.c.b16 %v2089, %v2086
        %v2255 = vpack.c.b16 %v2090, %v2087
        %v2256 = vpack.c.b16 %v2091, %v2088
        %v2257 = vpack.c.b16 %v2095, %v2092
        %v2258 = vpack.c.b16 %v2096, %v2093
        %v2259 = vpack.c.b16 %v2097, %v2094
        %v2260 = vpack.c.b16 %v2101, %v2098
        %v2261 = vpack.c.b16 %v2102, %v2099
        %v2262 = vpack.c.b16 %v2103, %v2100
        %v2263 = vpack.c.b16 %v2107, %v2104
        %v2264 = vpack.c.b16 %v2108, %v2105
        %v2265 = vpack.c.b16 %v2109, %v2106
        %v2266 = vpack.c.b16 %v2113, %v2110
        %v2267 = vpack.c.b16 %v2114, %v2111
        %v2268 = vpack.c.b16 %v2115, %v2112
        %v2269 = vpack.c.b16 %v2119, %v2116
        %v2270 = vpack.c.b16 %v2120, %v2117
        %v2271 = vpack.c.b16 %v2121, %v2118
        %v2272 = vpack.c.b16 %v2125, %v2122
        %v2273 = vpack.c.b16 %v2126, %v2123
        %v2274 = vpack.c.b16 %v2127, %v2124
        %v2275 = vpack.c.b16 %v2131, %v2128
        %v2276 = vpack.c.b16 %v2132, %v2129
        %v2277 = vpack.c.b16 %v2133, %v2130
        %2422 = vmatprep.subr.bf16.mxu0 %v2156
        %2423 = vmatpush1.bf16.msra.mxu0 %v2155
        %2424 = vmatprep.subr.bf16.mxu0 %v2153
        %2425 = vmatpush1.bf16.msra.mxu0 %v2152
        %2426 = vmatprep.subr.bf16.mxu0 %v2150
        %2427 = vmatpush1.bf16.msra.mxu0 %v2149
        %2428 = vmatprep.subr.bf16.mxu0 %v2147
        %2429 = vmatpush1.bf16.msra.mxu0 %v2146
        %2430 = vmatprep.subr.bf16.mxu0 %v2144
        %2431 = vmatpush1.bf16.msra.mxu0 %v2143
        %2432 = vmatprep.subr.bf16.mxu0 %v2141
        %2433 = vmatpush1.bf16.msra.mxu0 %v2140
        %2434 = vmatprep.subr.bf16.mxu0 %v2138
        %2435 = vmatpush1.bf16.msra.mxu0 %v2137
        %2436 = vmatprep.subr.bf16.mxu0 %v2135
        %2437 = vmatpush1.bf16.msra.mxu0 %v2134
        %2438 = vmatprep.subr.bf16.mxu0 %v2180
        %2439 = vmatpush2.bf16.msra.mxu0 %v2179
        %2440 = vmatprep.subr.bf16.mxu0 %v2177
        %2441 = vmatpush2.bf16.msra.mxu0 %v2176
        %2442 = vmatprep.subr.bf16.mxu0 %v2174
        %2443 = vmatpush2.bf16.msra.mxu0 %v2173
        %2444 = vmatprep.subr.bf16.mxu0 %v2171
        %2445 = vmatpush2.bf16.msra.mxu0 %v2170
        %2446 = vmatprep.subr.bf16.mxu0 %v2168
        %2447 = vmatpush2.bf16.msra.mxu0 %v2167
        %2448 = vmatprep.subr.bf16.mxu0 %v2165
        %2449 = vmatpush2.bf16.msra.mxu0 %v2164
        %2450 = vmatprep.subr.bf16.mxu0 %v2162
        %2451 = vmatpush2.bf16.msra.mxu0 %v2161
        %2452 = vmatprep.subr.bf16.mxu0 %v2159
        %2453 = vmatpush2.bf16.msra.mxu0 %v2158
        %2454 = vmatprep.mubr.bf16.mxu0 %v1547
        %2455 = vmatmul.mubr.bf16.gmra.mxu0 %v1546
        %v2456 = vpop.f32.mrf.mxu0
        %v2457 = vadd.f32 0.0, %v2456
        %v2458 = vpop.f32.mrf.mxu0
        %v2459 = vadd.f32 0.0, %v2458
        %v2460 = vpop.f32.mrf.mxu0
        %v2461 = vadd.f32 0.0, %v2460
        %v2462 = vpop.f32.mrf.mxu0
        %v2463 = vadd.f32 0.0, %v2462
        %2464 = vmatprep.mubr.bf16.mxu0 %v1553
        %2465 = vmatmul.mubr.bf16.gmra.mxu0 %v1552
        %v2466 = vpop.f32.mrf.mxu0
        %v2467 = vpop.f32.mrf.mxu0
        %v2468 = vadd.f32 0.0, %v2467
        %v2469 = vpop.f32.mrf.mxu0
        %v2470 = vadd.f32 0.0, %v2469
        %v2471 = vpop.f32.mrf.mxu0
        %v2472 = vadd.f32 0.0, %v2471
        %2473 = vmatprep.mubr.bf16.mxu0 %v1559
        %2474 = vmatmul.mubr.bf16.gmra.mxu0 %v1558
        %v2475 = vpop.f32.mrf.mxu0
        %v2476 = vadd.f32 0.0, %v2475
        %v2477 = vpop.f32.mrf.mxu0
        %v2478 = vadd.f32 0.0, %v2477
        %v2479 = vpop.f32.mrf.mxu0
        %v2480 = vpop.f32.mrf.mxu0
        %v2481 = vadd.f32 0.0, %v2480
        %2482 = vmatprep.mubr.bf16.mxu0 %v1551
        %2483 = vmatmul.mubr.bf16.gmra.mxu0 %v1550
        %v2484 = vpop.f32.mrf.mxu0
        %v2485 = vadd.f32 0.0, %v2484
        %v2486 = vpop.f32.mrf.mxu0
        %v2487 = vadd.f32 0.0, %v2486
        %v2488 = vpop.f32.mrf.mxu0
        %v2489 = vadd.f32 0.0, %v2488
        %v2490 = vpop.f32.mrf.mxu0
        %v2491 = vadd.f32 0.0, %v2490
        %2492 = vmatprep.mubr.bf16.mxu0 %v1557
        %2493 = vmatmul.mubr.bf16.gmra.mxu0 %v1556
        %v2494 = vpop.f32.mrf.mxu0
        %v2495 = vpop.f32.mrf.mxu0
        %v2496 = vadd.f32 0.0, %v2495
        %v2497 = vpop.f32.mrf.mxu0
        %v2498 = vadd.f32 0.0, %v2497
        %v2499 = vpop.f32.mrf.mxu0
        %v2500 = vadd.f32 0.0, %v2499
        %2501 = vmatprep.mubr.bf16.mxu0 %v1563
        %2502 = vmatmul.mubr.bf16.gmra.mxu0 %v1562
        %v2503 = vpop.f32.mrf.mxu0
        %v2504 = vadd.f32 0.0, %v2503
        %v2505 = vpop.f32.mrf.mxu0
        %v2506 = vadd.f32 0.0, %v2505
        %v2507 = vpop.f32.mrf.mxu0
        %v2508 = vpop.f32.mrf.mxu0
        %v2509 = vadd.f32 0.0, %v2508
        %2510 = vmatprep.mubr.bf16.mxu0 %v1567
        %2511 = vmatmul.mubr.bf16.gmra.mxu0 %v1566
        %v2512 = vpop.f32.mrf.mxu0
        %v2513 = vadd.f32 0.0, %v2512
        %v2514 = vpop.f32.mrf.mxu0
        %v2515 = vadd.f32 0.0, %v2514
        %v2516 = vpop.f32.mrf.mxu0
        %v2517 = vadd.f32 0.0, %v2516
        %v2518 = vpop.f32.mrf.mxu0
        %v2519 = vadd.f32 0.0, %v2518
        %2520 = vmatprep.mubr.bf16.mxu0 %v1571
        %2521 = vmatmul.mubr.bf16.gmra.mxu0 %v1570
        %v2522 = vpop.f32.mrf.mxu0
        %v2523 = vpop.f32.mrf.mxu0
        %v2524 = vadd.f32 0.0, %v2523
        %v2525 = vpop.f32.mrf.mxu0
        %v2526 = vadd.f32 0.0, %v2525
        %v2527 = vpop.f32.mrf.mxu0
        %v2528 = vadd.f32 0.0, %v2527
        %2529 = vmatprep.mubr.bf16.mxu0 %v1575
        %2530 = vmatmul.mubr.bf16.gmra.mxu0 %v1574
        %v2531 = vpop.f32.mrf.mxu0
        %v2532 = vadd.f32 0.0, %v2531
        %v2533 = vpop.f32.mrf.mxu0
        %v2534 = vadd.f32 0.0, %v2533
        %v2535 = vpop.f32.mrf.mxu0
        %v2536 = vpop.f32.mrf.mxu0
        %v2537 = vadd.f32 0.0, %v2536
        %2538 = vmatprep.mubr.bf16.mxu0 %v1579
        %2539 = vmatmul.mubr.bf16.gmra.mxu0 %v1578
        %v2540 = vpop.f32.mrf.mxu0
        %v2541 = vadd.f32 0.0, %v2540
        %v2542 = vpop.f32.mrf.mxu0
        %v2543 = vadd.f32 0.0, %v2542
        %v2544 = vpop.f32.mrf.mxu0
        %v2545 = vadd.f32 0.0, %v2544
        %v2546 = vpop.f32.mrf.mxu0
        %v2547 = vadd.f32 0.0, %v2546
        %2548 = vmatprep.mubr.bf16.mxu0 %v1583
        %2549 = vmatmul.mubr.bf16.gmra.mxu0 %v1582
        %v2550 = vpop.f32.mrf.mxu0
        %v2551 = vpop.f32.mrf.mxu0
        %v2552 = vadd.f32 0.0, %v2551
        %v2553 = vpop.f32.mrf.mxu0
        %v2554 = vadd.f32 0.0, %v2553
        %v2555 = vpop.f32.mrf.mxu0
        %v2556 = vadd.f32 0.0, %v2555
        %2557 = vmatprep.mubr.bf16.mxu0 %v1587
        %2558 = vmatmul.mubr.bf16.gmra.mxu0 %v1586
        %v2559 = vpop.f32.mrf.mxu0
        %v2560 = vadd.f32 0.0, %v2559
        %v2561 = vpop.f32.mrf.mxu0
        %v2562 = vadd.f32 0.0, %v2561
        %v2563 = vpop.f32.mrf.mxu0
        %v2564 = vpop.f32.mrf.mxu0
        %v2565 = vadd.f32 0.0, %v2564
        %2566 = vdwg.mxu0
        %2567 = vmatprep.subr.bf16.mxu0 %v2204
        %2568 = vmatpush1.bf16.msra.mxu0 %v2203
        %2569 = vmatprep.subr.bf16.mxu0 %v2201
        %2570 = vmatpush1.bf16.msra.mxu0 %v2200
        %2571 = vmatprep.subr.bf16.mxu0 %v2198
        %2572 = vmatpush1.bf16.msra.mxu0 %v2197
        %2573 = vmatprep.subr.bf16.mxu0 %v2195
        %2574 = vmatpush1.bf16.msra.mxu0 %v2194
        %2575 = vmatprep.subr.bf16.mxu0 %v2192
        %2576 = vmatpush1.bf16.msra.mxu0 %v2191
        %2577 = vmatprep.subr.bf16.mxu0 %v2189
        %2578 = vmatpush1.bf16.msra.mxu0 %v2188
        %2579 = vmatprep.subr.bf16.mxu0 %v2186
        %2580 = vmatpush1.bf16.msra.mxu0 %v2185
        %2581 = vmatprep.subr.bf16.mxu0 %v2183
        %2582 = vmatpush1.bf16.msra.mxu0 %v2182
        %2583 = vmatprep.subr.bf16.mxu0 %v2228
        %2584 = vmatpush2.bf16.msra.mxu0 %v2227
        %2585 = vmatprep.subr.bf16.mxu0 %v2225
        %2586 = vmatpush2.bf16.msra.mxu0 %v2224
        %2587 = vmatprep.subr.bf16.mxu0 %v2222
        %2588 = vmatpush2.bf16.msra.mxu0 %v2221
        %2589 = vmatprep.subr.bf16.mxu0 %v2219
        %2590 = vmatpush2.bf16.msra.mxu0 %v2218
        %2591 = vmatprep.subr.bf16.mxu0 %v2216
        %2592 = vmatpush2.bf16.msra.mxu0 %v2215
        %2593 = vmatprep.subr.bf16.mxu0 %v2213
        %2594 = vmatpush2.bf16.msra.mxu0 %v2212
        %2595 = vmatprep.subr.bf16.mxu0 %v2210
        %2596 = vmatpush2.bf16.msra.mxu0 %v2209
        %2597 = vmatprep.subr.bf16.mxu0 %v2207
        %2598 = vmatpush2.bf16.msra.mxu0 %v2206
        %2599 = vmatprep.mubr.bf16.mxu0 %v1549
        %2600 = vmatmul.mubr.bf16.gmra.mxu0 %v1548
        %v2601 = vpop.f32.mrf.mxu0
        %v2602 = vadd.f32 %v2457, %v2601
        %v2603 = vpop.f32.mrf.mxu0
        %v2604 = vadd.f32 %v2459, %v2603
        %v2605 = vpop.f32.mrf.mxu0
        %v2606 = vadd.f32 %v2461, %v2605
        %v2607 = vpop.f32.mrf.mxu0
        %v2608 = vadd.f32 %v2463, %v2607
        %2609 = vmatprep.mubr.bf16.mxu0 %v1555
        %2610 = vmatmul.mubr.bf16.gmra.mxu0 %v1554
        %v2611 = vpop.f32.mrf.mxu0
        %v2612 = vpop.f32.mrf.mxu0
        %v2613 = vadd.f32 %v2468, %v2612
        %v2614 = vpop.f32.mrf.mxu0
        %v2615 = vadd.f32 %v2470, %v2614
        %v2616 = vpop.f32.mrf.mxu0
        %v2617 = vadd.f32 %v2472, %v2616
        %2618 = vmatprep.mubr.bf16.mxu0 %v1561
        %2619 = vmatmul.mubr.bf16.gmra.mxu0 %v1560
        %v2620 = vpop.f32.mrf.mxu0
        %v2621 = vadd.f32 %v2476, %v2620
        %v2622 = vpop.f32.mrf.mxu0
        %v2623 = vadd.f32 %v2478, %v2622
        %v2624 = vpop.f32.mrf.mxu0
        %v2625 = vpop.f32.mrf.mxu0
        %v2626 = vadd.f32 %v2481, %v2625
        %2627 = vmatprep.mubr.bf16.mxu0 %v1565
        %2628 = vmatmul.mubr.bf16.gmra.mxu0 %v1564
        %v2629 = vpop.f32.mrf.mxu0
        %v2630 = vadd.f32 %v2485, %v2629
        %v2631 = vpop.f32.mrf.mxu0
        %v2632 = vadd.f32 %v2487, %v2631
        %v2633 = vpop.f32.mrf.mxu0
        %v2634 = vadd.f32 %v2489, %v2633
        %v2635 = vpop.f32.mrf.mxu0
        %v2636 = vadd.f32 %v2491, %v2635
        %2637 = vmatprep.mubr.bf16.mxu0 %v1569
        %2638 = vmatmul.mubr.bf16.gmra.mxu0 %v1568
        %v2639 = vpop.f32.mrf.mxu0
        %v2640 = vpop.f32.mrf.mxu0
        %v2641 = vadd.f32 %v2496, %v2640
        %v2642 = vpop.f32.mrf.mxu0
        %v2643 = vadd.f32 %v2498, %v2642
        %v2644 = vpop.f32.mrf.mxu0
        %v2645 = vadd.f32 %v2500, %v2644
        %2646 = vmatprep.mubr.bf16.mxu0 %v1573
        %2647 = vmatmul.mubr.bf16.gmra.mxu0 %v1572
        %v2648 = vpop.f32.mrf.mxu0
        %v2649 = vadd.f32 %v2504, %v2648
        %v2650 = vpop.f32.mrf.mxu0
        %v2651 = vadd.f32 %v2506, %v2650
        %v2652 = vpop.f32.mrf.mxu0
        %v2653 = vpop.f32.mrf.mxu0
        %v2654 = vadd.f32 %v2509, %v2653
        %2655 = vmatprep.mubr.bf16.mxu0 %v1577
        %2656 = vmatmul.mubr.bf16.gmra.mxu0 %v1576
        %v2657 = vpop.f32.mrf.mxu0
        %v2658 = vadd.f32 %v2513, %v2657
        %v2659 = vpop.f32.mrf.mxu0
        %v2660 = vadd.f32 %v2515, %v2659
        %v2661 = vpop.f32.mrf.mxu0
        %v2662 = vadd.f32 %v2517, %v2661
        %v2663 = vpop.f32.mrf.mxu0
        %v2664 = vadd.f32 %v2519, %v2663
        %2665 = vmatprep.mubr.bf16.mxu0 %v1581
        %2666 = vmatmul.mubr.bf16.gmra.mxu0 %v1580
        %v2667 = vpop.f32.mrf.mxu0
        %v2668 = vpop.f32.mrf.mxu0
        %v2669 = vadd.f32 %v2524, %v2668
        %v2670 = vpop.f32.mrf.mxu0
        %v2671 = vadd.f32 %v2526, %v2670
        %v2672 = vpop.f32.mrf.mxu0
        %v2673 = vadd.f32 %v2528, %v2672
        %2674 = vmatprep.mubr.bf16.mxu0 %v1585
        %2675 = vmatmul.mubr.bf16.gmra.mxu0 %v1584
        %v2676 = vpop.f32.mrf.mxu0
        %v2677 = vadd.f32 %v2532, %v2676
        %v2678 = vpop.f32.mrf.mxu0
        %v2679 = vadd.f32 %v2534, %v2678
        %v2680 = vpop.f32.mrf.mxu0
        %v2681 = vpop.f32.mrf.mxu0
        %v2682 = vadd.f32 %v2537, %v2681
        %2683 = vmatprep.mubr.bf16.mxu0 %v1589
        %2684 = vmatmul.mubr.bf16.gmra.mxu0 %v1588
        %v2685 = vpop.f32.mrf.mxu0
        %v2686 = vadd.f32 %v2541, %v2685
        %v2687 = vpop.f32.mrf.mxu0
        %v2688 = vadd.f32 %v2543, %v2687
        %v2689 = vpop.f32.mrf.mxu0
        %v2690 = vadd.f32 %v2545, %v2689
        %v2691 = vpop.f32.mrf.mxu0
        %v2692 = vadd.f32 %v2547, %v2691
        %2693 = vmatprep.mubr.bf16.mxu0 %v1593
        %2694 = vmatmul.mubr.bf16.gmra.mxu0 %v1592
        %v2695 = vpop.f32.mrf.mxu0
        %v2696 = vpop.f32.mrf.mxu0
        %v2697 = vadd.f32 %v2552, %v2696
        %v2698 = vpop.f32.mrf.mxu0
        %v2699 = vadd.f32 %v2554, %v2698
        %v2700 = vpop.f32.mrf.mxu0
        %v2701 = vadd.f32 %v2556, %v2700
        %2702 = vmatprep.mubr.bf16.mxu0 %v1597
        %2703 = vmatmul.mubr.bf16.gmra.mxu0 %v1596
        %v2704 = vpop.f32.mrf.mxu0
        %v2705 = vadd.f32 %v2560, %v2704
        %v2706 = vpop.f32.mrf.mxu0
        %v2707 = vadd.f32 %v2562, %v2706
        %v2708 = vpop.f32.mrf.mxu0
        %v2709 = vpop.f32.mrf.mxu0
        %v2710 = vadd.f32 %v2565, %v2709
        %2711 = vdwg.mxu0
        %2712 = vmatprep.subr.bf16.mxu0 %v2252
        %2713 = vmatpush1.bf16.msra.mxu0 %v2251
        %2714 = vmatprep.subr.bf16.mxu0 %v2249
        %2715 = vmatpush1.bf16.msra.mxu0 %v2248
        %2716 = vmatprep.subr.bf16.mxu0 %v2246
        %2717 = vmatpush1.bf16.msra.mxu0 %v2245
        %2718 = vmatprep.subr.bf16.mxu0 %v2243
        %2719 = vmatpush1.bf16.msra.mxu0 %v2242
        %2720 = vmatprep.subr.bf16.mxu0 %v2240
        %2721 = vmatpush1.bf16.msra.mxu0 %v2239
        %2722 = vmatprep.subr.bf16.mxu0 %v2237
        %2723 = vmatpush1.bf16.msra.mxu0 %v2236
        %2724 = vmatprep.subr.bf16.mxu0 %v2234
        %2725 = vmatpush1.bf16.msra.mxu0 %v2233
        %2726 = vmatprep.subr.bf16.mxu0 %v2231
        %2727 = vmatpush1.bf16.msra.mxu0 %v2230
        %2728 = vmatprep.subr.bf16.mxu0 %v2276
        %2729 = vmatpush2.bf16.msra.mxu0 %v2275
        %2730 = vmatprep.subr.bf16.mxu0 %v2273
        %2731 = vmatpush2.bf16.msra.mxu0 %v2272
        %2732 = vmatprep.subr.bf16.mxu0 %v2270
        %2733 = vmatpush2.bf16.msra.mxu0 %v2269
        %2734 = vmatprep.subr.bf16.mxu0 %v2267
        %2735 = vmatpush2.bf16.msra.mxu0 %v2266
        %2736 = vmatprep.subr.bf16.mxu0 %v2264
        %2737 = vmatpush2.bf16.msra.mxu0 %v2263
        %2738 = vmatprep.subr.bf16.mxu0 %v2261
        %2739 = vmatpush2.bf16.msra.mxu0 %v2260
        %2740 = vmatprep.subr.bf16.mxu0 %v2258
        %2741 = vmatpush2.bf16.msra.mxu0 %v2257
        %2742 = vmatprep.subr.bf16.mxu0 %v2255
        %2743 = vmatpush2.bf16.msra.mxu0 %v2254
        %2744 = vmatprep.mubr.bf16.mxu0 %v1551
        %2745 = vmatmul.mubr.bf16.gmra.mxu0 %v1550
        %v2746 = vpop.f32.mrf.mxu0
        %v2747 = vadd.f32 %v2602, %v2746
        %v2748 = vpop.f32.mrf.mxu0
        %v2749 = vadd.f32 %v2604, %v2748
        %v2750 = vpop.f32.mrf.mxu0
        %v2751 = vadd.f32 %v2606, %v2750
        %v2752 = vpop.f32.mrf.mxu0
        %v2753 = vadd.f32 %v2608, %v2752
        %2754 = vmatprep.mubr.bf16.mxu0 %v1557
        %2755 = vmatmul.mubr.bf16.gmra.mxu0 %v1556
        %v2756 = vpop.f32.mrf.mxu0
        %v2757 = vpop.f32.mrf.mxu0
        %v2758 = vadd.f32 %v2613, %v2757
        %v2759 = vpop.f32.mrf.mxu0
        %v2760 = vadd.f32 %v2615, %v2759
        %v2761 = vpop.f32.mrf.mxu0
        %v2762 = vadd.f32 %v2617, %v2761
        %2763 = vmatprep.mubr.bf16.mxu0 %v1563
        %2764 = vmatmul.mubr.bf16.gmra.mxu0 %v1562
        %v2765 = vpop.f32.mrf.mxu0
        %v2766 = vadd.f32 %v2621, %v2765
        %v2767 = vpop.f32.mrf.mxu0
        %v2768 = vadd.f32 %v2623, %v2767
        %v2769 = vpop.f32.mrf.mxu0
        %v2770 = vpop.f32.mrf.mxu0
        %v2771 = vadd.f32 %v2626, %v2770
        %2772 = vmatprep.mubr.bf16.mxu0 %v1567
        %2773 = vmatmul.mubr.bf16.gmra.mxu0 %v1566
        %v2774 = vpop.f32.mrf.mxu0
        %v2775 = vadd.f32 %v2630, %v2774
        %v2776 = vpop.f32.mrf.mxu0
        %v2777 = vadd.f32 %v2632, %v2776
        %v2778 = vpop.f32.mrf.mxu0
        %v2779 = vadd.f32 %v2634, %v2778
        %v2780 = vpop.f32.mrf.mxu0
        %v2781 = vadd.f32 %v2636, %v2780
        %2782 = vmatprep.mubr.bf16.mxu0 %v1571
        %2783 = vmatmul.mubr.bf16.gmra.mxu0 %v1570
        %v2784 = vpop.f32.mrf.mxu0
        %v2785 = vpop.f32.mrf.mxu0
        %v2786 = vadd.f32 %v2641, %v2785
        %v2787 = vpop.f32.mrf.mxu0
        %v2788 = vadd.f32 %v2643, %v2787
        %v2789 = vpop.f32.mrf.mxu0
        %v2790 = vadd.f32 %v2645, %v2789
        %2791 = vmatprep.mubr.bf16.mxu0 %v1575
        %2792 = vmatmul.mubr.bf16.gmra.mxu0 %v1574
        %v2793 = vpop.f32.mrf.mxu0
        %v2794 = vadd.f32 %v2649, %v2793
        %v2795 = vpop.f32.mrf.mxu0
        %v2796 = vadd.f32 %v2651, %v2795
        %v2797 = vpop.f32.mrf.mxu0
        %v2798 = vpop.f32.mrf.mxu0
        %v2799 = vadd.f32 %v2654, %v2798
        %2800 = vmatprep.mubr.bf16.mxu0 %v1579
        %2801 = vmatmul.mubr.bf16.gmra.mxu0 %v1578
        %v2802 = vpop.f32.mrf.mxu0
        %v2803 = vadd.f32 %v2658, %v2802
        %v2804 = vpop.f32.mrf.mxu0
        %v2805 = vadd.f32 %v2660, %v2804
        %v2806 = vpop.f32.mrf.mxu0
        %v2807 = vadd.f32 %v2662, %v2806
        %v2808 = vpop.f32.mrf.mxu0
        %v2809 = vadd.f32 %v2664, %v2808
        %2810 = vmatprep.mubr.bf16.mxu0 %v1583
        %2811 = vmatmul.mubr.bf16.gmra.mxu0 %v1582
        %v2812 = vpop.f32.mrf.mxu0
        %v2813 = vpop.f32.mrf.mxu0
        %v2814 = vadd.f32 %v2669, %v2813
        %v2815 = vpop.f32.mrf.mxu0
        %v2816 = vadd.f32 %v2671, %v2815
        %v2817 = vpop.f32.mrf.mxu0
        %v2818 = vadd.f32 %v2673, %v2817
        %2819 = vmatprep.mubr.bf16.mxu0 %v1587
        %2820 = vmatmul.mubr.bf16.gmra.mxu0 %v1586
        %v2821 = vpop.f32.mrf.mxu0
        %v2822 = vadd.f32 %v2677, %v2821
        %v2823 = vpop.f32.mrf.mxu0
        %v2824 = vadd.f32 %v2679, %v2823
        %v2825 = vpop.f32.mrf.mxu0
        %v2826 = vpop.f32.mrf.mxu0
        %v2827 = vadd.f32 %v2682, %v2826
        %2828 = vmatprep.mubr.bf16.mxu0 %v1591
        %2829 = vmatmul.mubr.bf16.gmra.mxu0 %v1590
        %v2830 = vpop.f32.mrf.mxu0
        %v2831 = vadd.f32 %v2686, %v2830
        %v2832 = vpop.f32.mrf.mxu0
        %v2833 = vadd.f32 %v2688, %v2832
        %v2834 = vpop.f32.mrf.mxu0
        %v2835 = vadd.f32 %v2690, %v2834
        %v2836 = vpop.f32.mrf.mxu0
        %v2837 = vadd.f32 %v2692, %v2836
        %2838 = vmatprep.mubr.bf16.mxu0 %v1595
        %2839 = vmatmul.mubr.bf16.gmra.mxu0 %v1594
        %v2840 = vpop.f32.mrf.mxu0
        %v2841 = vpop.f32.mrf.mxu0
        %v2842 = vadd.f32 %v2697, %v2841
        %v2843 = vpop.f32.mrf.mxu0
        %v2844 = vadd.f32 %v2699, %v2843
        %v2845 = vpop.f32.mrf.mxu0
        %v2846 = vadd.f32 %v2701, %v2845
        %2847 = vmatprep.mubr.bf16.mxu0 %v1599
        %2848 = vmatmul.mubr.bf16.gmra.mxu0 %v1598
        %v2849 = vpop.f32.mrf.mxu0
        %v2850 = vadd.f32 %v2705, %v2849
        %v2851 = vpop.f32.mrf.mxu0
        %v2852 = vadd.f32 %v2707, %v2851
        %v2853 = vpop.f32.mrf.mxu0
        %v2854 = vpop.f32.mrf.mxu0
        %v2855 = vadd.f32 %v2710, %v2854
        %2856 = vdwg.mxu0
        %2857 = vmatprep.subr.bf16.mxu0 0
        %2858 = vmatpush1.bf16.msra.mxu0 %v2157
        %2859 = vmatprep.subr.bf16.mxu0 0
        %2860 = vmatpush1.bf16.msra.mxu0 %v2154
        %2861 = vmatprep.subr.bf16.mxu0 0
        %2862 = vmatpush1.bf16.msra.mxu0 %v2151
        %2863 = vmatprep.subr.bf16.mxu0 0
        %2864 = vmatpush1.bf16.msra.mxu0 %v2148
        %2865 = vmatprep.subr.bf16.mxu0 0
        %2866 = vmatpush1.bf16.msra.mxu0 %v2145
        %2867 = vmatprep.subr.bf16.mxu0 0
        %2868 = vmatpush1.bf16.msra.mxu0 %v2142
        %2869 = vmatprep.subr.bf16.mxu0 0
        %2870 = vmatpush1.bf16.msra.mxu0 %v2139
        %2871 = vmatprep.subr.bf16.mxu0 0
        %2872 = vmatpush1.bf16.msra.mxu0 %v2136
        %2873 = vmatprep.subr.bf16.mxu0 0
        %2874 = vmatpush2.bf16.msra.mxu0 %v2181
        %2875 = vmatprep.subr.bf16.mxu0 0
        %2876 = vmatpush2.bf16.msra.mxu0 %v2178
        %2877 = vmatprep.subr.bf16.mxu0 0
        %2878 = vmatpush2.bf16.msra.mxu0 %v2175
        %2879 = vmatprep.subr.bf16.mxu0 0
        %2880 = vmatpush2.bf16.msra.mxu0 %v2172
        %2881 = vmatprep.subr.bf16.mxu0 0
        %2882 = vmatpush2.bf16.msra.mxu0 %v2169
        %2883 = vmatprep.subr.bf16.mxu0 0
        %2884 = vmatpush2.bf16.msra.mxu0 %v2166
        %2885 = vmatprep.subr.bf16.mxu0 0
        %2886 = vmatpush2.bf16.msra.mxu0 %v2163
        %2887 = vmatprep.subr.bf16.mxu0 0
        %2888 = vmatpush2.bf16.msra.mxu0 %v2160
        %2889 = vmatprep.mubr.bf16.mxu0 %v1547
        %2890 = vmatmul.mubr.bf16.gmra.mxu0 %v1546
        %v2891 = vpop.f32.mrf.mxu0
        %v2892 = vadd.f32 0.0, %v2891
        %v2893 = vpop.f32.mrf.mxu0
        %v2894 = vpop.f32.mrf.mxu0
        %v2895 = vadd.f32 0.0, %v2894
        %v2896 = vpop.f32.mrf.mxu0
        %2897 = vmatprep.mubr.bf16.mxu0 %v1553
        %2898 = vmatmul.mubr.bf16.gmra.mxu0 %v1552
        %v2899 = vpop.f32.mrf.mxu0
        %v2900 = vadd.f32 0.0, %v2899
        %v2901 = vpop.f32.mrf.mxu0
        %v2902 = vpop.f32.mrf.mxu0
        %v2903 = vadd.f32 0.0, %v2902
        %v2904 = vpop.f32.mrf.mxu0
        %2905 = vmatprep.mubr.bf16.mxu0 %v1559
        %2906 = vmatmul.mubr.bf16.gmra.mxu0 %v1558
        %v2907 = vpop.f32.mrf.mxu0
        %v2908 = vadd.f32 0.0, %v2907
        %v2909 = vpop.f32.mrf.mxu0
        %v2910 = vpop.f32.mrf.mxu0
        %v2911 = vadd.f32 0.0, %v2910
        %v2912 = vpop.f32.mrf.mxu0
        %2913 = vmatprep.mubr.bf16.mxu0 %v1551
        %2914 = vmatmul.mubr.bf16.gmra.mxu0 %v1550
        %v2915 = vpop.f32.mrf.mxu0
        %v2916 = vadd.f32 0.0, %v2915
        %v2917 = vpop.f32.mrf.mxu0
        %v2918 = vpop.f32.mrf.mxu0
        %v2919 = vadd.f32 0.0, %v2918
        %v2920 = vpop.f32.mrf.mxu0
        %2921 = vmatprep.mubr.bf16.mxu0 %v1557
        %2922 = vmatmul.mubr.bf16.gmra.mxu0 %v1556
        %v2923 = vpop.f32.mrf.mxu0
        %v2924 = vadd.f32 0.0, %v2923
        %v2925 = vpop.f32.mrf.mxu0
        %v2926 = vpop.f32.mrf.mxu0
        %v2927 = vadd.f32 0.0, %v2926
        %v2928 = vpop.f32.mrf.mxu0
        %2929 = vmatprep.mubr.bf16.mxu0 %v1563
        %2930 = vmatmul.mubr.bf16.gmra.mxu0 %v1562
        %v2931 = vpop.f32.mrf.mxu0
        %v2932 = vadd.f32 0.0, %v2931
        %v2933 = vpop.f32.mrf.mxu0
        %v2934 = vpop.f32.mrf.mxu0
        %v2935 = vadd.f32 0.0, %v2934
        %v2936 = vpop.f32.mrf.mxu0
        %2937 = vmatprep.mubr.bf16.mxu0 %v1567
        %2938 = vmatmul.mubr.bf16.gmra.mxu0 %v1566
        %v2939 = vpop.f32.mrf.mxu0
        %v2940 = vadd.f32 0.0, %v2939
        %v2941 = vpop.f32.mrf.mxu0
        %v2942 = vpop.f32.mrf.mxu0
        %v2943 = vadd.f32 0.0, %v2942
        %v2944 = vpop.f32.mrf.mxu0
        %2945 = vmatprep.mubr.bf16.mxu0 %v1571
        %2946 = vmatmul.mubr.bf16.gmra.mxu0 %v1570
        %v2947 = vpop.f32.mrf.mxu0
        %v2948 = vadd.f32 0.0, %v2947
        %v2949 = vpop.f32.mrf.mxu0
        %v2950 = vpop.f32.mrf.mxu0
        %v2951 = vadd.f32 0.0, %v2950
        %v2952 = vpop.f32.mrf.mxu0
        %2953 = vmatprep.mubr.bf16.mxu0 %v1575
        %2954 = vmatmul.mubr.bf16.gmra.mxu0 %v1574
        %v2955 = vpop.f32.mrf.mxu0
        %v2956 = vadd.f32 0.0, %v2955
        %v2957 = vpop.f32.mrf.mxu0
        %v2958 = vpop.f32.mrf.mxu0
        %v2959 = vadd.f32 0.0, %v2958
        %v2960 = vpop.f32.mrf.mxu0
        %2961 = vmatprep.mubr.bf16.mxu0 %v1579
        %2962 = vmatmul.mubr.bf16.gmra.mxu0 %v1578
        %v2963 = vpop.f32.mrf.mxu0
        %v2964 = vadd.f32 0.0, %v2963
        %v2965 = vpop.f32.mrf.mxu0
        %v2966 = vpop.f32.mrf.mxu0
        %v2967 = vadd.f32 0.0, %v2966
        %v2968 = vpop.f32.mrf.mxu0
        %2969 = vmatprep.mubr.bf16.mxu0 %v1583
        %2970 = vmatmul.mubr.bf16.gmra.mxu0 %v1582
        %v2971 = vpop.f32.mrf.mxu0
        %v2972 = vadd.f32 0.0, %v2971
        %v2973 = vpop.f32.mrf.mxu0
        %v2974 = vpop.f32.mrf.mxu0
        %v2975 = vadd.f32 0.0, %v2974
        %v2976 = vpop.f32.mrf.mxu0
        %2977 = vmatprep.mubr.bf16.mxu0 %v1587
        %2978 = vmatmul.mubr.bf16.gmra.mxu0 %v1586
        %v2979 = vpop.f32.mrf.mxu0
        %v2980 = vadd.f32 0.0, %v2979
        %v2981 = vpop.f32.mrf.mxu0
        %v2982 = vpop.f32.mrf.mxu0
        %v2983 = vadd.f32 0.0, %v2982
        %v2984 = vpop.f32.mrf.mxu0
        %2985 = vdwg.mxu0
        %2986 = vmatprep.subr.bf16.mxu0 0
        %2987 = vmatpush1.bf16.msra.mxu0 %v2205
        %2988 = vmatprep.subr.bf16.mxu0 0
        %2989 = vmatpush1.bf16.msra.mxu0 %v2202
        %2990 = vmatprep.subr.bf16.mxu0 0
        %2991 = vmatpush1.bf16.msra.mxu0 %v2199
        %2992 = vmatprep.subr.bf16.mxu0 0
        %2993 = vmatpush1.bf16.msra.mxu0 %v2196
        %2994 = vmatprep.subr.bf16.mxu0 0
        %2995 = vmatpush1.bf16.msra.mxu0 %v2193
        %2996 = vmatprep.subr.bf16.mxu0 0
        %2997 = vmatpush1.bf16.msra.mxu0 %v2190
        %2998 = vmatprep.subr.bf16.mxu0 0
        %2999 = vmatpush1.bf16.msra.mxu0 %v2187
        %3000 = vmatprep.subr.bf16.mxu0 0
        %3001 = vmatpush1.bf16.msra.mxu0 %v2184
        %3002 = vmatprep.subr.bf16.mxu0 0
        %3003 = vmatpush2.bf16.msra.mxu0 %v2229
        %3004 = vmatprep.subr.bf16.mxu0 0
        %3005 = vmatpush2.bf16.msra.mxu0 %v2226
        %3006 = vmatprep.subr.bf16.mxu0 0
        %3007 = vmatpush2.bf16.msra.mxu0 %v2223
        %3008 = vmatprep.subr.bf16.mxu0 0
        %3009 = vmatpush2.bf16.msra.mxu0 %v2220
        %3010 = vmatprep.subr.bf16.mxu0 0
        %3011 = vmatpush2.bf16.msra.mxu0 %v2217
        %3012 = vmatprep.subr.bf16.mxu0 0
        %3013 = vmatpush2.bf16.msra.mxu0 %v2214
        %3014 = vmatprep.subr.bf16.mxu0 0
        %3015 = vmatpush2.bf16.msra.mxu0 %v2211
        %3016 = vmatprep.subr.bf16.mxu0 0
        %3017 = vmatpush2.bf16.msra.mxu0 %v2208
        %3018 = vmatprep.mubr.bf16.mxu0 %v1549
        %3019 = vmatmul.mubr.bf16.gmra.mxu0 %v1548
        %v3020 = vpop.f32.mrf.mxu0
        %v3021 = vadd.f32 %v2892, %v3020
        %v3022 = vpop.f32.mrf.mxu0
        %v3023 = vpop.f32.mrf.mxu0
        %v3024 = vadd.f32 %v2895, %v3023
        %v3025 = vpop.f32.mrf.mxu0
        %3026 = vmatprep.mubr.bf16.mxu0 %v1555
        %3027 = vmatmul.mubr.bf16.gmra.mxu0 %v1554
        %v3028 = vpop.f32.mrf.mxu0
        %v3029 = vadd.f32 %v2900, %v3028
        %v3030 = vpop.f32.mrf.mxu0
        %v3031 = vpop.f32.mrf.mxu0
        %v3032 = vadd.f32 %v2903, %v3031
        %v3033 = vpop.f32.mrf.mxu0
        %3034 = vmatprep.mubr.bf16.mxu0 %v1561
        %3035 = vmatmul.mubr.bf16.gmra.mxu0 %v1560
        %v3036 = vpop.f32.mrf.mxu0
        %v3037 = vadd.f32 %v2908, %v3036
        %v3038 = vpop.f32.mrf.mxu0
        %v3039 = vpop.f32.mrf.mxu0
        %v3040 = vadd.f32 %v2911, %v3039
        %v3041 = vpop.f32.mrf.mxu0
        %3042 = vmatprep.mubr.bf16.mxu0 %v1565
        %3043 = vmatmul.mubr.bf16.gmra.mxu0 %v1564
        %v3044 = vpop.f32.mrf.mxu0
        %v3045 = vadd.f32 %v2916, %v3044
        %v3046 = vpop.f32.mrf.mxu0
        %v3047 = vpop.f32.mrf.mxu0
        %v3048 = vadd.f32 %v2919, %v3047
        %v3049 = vpop.f32.mrf.mxu0
        %3050 = vmatprep.mubr.bf16.mxu0 %v1569
        %3051 = vmatmul.mubr.bf16.gmra.mxu0 %v1568
        %v3052 = vpop.f32.mrf.mxu0
        %v3053 = vadd.f32 %v2924, %v3052
        %v3054 = vpop.f32.mrf.mxu0
        %v3055 = vpop.f32.mrf.mxu0
        %v3056 = vadd.f32 %v2927, %v3055
        %v3057 = vpop.f32.mrf.mxu0
        %3058 = vmatprep.mubr.bf16.mxu0 %v1573
        %3059 = vmatmul.mubr.bf16.gmra.mxu0 %v1572
        %v3060 = vpop.f32.mrf.mxu0
        %v3061 = vadd.f32 %v2932, %v3060
        %v3062 = vpop.f32.mrf.mxu0
        %v3063 = vpop.f32.mrf.mxu0
        %v3064 = vadd.f32 %v2935, %v3063
        %v3065 = vpop.f32.mrf.mxu0
        %3066 = vmatprep.mubr.bf16.mxu0 %v1577
        %3067 = vmatmul.mubr.bf16.gmra.mxu0 %v1576
        %v3068 = vpop.f32.mrf.mxu0
        %v3069 = vadd.f32 %v2940, %v3068
        %v3070 = vpop.f32.mrf.mxu0
        %v3071 = vpop.f32.mrf.mxu0
        %v3072 = vadd.f32 %v2943, %v3071
        %v3073 = vpop.f32.mrf.mxu0
        %3074 = vmatprep.mubr.bf16.mxu0 %v1581
        %3075 = vmatmul.mubr.bf16.gmra.mxu0 %v1580
        %v3076 = vpop.f32.mrf.mxu0
        %v3077 = vadd.f32 %v2948, %v3076
        %v3078 = vpop.f32.mrf.mxu0
        %v3079 = vpop.f32.mrf.mxu0
        %v3080 = vadd.f32 %v2951, %v3079
        %v3081 = vpop.f32.mrf.mxu0
        %3082 = vmatprep.mubr.bf16.mxu0 %v1585
        %3083 = vmatmul.mubr.bf16.gmra.mxu0 %v1584
        %v3084 = vpop.f32.mrf.mxu0
        %v3085 = vadd.f32 %v2956, %v3084
        %v3086 = vpop.f32.mrf.mxu0
        %v3087 = vpop.f32.mrf.mxu0
        %v3088 = vadd.f32 %v2959, %v3087
        %v3089 = vpop.f32.mrf.mxu0
        %3090 = vmatprep.mubr.bf16.mxu0 %v1589
        %3091 = vmatmul.mubr.bf16.gmra.mxu0 %v1588
        %v3092 = vpop.f32.mrf.mxu0
        %v3093 = vadd.f32 %v2964, %v3092
        %v3094 = vpop.f32.mrf.mxu0
        %v3095 = vpop.f32.mrf.mxu0
        %v3096 = vadd.f32 %v2967, %v3095
        %v3097 = vpop.f32.mrf.mxu0
        %3098 = vmatprep.mubr.bf16.mxu0 %v1593
        %3099 = vmatmul.mubr.bf16.gmra.mxu0 %v1592
        %v3100 = vpop.f32.mrf.mxu0
        %v3101 = vadd.f32 %v2972, %v3100
        %v3102 = vpop.f32.mrf.mxu0
        %v3103 = vpop.f32.mrf.mxu0
        %v3104 = vadd.f32 %v2975, %v3103
        %v3105 = vpop.f32.mrf.mxu0
        %3106 = vmatprep.mubr.bf16.mxu0 %v1597
        %3107 = vmatmul.mubr.bf16.gmra.mxu0 %v1596
        %v3108 = vpop.f32.mrf.mxu0
        %v3109 = vadd.f32 %v2980, %v3108
        %v3110 = vpop.f32.mrf.mxu0
        %v3111 = vpop.f32.mrf.mxu0
        %v3112 = vadd.f32 %v2983, %v3111
        %v3113 = vpop.f32.mrf.mxu0
        %3114 = vdwg.mxu0
        %3115 = vmatprep.subr.bf16.mxu0 0
        %3116 = vmatpush1.bf16.msra.mxu0 %v2253
        %3117 = vmatprep.subr.bf16.mxu0 0
        %3118 = vmatpush1.bf16.msra.mxu0 %v2250
        %3119 = vmatprep.subr.bf16.mxu0 0
        %3120 = vmatpush1.bf16.msra.mxu0 %v2247
        %3121 = vmatprep.subr.bf16.mxu0 0
        %3122 = vmatpush1.bf16.msra.mxu0 %v2244
        %3123 = vmatprep.subr.bf16.mxu0 0
        %3124 = vmatpush1.bf16.msra.mxu0 %v2241
        %3125 = vmatprep.subr.bf16.mxu0 0
        %3126 = vmatpush1.bf16.msra.mxu0 %v2238
        %3127 = vmatprep.subr.bf16.mxu0 0
        %3128 = vmatpush1.bf16.msra.mxu0 %v2235
        %3129 = vmatprep.subr.bf16.mxu0 0
        %3130 = vmatpush1.bf16.msra.mxu0 %v2232
        %3131 = vmatprep.subr.bf16.mxu0 0
        %3132 = vmatpush2.bf16.msra.mxu0 %v2277
        %3133 = vmatprep.subr.bf16.mxu0 0
        %3134 = vmatpush2.bf16.msra.mxu0 %v2274
        %3135 = vmatprep.subr.bf16.mxu0 0
        %3136 = vmatpush2.bf16.msra.mxu0 %v2271
        %3137 = vmatprep.subr.bf16.mxu0 0
        %3138 = vmatpush2.bf16.msra.mxu0 %v2268
        %3139 = vmatprep.subr.bf16.mxu0 0
        %3140 = vmatpush2.bf16.msra.mxu0 %v2265
        %3141 = vmatprep.subr.bf16.mxu0 0
        %3142 = vmatpush2.bf16.msra.mxu0 %v2262
        %3143 = vmatprep.subr.bf16.mxu0 0
        %3144 = vmatpush2.bf16.msra.mxu0 %v2259
        %3145 = vmatprep.subr.bf16.mxu0 0
        %3146 = vmatpush2.bf16.msra.mxu0 %v2256
        %3147 = vmatprep.mubr.bf16.mxu0 %v1551
        %3148 = vmatmul.mubr.bf16.gmra.mxu0 %v1550
        %v3149 = vpop.f32.mrf.mxu0
        %v3150 = vadd.f32 %v3021, %v3149
        %v3151 = vpop.f32.mrf.mxu0
        %v3152 = vpop.f32.mrf.mxu0
        %v3153 = vadd.f32 %v3024, %v3152
        %v3154 = vpop.f32.mrf.mxu0
        %3155 = vmatprep.mubr.bf16.mxu0 %v1557
        %3156 = vmatmul.mubr.bf16.gmra.mxu0 %v1556
        %v3157 = vpop.f32.mrf.mxu0
        %v3158 = vadd.f32 %v3029, %v3157
        %v3159 = vpop.f32.mrf.mxu0
        %v3160 = vpop.f32.mrf.mxu0
        %v3161 = vadd.f32 %v3032, %v3160
        %v3162 = vpop.f32.mrf.mxu0
        %3163 = vmatprep.mubr.bf16.mxu0 %v1563
        %3164 = vmatmul.mubr.bf16.gmra.mxu0 %v1562
        %v3165 = vpop.f32.mrf.mxu0
        %v3166 = vadd.f32 %v3037, %v3165
        %v3167 = vpop.f32.mrf.mxu0
        %v3168 = vpop.f32.mrf.mxu0
        %v3169 = vadd.f32 %v3040, %v3168
        %v3170 = vpop.f32.mrf.mxu0
        %3171 = vmatprep.mubr.bf16.mxu0 %v1567
        %3172 = vmatmul.mubr.bf16.gmra.mxu0 %v1566
        %v3173 = vpop.f32.mrf.mxu0
        %v3174 = vadd.f32 %v3045, %v3173
        %v3175 = vpop.f32.mrf.mxu0
        %v3176 = vpop.f32.mrf.mxu0
        %v3177 = vadd.f32 %v3048, %v3176
        %v3178 = vpop.f32.mrf.mxu0
        %3179 = vmatprep.mubr.bf16.mxu0 %v1571
        %3180 = vmatmul.mubr.bf16.gmra.mxu0 %v1570
        %v3181 = vpop.f32.mrf.mxu0
        %v3182 = vadd.f32 %v3053, %v3181
        %v3183 = vpop.f32.mrf.mxu0
        %v3184 = vpop.f32.mrf.mxu0
        %v3185 = vadd.f32 %v3056, %v3184
        %v3186 = vpop.f32.mrf.mxu0
        %3187 = vmatprep.mubr.bf16.mxu0 %v1575
        %3188 = vmatmul.mubr.bf16.gmra.mxu0 %v1574
        %v3189 = vpop.f32.mrf.mxu0
        %v3190 = vadd.f32 %v3061, %v3189
        %v3191 = vpop.f32.mrf.mxu0
        %v3192 = vpop.f32.mrf.mxu0
        %v3193 = vadd.f32 %v3064, %v3192
        %v3194 = vpop.f32.mrf.mxu0
        %3195 = vmatprep.mubr.bf16.mxu0 %v1579
        %3196 = vmatmul.mubr.bf16.gmra.mxu0 %v1578
        %v3197 = vpop.f32.mrf.mxu0
        %v3198 = vadd.f32 %v3069, %v3197
        %v3199 = vpop.f32.mrf.mxu0
        %v3200 = vpop.f32.mrf.mxu0
        %v3201 = vadd.f32 %v3072, %v3200
        %v3202 = vpop.f32.mrf.mxu0
        %3203 = vmatprep.mubr.bf16.mxu0 %v1583
        %3204 = vmatmul.mubr.bf16.gmra.mxu0 %v1582
        %v3205 = vpop.f32.mrf.mxu0
        %v3206 = vadd.f32 %v3077, %v3205
        %v3207 = vpop.f32.mrf.mxu0
        %v3208 = vpop.f32.mrf.mxu0
        %v3209 = vadd.f32 %v3080, %v3208
        %v3210 = vpop.f32.mrf.mxu0
        %3211 = vmatprep.mubr.bf16.mxu0 %v1587
        %3212 = vmatmul.mubr.bf16.gmra.mxu0 %v1586
        %v3213 = vpop.f32.mrf.mxu0
        %v3214 = vadd.f32 %v3085, %v3213
        %v3215 = vpop.f32.mrf.mxu0
        %v3216 = vpop.f32.mrf.mxu0
        %v3217 = vadd.f32 %v3088, %v3216
        %v3218 = vpop.f32.mrf.mxu0
        %3219 = vmatprep.mubr.bf16.mxu0 %v1591
        %3220 = vmatmul.mubr.bf16.gmra.mxu0 %v1590
        %v3221 = vpop.f32.mrf.mxu0
        %v3222 = vadd.f32 %v3093, %v3221
        %v3223 = vpop.f32.mrf.mxu0
        %v3224 = vpop.f32.mrf.mxu0
        %v3225 = vadd.f32 %v3096, %v3224
        %v3226 = vpop.f32.mrf.mxu0
        %3227 = vmatprep.mubr.bf16.mxu0 %v1595
        %3228 = vmatmul.mubr.bf16.gmra.mxu0 %v1594
        %v3229 = vpop.f32.mrf.mxu0
        %v3230 = vadd.f32 %v3101, %v3229
        %v3231 = vpop.f32.mrf.mxu0
        %v3232 = vpop.f32.mrf.mxu0
        %v3233 = vadd.f32 %v3104, %v3232
        %v3234 = vpop.f32.mrf.mxu0
        %3235 = vmatprep.mubr.bf16.mxu0 %v1599
        %3236 = vmatmul.mubr.bf16.gmra.mxu0 %v1598
        %v3237 = vpop.f32.mrf.mxu0
        %v3238 = vadd.f32 %v3109, %v3237
        %v3239 = vpop.f32.mrf.mxu0
        %v3240 = vpop.f32.mrf.mxu0
        %v3241 = vadd.f32 %v3112, %v3240
        %v3242 = vpop.f32.mrf.mxu0
        %3243 = vdwg.mxu0
        %vm3268 = vcmask 1046528
        %v3269 = vrot.slane %v2749, 1
        %v3270 = vrot.slane %v2753, 1
        %v3271 = vsel %vm3268, %v3269, %v3270
        %v3272 = vrot.slane %v2758, 1
        %v3273 = vsel %vm3268, %v3270, %v3272
        %v3274 = vrot.slane %v2762, 1
        %v3275 = vrot.slane %v2768, 1
        %v3276 = vsel %vm3268, %v3274, %v3275
        %v3277 = vrot.slane %v2771, 1
        %v3278 = vsel %vm3268, %v3275, %v3277
        %v3279 = vrot.slane %v2777, 1
        %v3280 = vrot.slane %v2781, 1
        %v3281 = vsel %vm3268, %v3279, %v3280
        %v3282 = vrot.slane %v2786, 1
        %v3283 = vsel %vm3268, %v3280, %v3282
        %v3284 = vrot.slane %v2790, 1
        %v3285 = vrot.slane %v2796, 1
        %v3286 = vsel %vm3268, %v3284, %v3285
        %v3287 = vrot.slane %v2799, 1
        %v3288 = vsel %vm3268, %v3285, %v3287
        %v3289 = vrot.slane %v2805, 1
        %v3290 = vrot.slane %v2809, 1
        %v3291 = vsel %vm3268, %v3289, %v3290
        %v3292 = vrot.slane %v2814, 1
        %v3293 = vsel %vm3268, %v3290, %v3292
        %v3294 = vrot.slane %v2818, 1
        %v3295 = vrot.slane %v2824, 1
        %v3296 = vsel %vm3268, %v3294, %v3295
        %v3297 = vrot.slane %v2827, 1
        %v3298 = vsel %vm3268, %v3295, %v3297
        %v3299 = vrot.slane %v2833, 1
        %v3300 = vrot.slane %v2837, 1
        %v3301 = vsel %vm3268, %v3299, %v3300
        %v3302 = vrot.slane %v2842, 1
        %v3303 = vsel %vm3268, %v3300, %v3302
        %v3304 = vrot.slane %v2846, 1
        %v3305 = vrot.slane %v2852, 1
        %v3306 = vsel %vm3268, %v3304, %v3305
        %v3307 = vrot.slane %v2855, 1
        %v3308 = vsel %vm3268, %v3305, %v3307
        %v3325 = vadd.f32 %v2747, %v3271
        %v3326 = vadd.f32 %v2751, %v3273
        %v3327 = vadd.f32 %v2760, %v3276
        %v3328 = vadd.f32 %v2766, %v3278
        %v3329 = vadd.f32 %v2775, %v3281
        %v3330 = vadd.f32 %v2779, %v3283
        %v3331 = vadd.f32 %v2788, %v3286
        %v3332 = vadd.f32 %v2794, %v3288
        %v3333 = vadd.f32 %v2803, %v3291
        %v3334 = vadd.f32 %v2807, %v3293
        %v3335 = vadd.f32 %v2816, %v3296
        %v3336 = vadd.f32 %v2822, %v3298
        %v3337 = vadd.f32 %v2831, %v3301
        %v3338 = vadd.f32 %v2835, %v3303
        %v3339 = vadd.f32 %v2844, %v3306
        %v3340 = vadd.f32 %v2850, %v3308
        %vm3365 = vcmask 1045504
        %v3366 = vrot.slane %v3150, 2
        %v3367 = vrot.slane %v3153, 2
        %v3368 = vsel %vm3365, %v3366, %v3367
        %v3369 = vrot.slane %v3158, 2
        %v3370 = vsel %vm3365, %v3367, %v3369
        %v3371 = vrot.slane %v3161, 2
        %v3372 = vrot.slane %v3166, 2
        %v3373 = vsel %vm3365, %v3371, %v3372
        %v3374 = vrot.slane %v3169, 2
        %v3375 = vsel %vm3365, %v3372, %v3374
        %v3376 = vrot.slane %v3174, 2
        %v3377 = vrot.slane %v3177, 2
        %v3378 = vsel %vm3365, %v3376, %v3377
        %v3379 = vrot.slane %v3182, 2
        %v3380 = vsel %vm3365, %v3377, %v3379
        %v3381 = vrot.slane %v3185, 2
        %v3382 = vrot.slane %v3190, 2
        %v3383 = vsel %vm3365, %v3381, %v3382
        %v3384 = vrot.slane %v3193, 2
        %v3385 = vsel %vm3365, %v3382, %v3384
        %v3386 = vrot.slane %v3198, 2
        %v3387 = vrot.slane %v3201, 2
        %v3388 = vsel %vm3365, %v3386, %v3387
        %v3389 = vrot.slane %v3206, 2
        %v3390 = vsel %vm3365, %v3387, %v3389
        %v3391 = vrot.slane %v3209, 2
        %v3392 = vrot.slane %v3214, 2
        %v3393 = vsel %vm3365, %v3391, %v3392
        %v3394 = vrot.slane %v3217, 2
        %v3395 = vsel %vm3365, %v3392, %v3394
        %v3396 = vrot.slane %v3222, 2
        %v3397 = vrot.slane %v3225, 2
        %v3398 = vsel %vm3365, %v3396, %v3397
        %v3399 = vrot.slane %v3230, 2
        %v3400 = vsel %vm3365, %v3397, %v3399
        %v3401 = vrot.slane %v3233, 2
        %v3402 = vrot.slane %v3238, 2
        %v3403 = vsel %vm3365, %v3401, %v3402
        %v3404 = vrot.slane %v3241, 2
        %v3405 = vsel %vm3365, %v3402, %v3404
        %v3422 = vadd.f32 %v3325, %v3368
        %v3423 = vadd.f32 %v3326, %v3370
        %v3424 = vadd.f32 %v3327, %v3373
        %v3425 = vadd.f32 %v3328, %v3375
        %v3426 = vadd.f32 %v3329, %v3378
        %v3427 = vadd.f32 %v3330, %v3380
        %v3428 = vadd.f32 %v3331, %v3383
        %v3429 = vadd.f32 %v3332, %v3385
        %v3430 = vadd.f32 %v3333, %v3388
        %v3431 = vadd.f32 %v3334, %v3390
        %v3432 = vadd.f32 %v3335, %v3393
        %v3433 = vadd.f32 %v3336, %v3395
        %v3434 = vadd.f32 %v3337, %v3398
        %v3435 = vadd.f32 %v3338, %v3400
        %v3436 = vadd.f32 %v3339, %v3403
        %v3437 = vadd.f32 %v3340, %v3405
        %v3438 = vld [vmem:[%s7] sm:$0x1]
        %v3440 = vlaneseq
        %v3441 = vshrl.u32 %v3440, 7
        %v3442 = vsub.s32 0, %v3441
        %v3443 = vrot.slane %v3438, %v3442
        %v3445 = vadd.f32 %v3422, %v3443
        %v3446 = vadd.f32 %v3423, %v3443
        %v3447 = vadd.f32 %v3424, %v3443
        %v3448 = vadd.f32 %v3425, %v3443
        %v3449 = vadd.f32 %v3426, %v3443
        %v3450 = vadd.f32 %v3427, %v3443
        %v3451 = vadd.f32 %v3428, %v3443
        %v3452 = vadd.f32 %v3429, %v3443
        %v3453 = vadd.f32 %v3430, %v3443
        %v3454 = vadd.f32 %v3431, %v3443
        %v3455 = vadd.f32 %v3432, %v3443
        %v3456 = vadd.f32 %v3433, %v3443
        %v3457 = vadd.f32 %v3434, %v3443
        %v3458 = vadd.f32 %v3435, %v3443
        %v3459 = vadd.f32 %v3436, %v3443
        %v3460 = vadd.f32 %v3437, %v3443
        %v3461 = vmax.f32 %v3445, 0.0
        %v3462 = vmax.f32 %v3446, 0.0
        %v3463 = vmax.f32 %v3447, 0.0
        %v3464 = vmax.f32 %v3448, 0.0
        %v3465 = vmax.f32 %v3449, 0.0
        %v3466 = vmax.f32 %v3450, 0.0
        %v3467 = vmax.f32 %v3451, 0.0
        %v3468 = vmax.f32 %v3452, 0.0
        %v3469 = vmax.f32 %v3453, 0.0
        %v3470 = vmax.f32 %v3454, 0.0
        %v3471 = vmax.f32 %v3455, 0.0
        %v3472 = vmax.f32 %v3456, 0.0
        %v3473 = vmax.f32 %v3457, 0.0
        %v3474 = vmax.f32 %v3458, 0.0
        %v3475 = vmax.f32 %v3459, 0.0
        %v3476 = vmax.f32 %v3460, 0.0
        %v3477 = vpack.c.bf16 %v3462, %v3461
        %v3478 = vpack.c.bf16 %v3464, %v3463
        %v3479 = vpack.c.bf16 %v3466, %v3465
        %v3480 = vpack.c.bf16 %v3468, %v3467
        %v3481 = vpack.c.bf16 %v3470, %v3469
        %v3482 = vpack.c.bf16 %v3472, %v3471
        %v3483 = vpack.c.bf16 %v3474, %v3473
        %v3484 = vpack.c.bf16 %v3476, %v3475
        %v3493 = vunpack.c.l.b16 %v3477
        %v3494 = vunpack.c.h.b16 %v3477
        %v3495 = vunpack.c.l.b16 %v3478
        %v3496 = vunpack.c.h.b16 %v3478
        %v3497 = vunpack.c.l.b16 %v3479
        %v3498 = vunpack.c.h.b16 %v3479
        %v3499 = vunpack.c.l.b16 %v3480
        %v3500 = vunpack.c.h.b16 %v3480
        %v3501 = vunpack.c.l.b16 %v3481
        %v3502 = vunpack.c.h.b16 %v3481
        %v3503 = vunpack.c.l.b16 %v3482
        %v3504 = vunpack.c.h.b16 %v3482
        %v3505 = vunpack.c.l.b16 %v3483
        %v3506 = vunpack.c.h.b16 %v3483
        %v3507 = vunpack.c.l.b16 %v3484
        %v3508 = vunpack.c.h.b16 %v3484
        %v3509 = vpack.c.b16 %v3493, %v3493
        %v3510 = vpack.c.b16 %v3494, %v3494
        %v3511 = vpack.c.b16 %v3495, %v3495
        %v3512 = vpack.c.b16 %v3496, %v3496
        %v3513 = vpack.c.b16 %v3497, %v3497
        %v3514 = vpack.c.b16 %v3498, %v3498
        %v3515 = vpack.c.b16 %v3499, %v3499
        %v3516 = vpack.c.b16 %v3500, %v3500
        %v3517 = vpack.c.b16 %v3501, %v3501
        %v3518 = vpack.c.b16 %v3502, %v3502
        %v3519 = vpack.c.b16 %v3503, %v3503
        %v3520 = vpack.c.b16 %v3504, %v3504
        %v3521 = vpack.c.b16 %v3505, %v3505
        %v3522 = vpack.c.b16 %v3506, %v3506
        %v3523 = vpack.c.b16 %v3507, %v3507
        %v3524 = vpack.c.b16 %v3508, %v3508
        %3541 = vst [vmem:[%s571] sm:$0xf] %v3509
        %3542 = vst [vmem:[%s571 + $0x4] sm:$0xf] %v3510
        %3543 = vst [vmem:[%s571 + $0x8] sm:$0xf] %v3511
        %3544 = vst [vmem:[%s571 + $0xc] sm:$0xf] %v3512
        %3545 = vst [vmem:[%s571 + $0x10] sm:$0xf] %v3513
        %3546 = vst [vmem:[%s571 + $0x14] sm:$0xf] %v3514
        %3547 = vst [vmem:[%s571 + $0x18] sm:$0xf] %v3515
        %3548 = vst [vmem:[%s571 + $0x1c] sm:$0xf] %v3516
        %3549 = vst [vmem:[%s571 + $0x20] sm:$0xf] %v3517
        %3550 = vst [vmem:[%s571 + $0x24] sm:$0xf] %v3518
        %3551 = vst [vmem:[%s571 + $0x28] sm:$0xf] %v3519
        %3552 = vst [vmem:[%s571 + $0x2c] sm:$0xf] %v3520
        %3553 = vst [vmem:[%s571 + $0x30] sm:$0xf] %v3521
        %3554 = vst [vmem:[%s571 + $0x34] sm:$0xf] %v3522
        %3555 = vst [vmem:[%s571 + $0x38] sm:$0xf] %v3523
        %3556 = vst [vmem:[%s571 + $0x3c] sm:$0xf] %v3524
        %s3557 = sand.u32 %s266, 1
        %s3558 = scalar_lea.sflag [#allocation5], %s3557
        %s3559 = sand.u32 %s266, 1
        %s3560 = smul.addr %s3559, 64
        %s3561 = scalar_lea.vmem [#allocation15], %s3560
        // Predicated region
        $region81: #{tpu_custom_call.1} parent=51 // pred_check
          %p3562 = pneg %p276
        $region82: #{tpu_custom_call.1} parent=51 // pred_check_branch
          %3564 = sbr.rel (%p3562) target = $region84
        $region83: #{tpu_custom_call.1} parent=51 // pred_region
          %s3565 = smul.u32 8, %s39
          %s3567 = ssub.s32 1024, 1024
          %3568 = vsyncadd %s3558, %s3567
          %s3569 = smul.addr %s3565, 2
          %s3570 = smul.addr %s38, 32
          %s3571 = sadd.s32 %s3569, %s3570
          %s3572 = smul.addr %s3571, 64
          %s3573 = scalar_lea.hbm %s8, %s3572
          %s3574 = sshll.u32 %s3561, 4
          %s3575 = int_to_ptr.vmem [resolvable:$true] %s3574
          %3580 = dma.vmem_to_hbm [thread:$0]  %s3575, 1024, %s3573, %s3558, 64, 64, 4
        $region84: #{tpu_custom_call.1} parent=51 // pred_fallthru
          _
      $region52: #{tpu_custom_call.1} parent=5 // pred_fallthru
        _
      %p3581 = scmp.le.s32.totalorder 2, %s29
      // Predicated region
      $region85: #{tpu_custom_call.1} parent=5 // pred_check
        %p3582 = pneg %p3581
      $region86: #{tpu_custom_call.1} parent=5 // pred_check_branch
        %3584 = sbr.rel (%p3582) target = $region88
      $region87: #{tpu_custom_call.1} parent=5 // pred_region
        %s3585 = ssub.s32 %s29, 2
        // Predicated region
        $region89: #{tpu_custom_call.1} parent=87 // pred_check
          %p3586 = pneg %p282
        $region90: #{tpu_custom_call.1} parent=87 // pred_check_branch
          %3588 = sbr.rel (%p3586) target = $region92
        $region91: #{tpu_custom_call.1} parent=87 // pred_region
          %s3589 = sand.u32 %s267, 1
          %s3590 = scalar_lea.sflag [#allocation5], %s3589
          %s3591 = sand.u32 %s267, 1
          %s3592 = smul.addr %s3591, 64
          %s3593 = scalar_lea.vmem [#allocation15], %s3592
          %3594 = dma.done %s3590, 1024
        $region92: #{tpu_custom_call.1} parent=87 // pred_fallthru
          _
      $region88: #{tpu_custom_call.1} parent=5 // pred_fallthru
        _
    $region6: #{tpu_custom_call.1} parent=1 // loop_footer
      %s33 = sadd.s32 1, %s29
    $region7: #{tpu_custom_call.1} parent=1 // loop_footer_branch
      %28 = sbr.rel target = $region3
    $region8: #{tpu_custom_call.1} parent=1 // loop_exit
      _
    %3595 = vsyncpa [#allocation4], 1
    %s3596 = scalar_lea.sflag [#allocation4], 1
    %3597 = vsyncpa %s3596, 1
    %3598 = vsyncpa [#allocation7], 1
    %s3599 = scalar_lea.sflag [#allocation7], 1
    %3600 = vsyncpa %s3599, 1
    %3601 = vsyncpa [#allocation10], 1
    %s3602 = scalar_lea.sflag [#allocation10], 1
    %3603 = vsyncpa %s3602, 1
    %3604 = vsyncpa [#allocation13], 1
    %s3605 = scalar_lea.sflag [#allocation13], 1
    %3606 = vsyncpa %s3605, 1
    %3607 = vsyncpa [#allocation5], 1
    %s3608 = scalar_lea.sflag [#allocation5], 1
    %3609 = vsyncpa %s3608, 1

</llo_original>
